<compile_context>
chip_gen: v7x
topology: tpu7x:2x2x1
jax: 0.10.0
libtpu: 0.0.40
codegen_flags: <defaults>
</compile_context>

<pallas_src>
import math

import jax
import jax.numpy as jnp
from jax import lax
from jax.experimental import pallas as pl
from jax.experimental.pallas import tpu as pltpu

# ---------------------------------------------------------------------------
# Hyper-parameters (module defaults: patch_size=8, num_heads=8, num_layers=1,
# dim_feedforward=2048, ReLU, post-norm, eps=1e-5).  d_model == in_channels
# must divide num_heads.
# ---------------------------------------------------------------------------
IN_CHANNELS = 16
NUM_CLASSES = 4
PATCH_SIZE = 8
NUM_HEADS = 8
DIM_FF = 2048          # nn.TransformerEncoderLayer default dim_feedforward
LN_EPS = 1e-5
NEG_INF = -1e30


def _layer_norm(x, gamma, beta):
    mu = jnp.mean(x, axis=-1, keepdims=True)
    var = jnp.mean((x - mu) ** 2, axis=-1, keepdims=True)
    return (x - mu) * lax.rsqrt(var + LN_EPS) * gamma + beta


def _make_cls_kernel(R, B, C, heads, hd):
    """Single-step kernel over the cls slot.

    R = B rounded up to a multiple of 8 (sublane tiling); the padded rows are
    identical copies of the cls token and are masked out of the attention keys,
    so they never influence rows [0, B).
    """
    bf16 = jnp.bfloat16
    f32 = jnp.float32

    def kernel(cls_tok_ref, wqkv_ref, bqkv_ref, wo_ref, bo_ref,
               g1_ref, be1_ref, g2_ref, be2_ref,
               w1_ref, b1_ref, w2_ref, b2_ref,
               wfc_ref, bfc_ref, out_ref):
        # cls slot rows: B identical broadcast copies of cls_token (no conv).
        tokens = jnp.broadcast_to(cls_tok_ref[...], (R, C)).astype(f32)

        # ---- fused QKV projection (1/sqrt(hd) folded into the Q columns) ----
        qkv = jnp.dot(tokens.astype(bf16), wqkv_ref[...],
                      preferred_element_type=f32) + bqkv_ref[...]     # (R, 3C)
        q = qkv[:, 0:C]
        k = qkv[:, C:2 * C]
        v = qkv[:, 2 * C:3 * C]

        # ---- multi-head attention over the batch axis of the cls slot ------
        # Key-padding bias built in-kernel: only the B real rows are valid keys.
        col = lax.broadcasted_iota(jnp.int32, (R, R), 1)
        bias = jnp.where(col < B, 0.0, NEG_INF).astype(f32)

        head_outs = []
        for h in range(heads):                           # static unroll, tiny
            sl = slice(h * hd, (h + 1) * hd)
            s = lax.dot_general(q[:, sl], k[:, sl],
                                (((1,), (1,)), ((), ())),
                                preferred_element_type=f32) + bias    # (R, R)
            s = s - jnp.max(s, axis=-1, keepdims=True)
            p = jnp.exp(s)
            p = p * pl.reciprocal(jnp.sum(p, axis=-1, keepdims=True),
                                  approx=True)
            head_outs.append(jnp.dot(p, v[:, sl],
                                     preferred_element_type=f32))     # (R, hd)
        attn = jnp.concatenate(head_outs, axis=1)                     # (R, C)
        attn = jnp.dot(attn.astype(bf16), wo_ref[...],
                       preferred_element_type=f32) + bo_ref[...]

        # ---- residual + LayerNorm 1 (post-norm encoder layer, eval) --------
        y = _layer_norm(tokens + attn, g1_ref[...], be1_ref[...])

        # ---- feed-forward: Linear -> ReLU -> Linear -------------------------
        hidden = jnp.maximum(
            jnp.dot(y.astype(bf16), w1_ref[...],
                    preferred_element_type=f32) + b1_ref[...], 0.0)
        ff = jnp.dot(hidden.astype(bf16), w2_ref[...],
                     preferred_element_type=f32) + b2_ref[...]

        # ---- residual + LayerNorm 2 ----------------------------------------
        y = _layer_norm(y + ff, g2_ref[...], be2_ref[...])

        # ---- classifier on the B real cls rows ------------------------------
        cls_rows = y[0:B, :]                                          # (B, C)
        out_ref[...] = (jnp.dot(cls_rows.astype(bf16), wfc_ref[...],
                                preferred_element_type=f32) + bfc_ref[...])

    return kernel


def patch_transformer_pool_cls(x, params):
    """Forward pass of PatchTransformerPoolCls.  x is NCHW float32.

    With the module's batch_first=False encoder layer the token slots never
    mix and the classifier reads only the cls slot, so (per the performance
    review) the patch pipeline is dead work for the returned logits; x is
    used only for the batch size.
    """
    B = x.shape[0]
    C = params["cls_token"].shape[-1]
    heads = NUM_HEADS
    hd = C // heads
    nc = params["wfc"].shape[0]
    R = max(8, -(-B // 8) * 8)          # pad the B cls rows to a sublane multiple

    bf16 = jnp.bfloat16
    scale = 1.0 / math.sqrt(hd)

    def t(name):                        # PyTorch Linear stores (out, in)
        return params[name].T

    wqkv = jnp.concatenate([t("wq") * scale, t("wk"), t("wv")],
                           axis=1).astype(bf16)                       # (C, 3C)
    bqkv = jnp.concatenate([params["bq"] * scale, params["bk"], params["bv"]]
                           ).reshape(1, 3 * C).astype(jnp.float32)

    args = (
        params["cls_token"].reshape(1, C).astype(jnp.float32),
        wqkv, bqkv,
        t("wo").astype(bf16), params["bo"].reshape(1, C),
        params["ln1_g"].reshape(1, C), params["ln1_b"].reshape(1, C),
        params["ln2_g"].reshape(1, C), params["ln2_b"].reshape(1, C),
        t("w1").astype(bf16), params["b1"].reshape(1, DIM_FF),
        t("w2").astype(bf16), params["b2"].reshape(1, C),
        t("wfc").astype(bf16), params["bfc"].reshape(1, nc),
    )

    vmem = pltpu.MemorySpace.VMEM
    return pl.pallas_call(
        _make_cls_kernel(R, B, C, heads, hd),
        out_shape=jax.ShapeDtypeStruct((B, nc), jnp.float32),
        in_specs=[pl.BlockSpec(memory_space=vmem) for _ in args],
        out_specs=pl.BlockSpec(memory_space=vmem),
    )(*args)


# ---------------------------------------------------------------------------
# Deterministic parameter init (shapes follow the PyTorch module __init__).
# conv_w / conv_b are only consumed by the pure-JAX reference below (the
# kernel proves they are dead work for the module's output).
# ---------------------------------------------------------------------------
def init_params(key, C, num_classes, P, ff):
    ks = jax.random.split(key, 20)
    std = 0.02
    n = jax.random.normal
    return {
        "conv_w": std * n(ks[0], (C, C, P, P), jnp.float32),
        "conv_b": std * n(ks[1], (C,), jnp.float32),
        "cls_token": n(ks[2], (1, 1, C), jnp.float32),
        "wq": std * n(ks[3], (C, C), jnp.float32),
        "bq": std * n(ks[4], (C,), jnp.float32),
        "wk": std * n(ks[5], (C, C), jnp.float32),
        "bk": std * n(ks[6], (C,), jnp.float32),
        "wv": std * n(ks[7], (C, C), jnp.float32),
        "bv": std * n(ks[8], (C,), jnp.float32),
        "wo": std * n(ks[9], (C, C), jnp.float32),
        "bo": std * n(ks[10], (C,), jnp.float32),
        "ln1_g": jnp.ones((C,), jnp.float32),
        "ln1_b": jnp.zeros((C,), jnp.float32),
        "ln2_g": jnp.ones((C,), jnp.float32),
        "ln2_b": jnp.zeros((C,), jnp.float32),
        "w1": std * n(ks[11], (ff, C), jnp.float32),
        "b1": std * n(ks[12], (ff,), jnp.float32),
        "w2": std * n(ks[13], (C, ff), jnp.float32),
        "b2": std * n(ks[14], (C,), jnp.float32),
        "wfc": std * n(ks[15], (num_classes, C), jnp.float32),
        "bfc": std * n(ks[16], (num_classes,), jnp.float32),
    }


# ---------------------------------------------------------------------------
# Pure-JAX reference mirroring the PyTorch forward *in full* (patch embedding,
# cls concat, batch_first=False attention over all slots, post-norm layer,
# eval mode).  Used to validate that the cls-only kernel is exact.
# ---------------------------------------------------------------------------
def reference_forward(x, params):
    B, C, H, W = x.shape
    P = PATCH_SIZE
    h, w = H // P, W // P
    hw = h * w
    S = hw + 1
    heads = NUM_HEADS
    hd = C // heads

    patches = (x.reshape(B, C, h, P, w, P)
                .transpose(0, 2, 4, 1, 3, 5)
                .reshape(B, hw, C * P * P))
    pe = patches @ params["conv_w"].reshape(C, C * P * P).T + params["conv_b"]
    cls = jnp.broadcast_to(params["cls_token"], (B, 1, C))
    y = jnp.concatenate([cls, pe], axis=1)                       # (B, S, C)

    def ln(t, g, b):
        mu = jnp.mean(t, axis=-1, keepdims=True)
        var = jnp.mean((t - mu) ** 2, axis=-1, keepdims=True)
        return (t - mu) / jnp.sqrt(var + LN_EPS) * g + b

    # attention: dim0 treated as sequence (=B), dim1 as batch (=S)
    q = y @ params["wq"].T + params["bq"]
    k = y @ params["wk"].T + params["bk"]
    v = y @ params["wv"].T + params["bv"]
    qh = q.reshape(B, S, heads, hd)
    kh = k.reshape(B, S, heads, hd)
    vh = v.reshape(B, S, heads, hd)
    sc = jnp.einsum("inhd,jnhd->nhij", qh, kh) / math.sqrt(hd)
    a = jax.nn.softmax(sc, axis=-1)
    o = jnp.einsum("nhij,jnhd->inhd", a, vh).reshape(B, S, C)
    o = o @ params["wo"].T + params["bo"]

    y = ln(y + o, params["ln1_g"], params["ln1_b"])
    ff = (jax.nn.relu(y @ params["w1"].T + params["b1"])
          @ params["w2"].T + params["b2"])
    y = ln(y + ff, params["ln2_g"], params["ln2_b"])
    cls_out = y[:, 0]
    return cls_out @ params["wfc"].T + params["bfc"]


if __name__ == "__main__":
    key = jax.random.PRNGKey(0)
    kx, kp = jax.random.split(key)

    B, C, H, W = 2, IN_CHANNELS, 16, 16           # -> 2x2 patches, seq = 5
    x = jax.random.normal(kx, (B, C, H, W), jnp.float32)
    params = init_params(kp, C, NUM_CLASSES, PATCH_SIZE, DIM_FF)

    out = patch_transformer_pool_cls(x, params)
    out = jax.block_until_ready(out)

    ref = reference_forward(x, params)
    assert out.shape == (B, NUM_CLASSES), out.shape
    assert bool(jnp.all(jnp.isfinite(out)))
    assert bool(jnp.allclose(out, ref, rtol=2e-2, atol=2e-2)), (out, ref)

    print("KERNEL_OK")
</pallas_src>

<mosaic_0001>
module attributes {stable_mosaic.version = 11 : i64} {
  func.func @kernel(%arg0: memref<1x16xf32, #tpu.memory_space<vmem>>, %arg1: memref<16x48xbf16, #tpu.memory_space<vmem>>, %arg2: memref<1x48xf32, #tpu.memory_space<vmem>>, %arg3: memref<16x16xbf16, #tpu.memory_space<vmem>>, %arg4: memref<1x16xf32, #tpu.memory_space<vmem>>, %arg5: memref<1x16xf32, #tpu.memory_space<vmem>>, %arg6: memref<1x16xf32, #tpu.memory_space<vmem>>, %arg7: memref<1x16xf32, #tpu.memory_space<vmem>>, %arg8: memref<1x16xf32, #tpu.memory_space<vmem>>, %arg9: memref<16x2048xbf16, #tpu.memory_space<vmem>>, %arg10: memref<1x2048xf32, #tpu.memory_space<vmem>>, %arg11: memref<2048x16xbf16, #tpu.memory_space<vmem>>, %arg12: memref<1x16xf32, #tpu.memory_space<vmem>>, %arg13: memref<16x4xbf16, #tpu.memory_space<vmem>>, %arg14: memref<1x4xf32, #tpu.memory_space<vmem>>, %arg15: memref<2x4xf32, #tpu.memory_space<vmem>>) attributes {dimension_semantics = [], scalar_prefetch = 0 : i64, scratch_operands = 0 : i64, tpu.core_type = #tpu.core_type<tc>} {
    %c0 = arith.constant 0 : index
    %c0_0 = arith.constant 0 : index
    %0 = vector.load %arg0[%c0, %c0_0] : memref<1x16xf32, #tpu.memory_space<vmem>>, vector<1x16xf32>
    %1 = vector.shape_cast %0 : vector<1x16xf32> to vector<1x16xf32>
    %2 = vector.broadcast %1 : vector<1x16xf32> to vector<8x16xf32>
    %3 = arith.truncf %2 : vector<8x16xf32> to vector<8x16xbf16>
    %c0_1 = arith.constant 0 : index
    %c0_2 = arith.constant 0 : index
    %4 = vector.load %arg1[%c0_1, %c0_2] : memref<16x48xbf16, #tpu.memory_space<vmem>>, vector<16x48xbf16>
    %cst = arith.constant dense<0.000000e+00> : vector<8x48xf32>
    %5 = tpu.matmul %3, %4, %cst {dimension_numbers = #tpu.dot_dimension_numbers<[1], [0], [0], [1], [0, 0, 1, 1], [], []>} : vector<8x16xbf16>, vector<16x48xbf16>, vector<8x48xf32> -> vector<8x48xf32>
    %c0_3 = arith.constant 0 : index
    %c0_4 = arith.constant 0 : index
    %6 = vector.load %arg2[%c0_3, %c0_4] : memref<1x48xf32, #tpu.memory_space<vmem>>, vector<1x48xf32>
    %7 = vector.broadcast %6 : vector<1x48xf32> to vector<8x48xf32>
    %8 = arith.addf %5, %7 : vector<8x48xf32>
    %9 = vector.extract_strided_slice %8 {offsets = [0, 0], sizes = [8, 16], strides = [1, 1]} : vector<8x48xf32> to vector<8x16xf32>
    %10 = vector.extract_strided_slice %8 {offsets = [0, 16], sizes = [8, 16], strides = [1, 1]} : vector<8x48xf32> to vector<8x16xf32>
    %11 = vector.extract_strided_slice %8 {offsets = [0, 32], sizes = [8, 16], strides = [1, 1]} : vector<8x48xf32> to vector<8x16xf32>
    %12 = tpu.iota {dimensions = array<i32: 1>} : vector<8x8xi32>
    %c2_i32 = arith.constant 2 : i32
    %13 = vector.broadcast %c2_i32 : i32 to vector<8x8xi32>
    %14 = arith.cmpi slt, %12, %13 : vector<8x8xi32>
    %cst_5 = arith.constant 0.000000e+00 : f32
    %cst_6 = arith.constant -1.000000e+30 : f32
    %15 = vector.broadcast %cst_5 : f32 to vector<8x8xf32>
    %16 = vector.broadcast %cst_6 : f32 to vector<8x8xf32>
    %17 = arith.select %14, %15, %16 : vector<8x8xi1>, vector<8x8xf32>
    %18 = vector.extract_strided_slice %9 {offsets = [0, 0], sizes = [8, 2], strides = [1, 1]} : vector<8x16xf32> to vector<8x2xf32>
    %19 = vector.extract_strided_slice %10 {offsets = [0, 0], sizes = [8, 2], strides = [1, 1]} : vector<8x16xf32> to vector<8x2xf32>
    %cst_7 = arith.constant dense<0.000000e+00> : vector<8x8xf32>
    %20 = tpu.matmul %18, %19, %cst_7 {dimension_numbers = #tpu.dot_dimension_numbers<[1], [1], [0], [0], [0, 0, 1, 0], [], []>} : vector<8x2xf32>, vector<8x2xf32>, vector<8x8xf32> -> vector<8x8xf32>
    %21 = arith.addf %20, %17 : vector<8x8xf32>
    %cst_8 = arith.constant dense<0xFF800000> : vector<8xf32>
    %22 = vector.multi_reduction <maximumf>, %21, %cst_8 [1] : vector<8x8xf32> to vector<8xf32>
    %23 = vector.shape_cast %22 : vector<8xf32> to vector<8x1xf32>
    %24 = vector.broadcast %23 : vector<8x1xf32> to vector<8x8xf32>
    %25 = arith.subf %21, %24 : vector<8x8xf32>
    %26 = math.exp %25 : vector<8x8xf32>
    %cst_9 = arith.constant dense<0.000000e+00> : vector<8xf32>
    %27 = vector.multi_reduction <add>, %26, %cst_9 [1] : vector<8x8xf32> to vector<8xf32>
    %28 = vector.shape_cast %27 : vector<8xf32> to vector<8x1xf32>
    %29 = tpu.reciprocal %28 {approx = true} : vector<8x1xf32> -> vector<8x1xf32>
    %30 = vector.broadcast %29 : vector<8x1xf32> to vector<8x8xf32>
    %31 = arith.mulf %26, %30 : vector<8x8xf32>
    %32 = vector.extract_strided_slice %11 {offsets = [0, 0], sizes = [8, 2], strides = [1, 1]} : vector<8x16xf32> to vector<8x2xf32>
    %cst_10 = arith.constant dense<0.000000e+00> : vector<8x2xf32>
    %33 = tpu.matmul %31, %32, %cst_10 {dimension_numbers = #tpu.dot_dimension_numbers<[1], [0], [0], [1], [0, 0, 1, 1], [], []>} : vector<8x8xf32>, vector<8x2xf32>, vector<8x2xf32> -> vector<8x2xf32>
    %34 = vector.extract_strided_slice %9 {offsets = [0, 2], sizes = [8, 2], strides = [1, 1]} : vector<8x16xf32> to vector<8x2xf32>
    %35 = vector.extract_strided_slice %10 {offsets = [0, 2], sizes = [8, 2], strides = [1, 1]} : vector<8x16xf32> to vector<8x2xf32>
    %cst_11 = arith.constant dense<0.000000e+00> : vector<8x8xf32>
    %36 = tpu.matmul %34, %35, %cst_11 {dimension_numbers = #tpu.dot_dimension_numbers<[1], [1], [0], [0], [0, 0, 1, 0], [], []>} : vector<8x2xf32>, vector<8x2xf32>, vector<8x8xf32> -> vector<8x8xf32>
    %37 = arith.addf %36, %17 : vector<8x8xf32>
    %cst_12 = arith.constant dense<0xFF800000> : vector<8xf32>
    %38 = vector.multi_reduction <maximumf>, %37, %cst_12 [1] : vector<8x8xf32> to vector<8xf32>
    %39 = vector.shape_cast %38 : vector<8xf32> to vector<8x1xf32>
    %40 = vector.broadcast %39 : vector<8x1xf32> to vector<8x8xf32>
    %41 = arith.subf %37, %40 : vector<8x8xf32>
    %42 = math.exp %41 : vector<8x8xf32>
    %cst_13 = arith.constant dense<0.000000e+00> : vector<8xf32>
    %43 = vector.multi_reduction <add>, %42, %cst_13 [1] : vector<8x8xf32> to vector<8xf32>
    %44 = vector.shape_cast %43 : vector<8xf32> to vector<8x1xf32>
    %45 = tpu.reciprocal %44 {approx = true} : vector<8x1xf32> -> vector<8x1xf32>
    %46 = vector.broadcast %45 : vector<8x1xf32> to vector<8x8xf32>
    %47 = arith.mulf %42, %46 : vector<8x8xf32>
    %48 = vector.extract_strided_slice %11 {offsets = [0, 2], sizes = [8, 2], strides = [1, 1]} : vector<8x16xf32> to vector<8x2xf32>
    %cst_14 = arith.constant dense<0.000000e+00> : vector<8x2xf32>
    %49 = tpu.matmul %47, %48, %cst_14 {dimension_numbers = #tpu.dot_dimension_numbers<[1], [0], [0], [1], [0, 0, 1, 1], [], []>} : vector<8x8xf32>, vector<8x2xf32>, vector<8x2xf32> -> vector<8x2xf32>
    %50 = vector.extract_strided_slice %9 {offsets = [0, 4], sizes = [8, 2], strides = [1, 1]} : vector<8x16xf32> to vector<8x2xf32>
    %51 = vector.extract_strided_slice %10 {offsets = [0, 4], sizes = [8, 2], strides = [1, 1]} : vector<8x16xf32> to vector<8x2xf32>
    %cst_15 = arith.constant dense<0.000000e+00> : vector<8x8xf32>
    %52 = tpu.matmul %50, %51, %cst_15 {dimension_numbers = #tpu.dot_dimension_numbers<[1], [1], [0], [0], [0, 0, 1, 0], [], []>} : vector<8x2xf32>, vector<8x2xf32>, vector<8x8xf32> -> vector<8x8xf32>
    %53 = arith.addf %52, %17 : vector<8x8xf32>
    %cst_16 = arith.constant dense<0xFF800000> : vector<8xf32>
    %54 = vector.multi_reduction <maximumf>, %53, %cst_16 [1] : vector<8x8xf32> to vector<8xf32>
    %55 = vector.shape_cast %54 : vector<8xf32> to vector<8x1xf32>
    %56 = vector.broadcast %55 : vector<8x1xf32> to vector<8x8xf32>
    %57 = arith.subf %53, %56 : vector<8x8xf32>
    %58 = math.exp %57 : vector<8x8xf32>
    %cst_17 = arith.constant dense<0.000000e+00> : vector<8xf32>
    %59 = vector.multi_reduction <add>, %58, %cst_17 [1] : vector<8x8xf32> to vector<8xf32>
    %60 = vector.shape_cast %59 : vector<8xf32> to vector<8x1xf32>
    %61 = tpu.reciprocal %60 {approx = true} : vector<8x1xf32> -> vector<8x1xf32>
    %62 = vector.broadcast %61 : vector<8x1xf32> to vector<8x8xf32>
    %63 = arith.mulf %58, %62 : vector<8x8xf32>
    %64 = vector.extract_strided_slice %11 {offsets = [0, 4], sizes = [8, 2], strides = [1, 1]} : vector<8x16xf32> to vector<8x2xf32>
    %cst_18 = arith.constant dense<0.000000e+00> : vector<8x2xf32>
    %65 = tpu.matmul %63, %64, %cst_18 {dimension_numbers = #tpu.dot_dimension_numbers<[1], [0], [0], [1], [0, 0, 1, 1], [], []>} : vector<8x8xf32>, vector<8x2xf32>, vector<8x2xf32> -> vector<8x2xf32>
    %66 = vector.extract_strided_slice %9 {offsets = [0, 6], sizes = [8, 2], strides = [1, 1]} : vector<8x16xf32> to vector<8x2xf32>
    %67 = vector.extract_strided_slice %10 {offsets = [0, 6], sizes = [8, 2], strides = [1, 1]} : vector<8x16xf32> to vector<8x2xf32>
    %cst_19 = arith.constant dense<0.000000e+00> : vector<8x8xf32>
    %68 = tpu.matmul %66, %67, %cst_19 {dimension_numbers = #tpu.dot_dimension_numbers<[1], [1], [0], [0], [0, 0, 1, 0], [], []>} : vector<8x2xf32>, vector<8x2xf32>, vector<8x8xf32> -> vector<8x8xf32>
    %69 = arith.addf %68, %17 : vector<8x8xf32>
    %cst_20 = arith.constant dense<0xFF800000> : vector<8xf32>
    %70 = vector.multi_reduction <maximumf>, %69, %cst_20 [1] : vector<8x8xf32> to vector<8xf32>
    %71 = vector.shape_cast %70 : vector<8xf32> to vector<8x1xf32>
    %72 = vector.broadcast %71 : vector<8x1xf32> to vector<8x8xf32>
    %73 = arith.subf %69, %72 : vector<8x8xf32>
    %74 = math.exp %73 : vector<8x8xf32>
    %cst_21 = arith.constant dense<0.000000e+00> : vector<8xf32>
    %75 = vector.multi_reduction <add>, %74, %cst_21 [1] : vector<8x8xf32> to vector<8xf32>
    %76 = vector.shape_cast %75 : vector<8xf32> to vector<8x1xf32>
    %77 = tpu.reciprocal %76 {approx = true} : vector<8x1xf32> -> vector<8x1xf32>
    %78 = vector.broadcast %77 : vector<8x1xf32> to vector<8x8xf32>
    %79 = arith.mulf %74, %78 : vector<8x8xf32>
    %80 = vector.extract_strided_slice %11 {offsets = [0, 6], sizes = [8, 2], strides = [1, 1]} : vector<8x16xf32> to vector<8x2xf32>
    %cst_22 = arith.constant dense<0.000000e+00> : vector<8x2xf32>
    %81 = tpu.matmul %79, %80, %cst_22 {dimension_numbers = #tpu.dot_dimension_numbers<[1], [0], [0], [1], [0, 0, 1, 1], [], []>} : vector<8x8xf32>, vector<8x2xf32>, vector<8x2xf32> -> vector<8x2xf32>
    %82 = vector.extract_strided_slice %9 {offsets = [0, 8], sizes = [8, 2], strides = [1, 1]} : vector<8x16xf32> to vector<8x2xf32>
    %83 = vector.extract_strided_slice %10 {offsets = [0, 8], sizes = [8, 2], strides = [1, 1]} : vector<8x16xf32> to vector<8x2xf32>
    %cst_23 = arith.constant dense<0.000000e+00> : vector<8x8xf32>
    %84 = tpu.matmul %82, %83, %cst_23 {dimension_numbers = #tpu.dot_dimension_numbers<[1], [1], [0], [0], [0, 0, 1, 0], [], []>} : vector<8x2xf32>, vector<8x2xf32>, vector<8x8xf32> -> vector<8x8xf32>
    %85 = arith.addf %84, %17 : vector<8x8xf32>
    %cst_24 = arith.constant dense<0xFF800000> : vector<8xf32>
    %86 = vector.multi_reduction <maximumf>, %85, %cst_24 [1] : vector<8x8xf32> to vector<8xf32>
    %87 = vector.shape_cast %86 : vector<8xf32> to vector<8x1xf32>
    %88 = vector.broadcast %87 : vector<8x1xf32> to vector<8x8xf32>
    %89 = arith.subf %85, %88 : vector<8x8xf32>
    %90 = math.exp %89 : vector<8x8xf32>
    %cst_25 = arith.constant dense<0.000000e+00> : vector<8xf32>
    %91 = vector.multi_reduction <add>, %90, %cst_25 [1] : vector<8x8xf32> to vector<8xf32>
    %92 = vector.shape_cast %91 : vector<8xf32> to vector<8x1xf32>
    %93 = tpu.reciprocal %92 {approx = true} : vector<8x1xf32> -> vector<8x1xf32>
    %94 = vector.broadcast %93 : vector<8x1xf32> to vector<8x8xf32>
    %95 = arith.mulf %90, %94 : vector<8x8xf32>
    %96 = vector.extract_strided_slice %11 {offsets = [0, 8], sizes = [8, 2], strides = [1, 1]} : vector<8x16xf32> to vector<8x2xf32>
    %cst_26 = arith.constant dense<0.000000e+00> : vector<8x2xf32>
    %97 = tpu.matmul %95, %96, %cst_26 {dimension_numbers = #tpu.dot_dimension_numbers<[1], [0], [0], [1], [0, 0, 1, 1], [], []>} : vector<8x8xf32>, vector<8x2xf32>, vector<8x2xf32> -> vector<8x2xf32>
    %98 = vector.extract_strided_slice %9 {offsets = [0, 10], sizes = [8, 2], strides = [1, 1]} : vector<8x16xf32> to vector<8x2xf32>
    %99 = vector.extract_strided_slice %10 {offsets = [0, 10], sizes = [8, 2], strides = [1, 1]} : vector<8x16xf32> to vector<8x2xf32>
    %cst_27 = arith.constant dense<0.000000e+00> : vector<8x8xf32>
    %100 = tpu.matmul %98, %99, %cst_27 {dimension_numbers = #tpu.dot_dimension_numbers<[1], [1], [0], [0], [0, 0, 1, 0], [], []>} : vector<8x2xf32>, vector<8x2xf32>, vector<8x8xf32> -> vector<8x8xf32>
    %101 = arith.addf %100, %17 : vector<8x8xf32>
    %cst_28 = arith.constant dense<0xFF800000> : vector<8xf32>
    %102 = vector.multi_reduction <maximumf>, %101, %cst_28 [1] : vector<8x8xf32> to vector<8xf32>
    %103 = vector.shape_cast %102 : vector<8xf32> to vector<8x1xf32>
    %104 = vector.broadcast %103 : vector<8x1xf32> to vector<8x8xf32>
    %105 = arith.subf %101, %104 : vector<8x8xf32>
    %106 = math.exp %105 : vector<8x8xf32>
    %cst_29 = arith.constant dense<0.000000e+00> : vector<8xf32>
    %107 = vector.multi_reduction <add>, %106, %cst_29 [1] : vector<8x8xf32> to vector<8xf32>
    %108 = vector.shape_cast %107 : vector<8xf32> to vector<8x1xf32>
    %109 = tpu.reciprocal %108 {approx = true} : vector<8x1xf32> -> vector<8x1xf32>
    %110 = vector.broadcast %109 : vector<8x1xf32> to vector<8x8xf32>
    %111 = arith.mulf %106, %110 : vector<8x8xf32>
    %112 = vector.extract_strided_slice %11 {offsets = [0, 10], sizes = [8, 2], strides = [1, 1]} : vector<8x16xf32> to vector<8x2xf32>
    %cst_30 = arith.constant dense<0.000000e+00> : vector<8x2xf32>
    %113 = tpu.matmul %111, %112, %cst_30 {dimension_numbers = #tpu.dot_dimension_numbers<[1], [0], [0], [1], [0, 0, 1, 1], [], []>} : vector<8x8xf32>, vector<8x2xf32>, vector<8x2xf32> -> vector<8x2xf32>
    %114 = vector.extract_strided_slice %9 {offsets = [0, 12], sizes = [8, 2], strides = [1, 1]} : vector<8x16xf32> to vector<8x2xf32>
    %115 = vector.extract_strided_slice %10 {offsets = [0, 12], sizes = [8, 2], strides = [1, 1]} : vector<8x16xf32> to vector<8x2xf32>
    %cst_31 = arith.constant dense<0.000000e+00> : vector<8x8xf32>
    %116 = tpu.matmul %114, %115, %cst_31 {dimension_numbers = #tpu.dot_dimension_numbers<[1], [1], [0], [0], [0, 0, 1, 0], [], []>} : vector<8x2xf32>, vector<8x2xf32>, vector<8x8xf32> -> vector<8x8xf32>
    %117 = arith.addf %116, %17 : vector<8x8xf32>
    %cst_32 = arith.constant dense<0xFF800000> : vector<8xf32>
    %118 = vector.multi_reduction <maximumf>, %117, %cst_32 [1] : vector<8x8xf32> to vector<8xf32>
    %119 = vector.shape_cast %118 : vector<8xf32> to vector<8x1xf32>
    %120 = vector.broadcast %119 : vector<8x1xf32> to vector<8x8xf32>
    %121 = arith.subf %117, %120 : vector<8x8xf32>
    %122 = math.exp %121 : vector<8x8xf32>
    %cst_33 = arith.constant dense<0.000000e+00> : vector<8xf32>
    %123 = vector.multi_reduction <add>, %122, %cst_33 [1] : vector<8x8xf32> to vector<8xf32>
    %124 = vector.shape_cast %123 : vector<8xf32> to vector<8x1xf32>
    %125 = tpu.reciprocal %124 {approx = true} : vector<8x1xf32> -> vector<8x1xf32>
    %126 = vector.broadcast %125 : vector<8x1xf32> to vector<8x8xf32>
    %127 = arith.mulf %122, %126 : vector<8x8xf32>
    %128 = vector.extract_strided_slice %11 {offsets = [0, 12], sizes = [8, 2], strides = [1, 1]} : vector<8x16xf32> to vector<8x2xf32>
    %cst_34 = arith.constant dense<0.000000e+00> : vector<8x2xf32>
    %129 = tpu.matmul %127, %128, %cst_34 {dimension_numbers = #tpu.dot_dimension_numbers<[1], [0], [0], [1], [0, 0, 1, 1], [], []>} : vector<8x8xf32>, vector<8x2xf32>, vector<8x2xf32> -> vector<8x2xf32>
    %130 = vector.extract_strided_slice %9 {offsets = [0, 14], sizes = [8, 2], strides = [1, 1]} : vector<8x16xf32> to vector<8x2xf32>
    %131 = vector.extract_strided_slice %10 {offsets = [0, 14], sizes = [8, 2], strides = [1, 1]} : vector<8x16xf32> to vector<8x2xf32>
    %cst_35 = arith.constant dense<0.000000e+00> : vector<8x8xf32>
    %132 = tpu.matmul %130, %131, %cst_35 {dimension_numbers = #tpu.dot_dimension_numbers<[1], [1], [0], [0], [0, 0, 1, 0], [], []>} : vector<8x2xf32>, vector<8x2xf32>, vector<8x8xf32> -> vector<8x8xf32>
    %133 = arith.addf %132, %17 : vector<8x8xf32>
    %cst_36 = arith.constant dense<0xFF800000> : vector<8xf32>
    %134 = vector.multi_reduction <maximumf>, %133, %cst_36 [1] : vector<8x8xf32> to vector<8xf32>
    %135 = vector.shape_cast %134 : vector<8xf32> to vector<8x1xf32>
    %136 = vector.broadcast %135 : vector<8x1xf32> to vector<8x8xf32>
    %137 = arith.subf %133, %136 : vector<8x8xf32>
    %138 = math.exp %137 : vector<8x8xf32>
    %cst_37 = arith.constant dense<0.000000e+00> : vector<8xf32>
    %139 = vector.multi_reduction <add>, %138, %cst_37 [1] : vector<8x8xf32> to vector<8xf32>
    %140 = vector.shape_cast %139 : vector<8xf32> to vector<8x1xf32>
    %141 = tpu.reciprocal %140 {approx = true} : vector<8x1xf32> -> vector<8x1xf32>
    %142 = vector.broadcast %141 : vector<8x1xf32> to vector<8x8xf32>
    %143 = arith.mulf %138, %142 : vector<8x8xf32>
    %144 = vector.extract_strided_slice %11 {offsets = [0, 14], sizes = [8, 2], strides = [1, 1]} : vector<8x16xf32> to vector<8x2xf32>
    %cst_38 = arith.constant dense<0.000000e+00> : vector<8x2xf32>
    %145 = tpu.matmul %143, %144, %cst_38 {dimension_numbers = #tpu.dot_dimension_numbers<[1], [0], [0], [1], [0, 0, 1, 1], [], []>} : vector<8x8xf32>, vector<8x2xf32>, vector<8x2xf32> -> vector<8x2xf32>
    %146 = tpu.concatenate %33, %49, %65, %81, %97, %113, %129, %145 in 1 : vector<8x2xf32>, vector<8x2xf32>, vector<8x2xf32>, vector<8x2xf32>, vector<8x2xf32>, vector<8x2xf32>, vector<8x2xf32>, vector<8x2xf32> -> vector<8x16xf32>
    %147 = arith.truncf %146 : vector<8x16xf32> to vector<8x16xbf16>
    %c0_39 = arith.constant 0 : index
    %c0_40 = arith.constant 0 : index
    %148 = vector.load %arg3[%c0_39, %c0_40] : memref<16x16xbf16, #tpu.memory_space<vmem>>, vector<16x16xbf16>
    %cst_41 = arith.constant dense<0.000000e+00> : vector<8x16xf32>
    %149 = tpu.matmul %147, %148, %cst_41 {dimension_numbers = #tpu.dot_dimension_numbers<[1], [0], [0], [1], [0, 0, 1, 1], [], []>} : vector<8x16xbf16>, vector<16x16xbf16>, vector<8x16xf32> -> vector<8x16xf32>
    %c0_42 = arith.constant 0 : index
    %c0_43 = arith.constant 0 : index
    %150 = vector.load %arg4[%c0_42, %c0_43] : memref<1x16xf32, #tpu.memory_space<vmem>>, vector<1x16xf32>
    %151 = vector.broadcast %150 : vector<1x16xf32> to vector<8x16xf32>
    %152 = arith.addf %149, %151 : vector<8x16xf32>
    %153 = arith.addf %2, %152 : vector<8x16xf32>
    %c0_44 = arith.constant 0 : index
    %c0_45 = arith.constant 0 : index
    %154 = vector.load %arg5[%c0_44, %c0_45] : memref<1x16xf32, #tpu.memory_space<vmem>>, vector<1x16xf32>
    %c0_46 = arith.constant 0 : index
    %c0_47 = arith.constant 0 : index
    %155 = vector.load %arg6[%c0_46, %c0_47] : memref<1x16xf32, #tpu.memory_space<vmem>>, vector<1x16xf32>
    %cst_48 = arith.constant dense<0.000000e+00> : vector<8xf32>
    %156 = vector.multi_reduction <add>, %153, %cst_48 [1] : vector<8x16xf32> to vector<8xf32>
    %157 = vector.shape_cast %156 : vector<8xf32> to vector<8x1xf32>
    %cst_49 = arith.constant 1.600000e+01 : f32
    %158 = vector.broadcast %cst_49 : f32 to vector<8x1xf32>
    %159 = arith.divf %157, %158 : vector<8x1xf32>
    %160 = vector.broadcast %159 : vector<8x1xf32> to vector<8x16xf32>
    %161 = arith.subf %153, %160 : vector<8x16xf32>
    %162 = arith.mulf %161, %161 : vector<8x16xf32>
    %cst_50 = arith.constant dense<0.000000e+00> : vector<8xf32>
    %163 = vector.multi_reduction <add>, %162, %cst_50 [1] : vector<8x16xf32> to vector<8xf32>
    %164 = vector.shape_cast %163 : vector<8xf32> to vector<8x1xf32>
    %cst_51 = arith.constant 1.600000e+01 : f32
    %165 = vector.broadcast %cst_51 : f32 to vector<8x1xf32>
    %166 = arith.divf %164, %165 : vector<8x1xf32>
    %167 = vector.broadcast %159 : vector<8x1xf32> to vector<8x16xf32>
    %168 = arith.subf %153, %167 : vector<8x16xf32>
    %cst_52 = arith.constant 9.99999974E-6 : f32
    %169 = vector.broadcast %cst_52 : f32 to vector<8x1xf32>
    %170 = arith.addf %166, %169 : vector<8x1xf32>
    %171 = math.rsqrt %170 : vector<8x1xf32>
    %172 = vector.broadcast %171 : vector<8x1xf32> to vector<8x16xf32>
    %173 = arith.mulf %168, %172 : vector<8x16xf32>
    %174 = vector.broadcast %154 : vector<1x16xf32> to vector<8x16xf32>
    %175 = arith.mulf %173, %174 : vector<8x16xf32>
    %176 = vector.broadcast %155 : vector<1x16xf32> to vector<8x16xf32>
    %177 = arith.addf %175, %176 : vector<8x16xf32>
    %178 = arith.truncf %177 : vector<8x16xf32> to vector<8x16xbf16>
    %c0_53 = arith.constant 0 : index
    %c0_54 = arith.constant 0 : index
    %179 = vector.load %arg9[%c0_53, %c0_54] : memref<16x2048xbf16, #tpu.memory_space<vmem>>, vector<16x2048xbf16>
    %cst_55 = arith.constant dense<0.000000e+00> : vector<8x2048xf32>
    %180 = tpu.matmul %178, %179, %cst_55 {dimension_numbers = #tpu.dot_dimension_numbers<[1], [0], [0], [1], [0, 0, 1, 1], [], []>} : vector<8x16xbf16>, vector<16x2048xbf16>, vector<8x2048xf32> -> vector<8x2048xf32>
    %c0_56 = arith.constant 0 : index
    %c0_57 = arith.constant 0 : index
    %181 = vector.load %arg10[%c0_56, %c0_57] : memref<1x2048xf32, #tpu.memory_space<vmem>>, vector<1x2048xf32>
    %182 = vector.broadcast %181 : vector<1x2048xf32> to vector<8x2048xf32>
    %183 = arith.addf %180, %182 : vector<8x2048xf32>
    %cst_58 = arith.constant 0.000000e+00 : f32
    %184 = vector.broadcast %cst_58 : f32 to vector<8x2048xf32>
    %185 = arith.maximumf %183, %184 : vector<8x2048xf32>
    %186 = arith.truncf %185 : vector<8x2048xf32> to vector<8x2048xbf16>
    %c0_59 = arith.constant 0 : index
    %c0_60 = arith.constant 0 : index
    %187 = vector.load %arg11[%c0_59, %c0_60] : memref<2048x16xbf16, #tpu.memory_space<vmem>>, vector<2048x16xbf16>
    %cst_61 = arith.constant dense<0.000000e+00> : vector<8x16xf32>
    %188 = tpu.matmul %186, %187, %cst_61 {dimension_numbers = #tpu.dot_dimension_numbers<[1], [0], [0], [1], [0, 0, 1, 1], [], []>} : vector<8x2048xbf16>, vector<2048x16xbf16>, vector<8x16xf32> -> vector<8x16xf32>
    %c0_62 = arith.constant 0 : index
    %c0_63 = arith.constant 0 : index
    %189 = vector.load %arg12[%c0_62, %c0_63] : memref<1x16xf32, #tpu.memory_space<vmem>>, vector<1x16xf32>
    %190 = vector.broadcast %189 : vector<1x16xf32> to vector<8x16xf32>
    %191 = arith.addf %188, %190 : vector<8x16xf32>
    %192 = arith.addf %177, %191 : vector<8x16xf32>
    %c0_64 = arith.constant 0 : index
    %c0_65 = arith.constant 0 : index
    %193 = vector.load %arg7[%c0_64, %c0_65] : memref<1x16xf32, #tpu.memory_space<vmem>>, vector<1x16xf32>
    %c0_66 = arith.constant 0 : index
    %c0_67 = arith.constant 0 : index
    %194 = vector.load %arg8[%c0_66, %c0_67] : memref<1x16xf32, #tpu.memory_space<vmem>>, vector<1x16xf32>
    %cst_68 = arith.constant dense<0.000000e+00> : vector<8xf32>
    %195 = vector.multi_reduction <add>, %192, %cst_68 [1] : vector<8x16xf32> to vector<8xf32>
    %196 = vector.shape_cast %195 : vector<8xf32> to vector<8x1xf32>
    %cst_69 = arith.constant 1.600000e+01 : f32
    %197 = vector.broadcast %cst_69 : f32 to vector<8x1xf32>
    %198 = arith.divf %196, %197 : vector<8x1xf32>
    %199 = vector.broadcast %198 : vector<8x1xf32> to vector<8x16xf32>
    %200 = arith.subf %192, %199 : vector<8x16xf32>
    %201 = arith.mulf %200, %200 : vector<8x16xf32>
    %cst_70 = arith.constant dense<0.000000e+00> : vector<8xf32>
    %202 = vector.multi_reduction <add>, %201, %cst_70 [1] : vector<8x16xf32> to vector<8xf32>
    %203 = vector.shape_cast %202 : vector<8xf32> to vector<8x1xf32>
    %cst_71 = arith.constant 1.600000e+01 : f32
    %204 = vector.broadcast %cst_71 : f32 to vector<8x1xf32>
    %205 = arith.divf %203, %204 : vector<8x1xf32>
    %206 = vector.broadcast %198 : vector<8x1xf32> to vector<8x16xf32>
    %207 = arith.subf %192, %206 : vector<8x16xf32>
    %cst_72 = arith.constant 9.99999974E-6 : f32
    %208 = vector.broadcast %cst_72 : f32 to vector<8x1xf32>
    %209 = arith.addf %205, %208 : vector<8x1xf32>
    %210 = math.rsqrt %209 : vector<8x1xf32>
    %211 = vector.broadcast %210 : vector<8x1xf32> to vector<8x16xf32>
    %212 = arith.mulf %207, %211 : vector<8x16xf32>
    %213 = vector.broadcast %193 : vector<1x16xf32> to vector<8x16xf32>
    %214 = arith.mulf %212, %213 : vector<8x16xf32>
    %215 = vector.broadcast %194 : vector<1x16xf32> to vector<8x16xf32>
    %216 = arith.addf %214, %215 : vector<8x16xf32>
    %217 = vector.extract_strided_slice %216 {offsets = [0, 0], sizes = [2, 16], strides = [1, 1]} : vector<8x16xf32> to vector<2x16xf32>
    %218 = arith.truncf %217 : vector<2x16xf32> to vector<2x16xbf16>
    %c0_73 = arith.constant 0 : index
    %c0_74 = arith.constant 0 : index
    %219 = vector.load %arg13[%c0_73, %c0_74] : memref<16x4xbf16, #tpu.memory_space<vmem>>, vector<16x4xbf16>
    %cst_75 = arith.constant dense<0.000000e+00> : vector<2x4xf32>
    %220 = tpu.matmul %218, %219, %cst_75 {dimension_numbers = #tpu.dot_dimension_numbers<[1], [0], [0], [1], [0, 0, 1, 1], [], []>} : vector<2x16xbf16>, vector<16x4xbf16>, vector<2x4xf32> -> vector<2x4xf32>
    %c0_76 = arith.constant 0 : index
    %c0_77 = arith.constant 0 : index
    %221 = vector.load %arg14[%c0_76, %c0_77] : memref<1x4xf32, #tpu.memory_space<vmem>>, vector<1x4xf32>
    %222 = vector.broadcast %221 : vector<1x4xf32> to vector<2x4xf32>
    %223 = arith.addf %220, %222 : vector<2x4xf32>
    %c0_78 = arith.constant 0 : index
    %c0_79 = arith.constant 0 : index
    %224 = vector.load %arg15[%c0_78, %c0_79] : memref<2x4xf32, #tpu.memory_space<vmem>>, vector<2x4xf32>
    tpu.vector_store %arg15[%c0_78, %c0_79], %223 {strides = array<i32>} : memref<2x4xf32, #tpu.memory_space<vmem>>, vector<2x4xf32>,
    return
  }
}

</mosaic_0001>

<llo_original>
// kernel: tpu_custom_call.1
$region0: #{tpu_custom_call.1}
  #allocation0 [shape = 'u32[]', space=smem, size = 0x4, offset = 0x4, fixed_abs, tag = 'smem constant byte address 0x4 - core index']
  #allocation1 [shape = 'u32[144,128]{1,0:T(1,128)}', space=vmem, size = 0x12000, scoped, tag = 'internal scratch']
  %s0 = inlined_call_operand.vmem [shape: f32[1,16], index: 0, kind: input, shape index: {}]
  %s1 = inlined_call_operand.vmem [shape: bf16[16,48], index: 1, kind: input, shape index: {}]
  %s2 = inlined_call_operand.vmem [shape: f32[1,48], index: 2, kind: input, shape index: {}]
  %s3 = inlined_call_operand.vmem [shape: bf16[16,16], index: 3, kind: input, shape index: {}]
  %s4 = inlined_call_operand.vmem [shape: f32[1,16], index: 4, kind: input, shape index: {}]
  %s5 = inlined_call_operand.vmem [shape: f32[1,16], index: 5, kind: input, shape index: {}]
  %s6 = inlined_call_operand.vmem [shape: f32[1,16], index: 6, kind: input, shape index: {}]
  %s7 = inlined_call_operand.vmem [shape: f32[1,16], index: 7, kind: input, shape index: {}]
  %s8 = inlined_call_operand.vmem [shape: f32[1,16], index: 8, kind: input, shape index: {}]
  %s9 = inlined_call_operand.vmem [shape: bf16[16,2048], index: 9, kind: input, shape index: {}]
  %s10 = inlined_call_operand.vmem [shape: f32[1,2048], index: 10, kind: input, shape index: {}]
  %s11 = inlined_call_operand.vmem [shape: bf16[2048,16], index: 11, kind: input, shape index: {}]
  %s12 = inlined_call_operand.vmem [shape: f32[1,16], index: 12, kind: input, shape index: {}]
  %s13 = inlined_call_operand.vmem [shape: bf16[16,4], index: 13, kind: input, shape index: {}]
  %s14 = inlined_call_operand.vmem [shape: f32[1,4], index: 14, kind: input, shape index: {}]
  %s15 = inlined_call_operand.hbm [shape: f32[2,4], index: 15, kind: output, shape index: {}]
  %s16 = sld [smem:[#allocation0]]
  $region70: #{tpu_custom_call.1} parent=0
    _
  %s18 = ssub.s32 1, %s16
  %s19 = scalar_select 0, %s18, %s16
  $region1: #{tpu_custom_call.1} parent=0
    #allocation2 [shape = 'u8[1024]{0}', space=vmem, size = 0x400, scoped, tag = 'output window, operand 0, single buffered']
    #allocation3 [shape = 's32[1]{0}', space=sflag, size = 0x4, scoped, tag = 'scoped memory for tpu_custom_call.1']
    %20 = vsyncpa [#allocation3], 0
    // Predicated region
    $region2: #{tpu_custom_call.1} parent=1 // pred_check
      _
    $region3: #{tpu_custom_call.1} parent=1 // pred_check_branch
      %22 = sbr.rel (0) target = $region5
    $region4: #{tpu_custom_call.1} parent=1 // pred_region
      _
    $region5: #{tpu_custom_call.1} parent=1 // pred_fallthru
      _
    // Predicated region
    $region6: #{tpu_custom_call.1} parent=1 // pred_check
      _
    $region7: #{tpu_custom_call.1} parent=1 // pred_check_branch
      %24 = sbr.rel (0) target = $region9
    $region8: #{tpu_custom_call.1} parent=1 // pred_region
      _
    $region9: #{tpu_custom_call.1} parent=1 // pred_fallthru
      _
    // Predicated region
    $region10: #{tpu_custom_call.1} parent=1 // pred_check
      _
    $region11: #{tpu_custom_call.1} parent=1 // pred_check_branch
      %26 = sbr.rel (0) target = $region13
    $region12: #{tpu_custom_call.1} parent=1 // pred_region
      _
    $region13: #{tpu_custom_call.1} parent=1 // pred_fallthru
      _
    // Predicated region
    $region14: #{tpu_custom_call.1} parent=1 // pred_check
      _
    $region15: #{tpu_custom_call.1} parent=1 // pred_check_branch
      %28 = sbr.rel (0) target = $region17
    $region16: #{tpu_custom_call.1} parent=1 // pred_region
      _
    $region17: #{tpu_custom_call.1} parent=1 // pred_fallthru
      _
    // Predicated region
    $region18: #{tpu_custom_call.1} parent=1 // pred_check
      _
    $region19: #{tpu_custom_call.1} parent=1 // pred_check_branch
      %30 = sbr.rel (0) target = $region21
    $region20: #{tpu_custom_call.1} parent=1 // pred_region
      _
    $region21: #{tpu_custom_call.1} parent=1 // pred_fallthru
      _
    // Predicated region
    $region22: #{tpu_custom_call.1} parent=1 // pred_check
      _
    $region23: #{tpu_custom_call.1} parent=1 // pred_check_branch
      %32 = sbr.rel (0) target = $region25
    $region24: #{tpu_custom_call.1} parent=1 // pred_region
      _
    $region25: #{tpu_custom_call.1} parent=1 // pred_fallthru
      _
    // Predicated region
    $region26: #{tpu_custom_call.1} parent=1 // pred_check
      _
    $region27: #{tpu_custom_call.1} parent=1 // pred_check_branch
      %34 = sbr.rel (0) target = $region29
    $region28: #{tpu_custom_call.1} parent=1 // pred_region
      _
    $region29: #{tpu_custom_call.1} parent=1 // pred_fallthru
      _
    // Predicated region
    $region30: #{tpu_custom_call.1} parent=1 // pred_check
      _
    $region31: #{tpu_custom_call.1} parent=1 // pred_check_branch
      %36 = sbr.rel (0) target = $region33
    $region32: #{tpu_custom_call.1} parent=1 // pred_region
      _
    $region33: #{tpu_custom_call.1} parent=1 // pred_fallthru
      _
    // Predicated region
    $region34: #{tpu_custom_call.1} parent=1 // pred_check
      _
    $region35: #{tpu_custom_call.1} parent=1 // pred_check_branch
      %38 = sbr.rel (0) target = $region37
    $region36: #{tpu_custom_call.1} parent=1 // pred_region
      _
    $region37: #{tpu_custom_call.1} parent=1 // pred_fallthru
      _
    // Predicated region
    $region38: #{tpu_custom_call.1} parent=1 // pred_check
      _
    $region39: #{tpu_custom_call.1} parent=1 // pred_check_branch
      %40 = sbr.rel (0) target = $region41
    $region40: #{tpu_custom_call.1} parent=1 // pred_region
      _
    $region41: #{tpu_custom_call.1} parent=1 // pred_fallthru
      _
    // Predicated region
    $region42: #{tpu_custom_call.1} parent=1 // pred_check
      _
    $region43: #{tpu_custom_call.1} parent=1 // pred_check_branch
      %42 = sbr.rel (0) target = $region45
    $region44: #{tpu_custom_call.1} parent=1 // pred_region
      _
    $region45: #{tpu_custom_call.1} parent=1 // pred_fallthru
      _
    // Predicated region
    $region46: #{tpu_custom_call.1} parent=1 // pred_check
      _
    $region47: #{tpu_custom_call.1} parent=1 // pred_check_branch
      %44 = sbr.rel (0) target = $region49
    $region48: #{tpu_custom_call.1} parent=1 // pred_region
      _
    $region49: #{tpu_custom_call.1} parent=1 // pred_fallthru
      _
    // Predicated region
    $region50: #{tpu_custom_call.1} parent=1 // pred_check
      _
    $region51: #{tpu_custom_call.1} parent=1 // pred_check_branch
      %46 = sbr.rel (0) target = $region53
    $region52: #{tpu_custom_call.1} parent=1 // pred_region
      _
    $region53: #{tpu_custom_call.1} parent=1 // pred_fallthru
      _
    // Predicated region
    $region54: #{tpu_custom_call.1} parent=1 // pred_check
      _
    $region55: #{tpu_custom_call.1} parent=1 // pred_check_branch
      %48 = sbr.rel (0) target = $region57
    $region56: #{tpu_custom_call.1} parent=1 // pred_region
      _
    $region57: #{tpu_custom_call.1} parent=1 // pred_fallthru
      _
    // Predicated region
    $region58: #{tpu_custom_call.1} parent=1 // pred_check
      _
    $region59: #{tpu_custom_call.1} parent=1 // pred_check_branch
      %50 = sbr.rel (0) target = $region61
    $region60: #{tpu_custom_call.1} parent=1 // pred_region
      _
    $region61: #{tpu_custom_call.1} parent=1 // pred_fallthru
      _
    %v52 = vld [vmem:[%s0] sm:$0x1]
    %v54 = vlaneseq
    %v55 = vshrl.u32 %v54, 7
    %v56 = vsub.s32 0, %v55
    %v57 = vrot.slane %v52, %v56
    %v59 = vpack.c.bf16 %v57, %v57
    %v60 = vld [vmem:[%s1] sm:$0xf]
    %v61 = vld [vmem:[%s1 + $0x4] sm:$0xf]
    %v62 = vld [vmem:[%s2] sm:$0x1]
    %v64 = vlaneseq
    %v65 = vshrl.u32 %v64, 7
    %v66 = vsub.s32 0, %v65
    %v67 = vrot.slane %v62, %v66
    %v71 = vunpack.c.l.b16 %v60
    %v72 = vunpack.c.l.b16 %v61
    %v73 = vpack.c.b16 %v72, %v71
    %vm75 = vcmask 130048
    %v77 = vsel %vm75, %v59, 0
    %79 = vmatprep.subr.bf16.mxu0 0
    %80 = vmatpush1.bf16.msra.mxu0 %v73
    %81 = vmatprep.subr.bf16.mxu0 0
    %82 = vmatpush1.bf16.msra.mxu0 0
    %83 = vmatprep.subr.bf16.mxu0 0
    %84 = vmatpush1.bf16.msra.mxu0 0
    %85 = vmatprep.subr.bf16.mxu0 0
    %86 = vmatpush1.bf16.msra.mxu0 0
    %87 = vmatprep.subr.bf16.mxu0 0
    %88 = vmatpush1.bf16.msra.mxu0 0
    %89 = vmatprep.subr.bf16.mxu0 0
    %90 = vmatpush1.bf16.msra.mxu0 0
    %91 = vmatprep.subr.bf16.mxu0 0
    %92 = vmatpush1.bf16.msra.mxu0 0
    %93 = vmatprep.subr.bf16.mxu0 0
    %94 = vmatpush1.bf16.msra.mxu0 0
    %95 = vmatprep.subr.bf16.mxu0 0
    %96 = vmatpush1.bf16.msra.mxu0 0
    %97 = vmatprep.subr.bf16.mxu0 0
    %98 = vmatpush1.bf16.msra.mxu0 0
    %99 = vmatprep.subr.bf16.mxu0 0
    %100 = vmatpush1.bf16.msra.mxu0 0
    %101 = vmatprep.subr.bf16.mxu0 0
    %102 = vmatpush1.bf16.msra.mxu0 0
    %103 = vmatprep.subr.bf16.mxu0 0
    %104 = vmatpush1.bf16.msra.mxu0 0
    %105 = vmatprep.subr.bf16.mxu0 0
    %106 = vmatpush1.bf16.msra.mxu0 0
    %107 = vmatprep.subr.bf16.mxu0 0
    %108 = vmatpush1.bf16.msra.mxu0 0
    %109 = vmatprep.subr.bf16.mxu0 0
    %110 = vmatpush1.bf16.msra.mxu0 0
    %111 = vmatprep.mubr.bf16.mxu0 0
    %112 = vmatmul.mubr.bf16.gmra.mrb[0].mxu0 %v77
    %v113 = vpop.f32.mrb[0].mxu0
    %v114 = vadd.f32 %v67, %v113
    %v115 = vpop.f32.mrb[0].mxu0
    %v116 = vpop.f32.mrb[0].mxu0
    %v117 = vpop.f32.mrb[0].mxu0
    %118 = vdwg.mxu0
    %v119 = vlaneseq
    %v120 = vand.u32 %v119, 127
    %vm121 = vcmp.lt.s32.totalorder %v120, 2
    %v122 = vsel %vm121, 0.0, -1e+30
    %124 = vrot.lane.b32.xlu0 %v114, 112
    %v125 = vpop.permute.xlu0 %124
    %vm126 = vcmask 15360
    %v127 = vsel %vm126, %v114, 0
    %v129 = vsel %vm126, %v125, 0
    %131 = vmatprep.subr.mxu0 0.0
    %132 = vmatpush1.xpose.msra.mxu0 %v129
    %133 = vmatprep.subr.mxu0 0.0
    %134 = vmatpush1.xpose.msra.mxu0 0.0
    %135 = vmatprep.subr.mxu0 0.0
    %136 = vmatpush1.xpose.msra.mxu0 0.0
    %137 = vmatprep.subr.mxu0 0.0
    %138 = vmatpush1.xpose.msra.mxu0 0.0
    %139 = vmatprep.subr.mxu0 0.0
    %140 = vmatpush1.xpose.msra.mxu0 0.0
    %141 = vmatprep.subr.mxu0 0.0
    %142 = vmatpush1.xpose.msra.mxu0 0.0
    %143 = vmatprep.subr.mxu0 0.0
    %144 = vmatpush1.xpose.msra.mxu0 0.0
    %145 = vmatprep.subr.mxu0 0.0
    %146 = vmatpush1.xpose.msra.mxu0 0.0
    %147 = vmatprep.subr.mxu0 0.0
    %148 = vmatpush1.xpose.msra.mxu0 0.0
    %149 = vmatprep.subr.mxu0 0.0
    %150 = vmatpush1.xpose.msra.mxu0 0.0
    %151 = vmatprep.subr.mxu0 0.0
    %152 = vmatpush1.xpose.msra.mxu0 0.0
    %153 = vmatprep.subr.mxu0 0.0
    %154 = vmatpush1.xpose.msra.mxu0 0.0
    %155 = vmatprep.subr.mxu0 0.0
    %156 = vmatpush1.xpose.msra.mxu0 0.0
    %157 = vmatprep.subr.mxu0 0.0
    %158 = vmatpush1.xpose.msra.mxu0 0.0
    %159 = vmatprep.subr.mxu0 0.0
    %160 = vmatpush1.xpose.msra.mxu0 0.0
    %161 = vmatprep.subr.mxu0 0.0
    %162 = vmatpush1.xpose.msra.mxu0 0.0
    %163 = vmatprep.subr.mxu0 0.0
    %164 = vmatpush1.xpose.msra.mxu0 0.0
    %165 = vmatprep.subr.mxu0 0.0
    %166 = vmatpush1.xpose.msra.mxu0 0.0
    %167 = vmatprep.subr.mxu0 0.0
    %168 = vmatpush1.xpose.msra.mxu0 0.0
    %169 = vmatprep.subr.mxu0 0.0
    %170 = vmatpush1.xpose.msra.mxu0 0.0
    %171 = vmatprep.subr.mxu0 0.0
    %172 = vmatpush1.xpose.msra.mxu0 0.0
    %173 = vmatprep.subr.mxu0 0.0
    %174 = vmatpush1.xpose.msra.mxu0 0.0
    %175 = vmatprep.subr.mxu0 0.0
    %176 = vmatpush1.xpose.msra.mxu0 0.0
    %177 = vmatprep.subr.mxu0 0.0
    %178 = vmatpush1.xpose.msra.mxu0 0.0
    %179 = vmatprep.subr.mxu0 0.0
    %180 = vmatpush1.xpose.msra.mxu0 0.0
    %181 = vmatprep.subr.mxu0 0.0
    %182 = vmatpush1.xpose.msra.mxu0 0.0
    %183 = vmatprep.subr.mxu0 0.0
    %184 = vmatpush1.xpose.msra.mxu0 0.0
    %185 = vmatprep.subr.mxu0 0.0
    %186 = vmatpush1.xpose.msra.mxu0 0.0
    %187 = vmatprep.subr.mxu0 0.0
    %188 = vmatpush1.xpose.msra.mxu0 0.0
    %189 = vmatprep.subr.mxu0 0.0
    %190 = vmatpush1.xpose.msra.mxu0 0.0
    %191 = vmatprep.subr.mxu0 0.0
    %192 = vmatpush1.xpose.msra.mxu0 0.0
    %193 = vmatprep.subr.mxu0 0.0
    %194 = vmatpush1.xpose.msra.mxu0 0.0
    %195 = vmatprep.mubr.f32.mxu0 0.0
    %196 = vmatmul.mubr.f32.gmra.mrb[0].mxu0 %v127
    %v197 = vpop.f32.mrb[0].mxu0
    %v198 = vadd.f32 %v122, %v197
    %v199 = vpop.f32.mrb[0].mxu0
    %200 = vdwg.mxu0
    %vm201 = vcmask 64512
    %v202 = vsel %vm201, %v198, -inf
    %203 = vmax.xlane.f32.xlu0 %v202
    %v204 = vpop.xlane.xlu0 %203
    %v205 = vsub.f32 %v198, %v204
    %v206 = vmul.f32 %v205, 1.442695
    %v207 = vpow.pop %v206
    %v208 = vsel %vm201, %v207, 0.0
    %209 = vadd.xlane.f32.xlu0 %v208
    %v210 = vpop.xlane.xlu0 %209
    %v211 = vrcp.pop %v210
    %v212 = vmul.f32 %v207, %v211
    %213 = vrot.lane.b32.xlu0 %v114, 96
    %v214 = vpop.permute.xlu0 %213
    %v217 = vsel %vm201, %v212, 0
    %219 = vmatprep.subr.mxu0 0.0
    %220 = vmatpush1.msra.mxu0 %v214
    %221 = vmatprep.subr.mxu0 0.0
    %222 = vmatpush1.msra.mxu0 0.0
    %223 = vmatprep.subr.mxu0 0.0
    %224 = vmatpush1.msra.mxu0 0.0
    %225 = vmatprep.subr.mxu0 0.0
    %226 = vmatpush1.msra.mxu0 0.0
    %227 = vmatprep.subr.mxu0 0.0
    %228 = vmatpush1.msra.mxu0 0.0
    %229 = vmatprep.subr.mxu0 0.0
    %230 = vmatpush1.msra.mxu0 0.0
    %231 = vmatprep.subr.mxu0 0.0
    %232 = vmatpush1.msra.mxu0 0.0
    %233 = vmatprep.subr.mxu0 0.0
    %234 = vmatpush1.msra.mxu0 0.0
    %235 = vmatprep.subr.mxu0 0.0
    %236 = vmatpush1.msra.mxu0 0.0
    %237 = vmatprep.subr.mxu0 0.0
    %238 = vmatpush1.msra.mxu0 0.0
    %239 = vmatprep.subr.mxu0 0.0
    %240 = vmatpush1.msra.mxu0 0.0
    %241 = vmatprep.subr.mxu0 0.0
    %242 = vmatpush1.msra.mxu0 0.0
    %243 = vmatprep.subr.mxu0 0.0
    %244 = vmatpush1.msra.mxu0 0.0
    %245 = vmatprep.subr.mxu0 0.0
    %246 = vmatpush1.msra.mxu0 0.0
    %247 = vmatprep.subr.mxu0 0.0
    %248 = vmatpush1.msra.mxu0 0.0
    %249 = vmatprep.subr.mxu0 0.0
    %250 = vmatpush1.msra.mxu0 0.0
    %251 = vmatprep.subr.mxu0 0.0
    %252 = vmatpush1.msra.mxu0 0.0
    %253 = vmatprep.subr.mxu0 0.0
    %254 = vmatpush1.msra.mxu0 0.0
    %255 = vmatprep.subr.mxu0 0.0
    %256 = vmatpush1.msra.mxu0 0.0
    %257 = vmatprep.subr.mxu0 0.0
    %258 = vmatpush1.msra.mxu0 0.0
    %259 = vmatprep.subr.mxu0 0.0
    %260 = vmatpush1.msra.mxu0 0.0
    %261 = vmatprep.subr.mxu0 0.0
    %262 = vmatpush1.msra.mxu0 0.0
    %263 = vmatprep.subr.mxu0 0.0
    %264 = vmatpush1.msra.mxu0 0.0
    %265 = vmatprep.subr.mxu0 0.0
    %266 = vmatpush1.msra.mxu0 0.0
    %267 = vmatprep.subr.mxu0 0.0
    %268 = vmatpush1.msra.mxu0 0.0
    %269 = vmatprep.subr.mxu0 0.0
    %270 = vmatpush1.msra.mxu0 0.0
    %271 = vmatprep.subr.mxu0 0.0
    %272 = vmatpush1.msra.mxu0 0.0
    %273 = vmatprep.subr.mxu0 0.0
    %274 = vmatpush1.msra.mxu0 0.0
    %275 = vmatprep.subr.mxu0 0.0
    %276 = vmatpush1.msra.mxu0 0.0
    %277 = vmatprep.subr.mxu0 0.0
    %278 = vmatpush1.msra.mxu0 0.0
    %279 = vmatprep.subr.mxu0 0.0
    %280 = vmatpush1.msra.mxu0 0.0
    %281 = vmatprep.subr.mxu0 0.0
    %282 = vmatpush1.msra.mxu0 0.0
    %283 = vmatprep.mubr.f32.mxu0 0.0
    %284 = vmatmul.mubr.f32.gmra.mrb[0].mxu0 %v217
    %v285 = vpop.f32.mrb[0].mxu0
    %v286 = vadd.f32 0.0, %v285
    %v287 = vpop.f32.mrb[0].mxu0
    %288 = vdwg.mxu0
    %289 = vrot.lane.b32.xlu0 %v114, 126
    %v290 = vpop.permute.xlu0 %289
    %291 = vrot.lane.b32.xlu0 %v114, 110
    %v292 = vpop.permute.xlu0 %291
    %v293 = vsel %vm126, %v290, 0
    %v295 = vsel %vm126, %v292, 0
    %297 = vmatprep.subr.mxu0 0.0
    %298 = vmatpush1.xpose.msra.mxu0 %v295
    %299 = vmatprep.subr.mxu0 0.0
    %300 = vmatpush1.xpose.msra.mxu0 0.0
    %301 = vmatprep.subr.mxu0 0.0
    %302 = vmatpush1.xpose.msra.mxu0 0.0
    %303 = vmatprep.subr.mxu0 0.0
    %304 = vmatpush1.xpose.msra.mxu0 0.0
    %305 = vmatprep.subr.mxu0 0.0
    %306 = vmatpush1.xpose.msra.mxu0 0.0
    %307 = vmatprep.subr.mxu0 0.0
    %308 = vmatpush1.xpose.msra.mxu0 0.0
    %309 = vmatprep.subr.mxu0 0.0
    %310 = vmatpush1.xpose.msra.mxu0 0.0
    %311 = vmatprep.subr.mxu0 0.0
    %312 = vmatpush1.xpose.msra.mxu0 0.0
    %313 = vmatprep.subr.mxu0 0.0
    %314 = vmatpush1.xpose.msra.mxu0 0.0
    %315 = vmatprep.subr.mxu0 0.0
    %316 = vmatpush1.xpose.msra.mxu0 0.0
    %317 = vmatprep.subr.mxu0 0.0
    %318 = vmatpush1.xpose.msra.mxu0 0.0
    %319 = vmatprep.subr.mxu0 0.0
    %320 = vmatpush1.xpose.msra.mxu0 0.0
    %321 = vmatprep.subr.mxu0 0.0
    %322 = vmatpush1.xpose.msra.mxu0 0.0
    %323 = vmatprep.subr.mxu0 0.0
    %324 = vmatpush1.xpose.msra.mxu0 0.0
    %325 = vmatprep.subr.mxu0 0.0
    %326 = vmatpush1.xpose.msra.mxu0 0.0
    %327 = vmatprep.subr.mxu0 0.0
    %328 = vmatpush1.xpose.msra.mxu0 0.0
    %329 = vmatprep.subr.mxu0 0.0
    %330 = vmatpush1.xpose.msra.mxu0 0.0
    %331 = vmatprep.subr.mxu0 0.0
    %332 = vmatpush1.xpose.msra.mxu0 0.0
    %333 = vmatprep.subr.mxu0 0.0
    %334 = vmatpush1.xpose.msra.mxu0 0.0
    %335 = vmatprep.subr.mxu0 0.0
    %336 = vmatpush1.xpose.msra.mxu0 0.0
    %337 = vmatprep.subr.mxu0 0.0
    %338 = vmatpush1.xpose.msra.mxu0 0.0
    %339 = vmatprep.subr.mxu0 0.0
    %340 = vmatpush1.xpose.msra.mxu0 0.0
    %341 = vmatprep.subr.mxu0 0.0
    %342 = vmatpush1.xpose.msra.mxu0 0.0
    %343 = vmatprep.subr.mxu0 0.0
    %344 = vmatpush1.xpose.msra.mxu0 0.0
    %345 = vmatprep.subr.mxu0 0.0
    %346 = vmatpush1.xpose.msra.mxu0 0.0
    %347 = vmatprep.subr.mxu0 0.0
    %348 = vmatpush1.xpose.msra.mxu0 0.0
    %349 = vmatprep.subr.mxu0 0.0
    %350 = vmatpush1.xpose.msra.mxu0 0.0
    %351 = vmatprep.subr.mxu0 0.0
    %352 = vmatpush1.xpose.msra.mxu0 0.0
    %353 = vmatprep.subr.mxu0 0.0
    %354 = vmatpush1.xpose.msra.mxu0 0.0
    %355 = vmatprep.subr.mxu0 0.0
    %356 = vmatpush1.xpose.msra.mxu0 0.0
    %357 = vmatprep.subr.mxu0 0.0
    %358 = vmatpush1.xpose.msra.mxu0 0.0
    %359 = vmatprep.subr.mxu0 0.0
    %360 = vmatpush1.xpose.msra.mxu0 0.0
    %361 = vmatprep.mubr.f32.mxu0 0.0
    %362 = vmatmul.mubr.f32.gmra.mrb[0].mxu0 %v293
    %v363 = vpop.f32.mrb[0].mxu0
    %v364 = vadd.f32 %v122, %v363
    %v365 = vpop.f32.mrb[0].mxu0
    %366 = vdwg.mxu0
    %v367 = vsel %vm201, %v364, -inf
    %368 = vmax.xlane.f32.xlu0 %v367
    %v369 = vpop.xlane.xlu0 %368
    %v370 = vsub.f32 %v364, %v369
    %v371 = vmul.f32 %v370, 1.442695
    %v372 = vpow.pop %v371
    %v373 = vsel %vm201, %v372, 0.0
    %374 = vadd.xlane.f32.xlu0 %v373
    %v375 = vpop.xlane.xlu0 %374
    %v376 = vrcp.pop %v375
    %v377 = vmul.f32 %v372, %v376
    %378 = vrot.lane.b32.xlu0 %v114, 94
    %v379 = vpop.permute.xlu0 %378
    %v382 = vsel %vm201, %v377, 0
    %384 = vmatprep.subr.mxu0 0.0
    %385 = vmatpush1.msra.mxu0 %v379
    %386 = vmatprep.subr.mxu0 0.0
    %387 = vmatpush1.msra.mxu0 0.0
    %388 = vmatprep.subr.mxu0 0.0
    %389 = vmatpush1.msra.mxu0 0.0
    %390 = vmatprep.subr.mxu0 0.0
    %391 = vmatpush1.msra.mxu0 0.0
    %392 = vmatprep.subr.mxu0 0.0
    %393 = vmatpush1.msra.mxu0 0.0
    %394 = vmatprep.subr.mxu0 0.0
    %395 = vmatpush1.msra.mxu0 0.0
    %396 = vmatprep.subr.mxu0 0.0
    %397 = vmatpush1.msra.mxu0 0.0
    %398 = vmatprep.subr.mxu0 0.0
    %399 = vmatpush1.msra.mxu0 0.0
    %400 = vmatprep.subr.mxu0 0.0
    %401 = vmatpush1.msra.mxu0 0.0
    %402 = vmatprep.subr.mxu0 0.0
    %403 = vmatpush1.msra.mxu0 0.0
    %404 = vmatprep.subr.mxu0 0.0
    %405 = vmatpush1.msra.mxu0 0.0
    %406 = vmatprep.subr.mxu0 0.0
    %407 = vmatpush1.msra.mxu0 0.0
    %408 = vmatprep.subr.mxu0 0.0
    %409 = vmatpush1.msra.mxu0 0.0
    %410 = vmatprep.subr.mxu0 0.0
    %411 = vmatpush1.msra.mxu0 0.0
    %412 = vmatprep.subr.mxu0 0.0
    %413 = vmatpush1.msra.mxu0 0.0
    %414 = vmatprep.subr.mxu0 0.0
    %415 = vmatpush1.msra.mxu0 0.0
    %416 = vmatprep.subr.mxu0 0.0
    %417 = vmatpush1.msra.mxu0 0.0
    %418 = vmatprep.subr.mxu0 0.0
    %419 = vmatpush1.msra.mxu0 0.0
    %420 = vmatprep.subr.mxu0 0.0
    %421 = vmatpush1.msra.mxu0 0.0
    %422 = vmatprep.subr.mxu0 0.0
    %423 = vmatpush1.msra.mxu0 0.0
    %424 = vmatprep.subr.mxu0 0.0
    %425 = vmatpush1.msra.mxu0 0.0
    %426 = vmatprep.subr.mxu0 0.0
    %427 = vmatpush1.msra.mxu0 0.0
    %428 = vmatprep.subr.mxu0 0.0
    %429 = vmatpush1.msra.mxu0 0.0
    %430 = vmatprep.subr.mxu0 0.0
    %431 = vmatpush1.msra.mxu0 0.0
    %432 = vmatprep.subr.mxu0 0.0
    %433 = vmatpush1.msra.mxu0 0.0
    %434 = vmatprep.subr.mxu0 0.0
    %435 = vmatpush1.msra.mxu0 0.0
    %436 = vmatprep.subr.mxu0 0.0
    %437 = vmatpush1.msra.mxu0 0.0
    %438 = vmatprep.subr.mxu0 0.0
    %439 = vmatpush1.msra.mxu0 0.0
    %440 = vmatprep.subr.mxu0 0.0
    %441 = vmatpush1.msra.mxu0 0.0
    %442 = vmatprep.subr.mxu0 0.0
    %443 = vmatpush1.msra.mxu0 0.0
    %444 = vmatprep.subr.mxu0 0.0
    %445 = vmatpush1.msra.mxu0 0.0
    %446 = vmatprep.subr.mxu0 0.0
    %447 = vmatpush1.msra.mxu0 0.0
    %448 = vmatprep.mubr.f32.mxu0 0.0
    %449 = vmatmul.mubr.f32.gmra.mrb[0].mxu0 %v382
    %v450 = vpop.f32.mrb[0].mxu0
    %v451 = vadd.f32 0.0, %v450
    %v452 = vpop.f32.mrb[0].mxu0
    %453 = vdwg.mxu0
    %454 = vrot.lane.b32.xlu0 %v114, 124
    %v455 = vpop.permute.xlu0 %454
    %456 = vrot.lane.b32.xlu0 %v114, 108
    %v457 = vpop.permute.xlu0 %456
    %v458 = vsel %vm126, %v455, 0
    %v460 = vsel %vm126, %v457, 0
    %462 = vmatprep.subr.mxu0 0.0
    %463 = vmatpush1.xpose.msra.mxu0 %v460
    %464 = vmatprep.subr.mxu0 0.0
    %465 = vmatpush1.xpose.msra.mxu0 0.0
    %466 = vmatprep.subr.mxu0 0.0
    %467 = vmatpush1.xpose.msra.mxu0 0.0
    %468 = vmatprep.subr.mxu0 0.0
    %469 = vmatpush1.xpose.msra.mxu0 0.0
    %470 = vmatprep.subr.mxu0 0.0
    %471 = vmatpush1.xpose.msra.mxu0 0.0
    %472 = vmatprep.subr.mxu0 0.0
    %473 = vmatpush1.xpose.msra.mxu0 0.0
    %474 = vmatprep.subr.mxu0 0.0
    %475 = vmatpush1.xpose.msra.mxu0 0.0
    %476 = vmatprep.subr.mxu0 0.0
    %477 = vmatpush1.xpose.msra.mxu0 0.0
    %478 = vmatprep.subr.mxu0 0.0
    %479 = vmatpush1.xpose.msra.mxu0 0.0
    %480 = vmatprep.subr.mxu0 0.0
    %481 = vmatpush1.xpose.msra.mxu0 0.0
    %482 = vmatprep.subr.mxu0 0.0
    %483 = vmatpush1.xpose.msra.mxu0 0.0
    %484 = vmatprep.subr.mxu0 0.0
    %485 = vmatpush1.xpose.msra.mxu0 0.0
    %486 = vmatprep.subr.mxu0 0.0
    %487 = vmatpush1.xpose.msra.mxu0 0.0
    %488 = vmatprep.subr.mxu0 0.0
    %489 = vmatpush1.xpose.msra.mxu0 0.0
    %490 = vmatprep.subr.mxu0 0.0
    %491 = vmatpush1.xpose.msra.mxu0 0.0
    %492 = vmatprep.subr.mxu0 0.0
    %493 = vmatpush1.xpose.msra.mxu0 0.0
    %494 = vmatprep.subr.mxu0 0.0
    %495 = vmatpush1.xpose.msra.mxu0 0.0
    %496 = vmatprep.subr.mxu0 0.0
    %497 = vmatpush1.xpose.msra.mxu0 0.0
    %498 = vmatprep.subr.mxu0 0.0
    %499 = vmatpush1.xpose.msra.mxu0 0.0
    %500 = vmatprep.subr.mxu0 0.0
    %501 = vmatpush1.xpose.msra.mxu0 0.0
    %502 = vmatprep.subr.mxu0 0.0
    %503 = vmatpush1.xpose.msra.mxu0 0.0
    %504 = vmatprep.subr.mxu0 0.0
    %505 = vmatpush1.xpose.msra.mxu0 0.0
    %506 = vmatprep.subr.mxu0 0.0
    %507 = vmatpush1.xpose.msra.mxu0 0.0
    %508 = vmatprep.subr.mxu0 0.0
    %509 = vmatpush1.xpose.msra.mxu0 0.0
    %510 = vmatprep.subr.mxu0 0.0
    %511 = vmatpush1.xpose.msra.mxu0 0.0
    %512 = vmatprep.subr.mxu0 0.0
    %513 = vmatpush1.xpose.msra.mxu0 0.0
    %514 = vmatprep.subr.mxu0 0.0
    %515 = vmatpush1.xpose.msra.mxu0 0.0
    %516 = vmatprep.subr.mxu0 0.0
    %517 = vmatpush1.xpose.msra.mxu0 0.0
    %518 = vmatprep.subr.mxu0 0.0
    %519 = vmatpush1.xpose.msra.mxu0 0.0
    %520 = vmatprep.subr.mxu0 0.0
    %521 = vmatpush1.xpose.msra.mxu0 0.0
    %522 = vmatprep.subr.mxu0 0.0
    %523 = vmatpush1.xpose.msra.mxu0 0.0
    %524 = vmatprep.subr.mxu0 0.0
    %525 = vmatpush1.xpose.msra.mxu0 0.0
    %526 = vmatprep.mubr.f32.mxu0 0.0
    %527 = vmatmul.mubr.f32.gmra.mrb[0].mxu0 %v458
    %v528 = vpop.f32.mrb[0].mxu0
    %v529 = vadd.f32 %v122, %v528
    %v530 = vpop.f32.mrb[0].mxu0
    %531 = vdwg.mxu0
    %v532 = vsel %vm201, %v529, -inf
    %533 = vmax.xlane.f32.xlu0 %v532
    %v534 = vpop.xlane.xlu0 %533
    %v535 = vsub.f32 %v529, %v534
    %v536 = vmul.f32 %v535, 1.442695
    %v537 = vpow.pop %v536
    %v538 = vsel %vm201, %v537, 0.0
    %539 = vadd.xlane.f32.xlu0 %v538
    %v540 = vpop.xlane.xlu0 %539
    %v541 = vrcp.pop %v540
    %v542 = vmul.f32 %v537, %v541
    %543 = vrot.lane.b32.xlu0 %v114, 92
    %v544 = vpop.permute.xlu0 %543
    %v547 = vsel %vm201, %v542, 0
    %549 = vmatprep.subr.mxu0 0.0
    %550 = vmatpush1.msra.mxu0 %v544
    %551 = vmatprep.subr.mxu0 0.0
    %552 = vmatpush1.msra.mxu0 0.0
    %553 = vmatprep.subr.mxu0 0.0
    %554 = vmatpush1.msra.mxu0 0.0
    %555 = vmatprep.subr.mxu0 0.0
    %556 = vmatpush1.msra.mxu0 0.0
    %557 = vmatprep.subr.mxu0 0.0
    %558 = vmatpush1.msra.mxu0 0.0
    %559 = vmatprep.subr.mxu0 0.0
    %560 = vmatpush1.msra.mxu0 0.0
    %561 = vmatprep.subr.mxu0 0.0
    %562 = vmatpush1.msra.mxu0 0.0
    %563 = vmatprep.subr.mxu0 0.0
    %564 = vmatpush1.msra.mxu0 0.0
    %565 = vmatprep.subr.mxu0 0.0
    %566 = vmatpush1.msra.mxu0 0.0
    %567 = vmatprep.subr.mxu0 0.0
    %568 = vmatpush1.msra.mxu0 0.0
    %569 = vmatprep.subr.mxu0 0.0
    %570 = vmatpush1.msra.mxu0 0.0
    %571 = vmatprep.subr.mxu0 0.0
    %572 = vmatpush1.msra.mxu0 0.0
    %573 = vmatprep.subr.mxu0 0.0
    %574 = vmatpush1.msra.mxu0 0.0
    %575 = vmatprep.subr.mxu0 0.0
    %576 = vmatpush1.msra.mxu0 0.0
    %577 = vmatprep.subr.mxu0 0.0
    %578 = vmatpush1.msra.mxu0 0.0
    %579 = vmatprep.subr.mxu0 0.0
    %580 = vmatpush1.msra.mxu0 0.0
    %581 = vmatprep.subr.mxu0 0.0
    %582 = vmatpush1.msra.mxu0 0.0
    %583 = vmatprep.subr.mxu0 0.0
    %584 = vmatpush1.msra.mxu0 0.0
    %585 = vmatprep.subr.mxu0 0.0
    %586 = vmatpush1.msra.mxu0 0.0
    %587 = vmatprep.subr.mxu0 0.0
    %588 = vmatpush1.msra.mxu0 0.0
    %589 = vmatprep.subr.mxu0 0.0
    %590 = vmatpush1.msra.mxu0 0.0
    %591 = vmatprep.subr.mxu0 0.0
    %592 = vmatpush1.msra.mxu0 0.0
    %593 = vmatprep.subr.mxu0 0.0
    %594 = vmatpush1.msra.mxu0 0.0
    %595 = vmatprep.subr.mxu0 0.0
    %596 = vmatpush1.msra.mxu0 0.0
    %597 = vmatprep.subr.mxu0 0.0
    %598 = vmatpush1.msra.mxu0 0.0
    %599 = vmatprep.subr.mxu0 0.0
    %600 = vmatpush1.msra.mxu0 0.0
    %601 = vmatprep.subr.mxu0 0.0
    %602 = vmatpush1.msra.mxu0 0.0
    %603 = vmatprep.subr.mxu0 0.0
    %604 = vmatpush1.msra.mxu0 0.0
    %605 = vmatprep.subr.mxu0 0.0
    %606 = vmatpush1.msra.mxu0 0.0
    %607 = vmatprep.subr.mxu0 0.0
    %608 = vmatpush1.msra.mxu0 0.0
    %609 = vmatprep.subr.mxu0 0.0
    %610 = vmatpush1.msra.mxu0 0.0
    %611 = vmatprep.subr.mxu0 0.0
    %612 = vmatpush1.msra.mxu0 0.0
    %613 = vmatprep.mubr.f32.mxu0 0.0
    %614 = vmatmul.mubr.f32.gmra.mrb[0].mxu0 %v547
    %v615 = vpop.f32.mrb[0].mxu0
    %v616 = vadd.f32 0.0, %v615
    %v617 = vpop.f32.mrb[0].mxu0
    %618 = vdwg.mxu0
    %619 = vrot.lane.b32.xlu0 %v114, 122
    %v620 = vpop.permute.xlu0 %619
    %621 = vrot.lane.b32.xlu0 %v114, 106
    %v622 = vpop.permute.xlu0 %621
    %v623 = vsel %vm126, %v620, 0
    %v625 = vsel %vm126, %v622, 0
    %627 = vmatprep.subr.mxu0 0.0
    %628 = vmatpush1.xpose.msra.mxu0 %v625
    %629 = vmatprep.subr.mxu0 0.0
    %630 = vmatpush1.xpose.msra.mxu0 0.0
    %631 = vmatprep.subr.mxu0 0.0
    %632 = vmatpush1.xpose.msra.mxu0 0.0
    %633 = vmatprep.subr.mxu0 0.0
    %634 = vmatpush1.xpose.msra.mxu0 0.0
    %635 = vmatprep.subr.mxu0 0.0
    %636 = vmatpush1.xpose.msra.mxu0 0.0
    %637 = vmatprep.subr.mxu0 0.0
    %638 = vmatpush1.xpose.msra.mxu0 0.0
    %639 = vmatprep.subr.mxu0 0.0
    %640 = vmatpush1.xpose.msra.mxu0 0.0
    %641 = vmatprep.subr.mxu0 0.0
    %642 = vmatpush1.xpose.msra.mxu0 0.0
    %643 = vmatprep.subr.mxu0 0.0
    %644 = vmatpush1.xpose.msra.mxu0 0.0
    %645 = vmatprep.subr.mxu0 0.0
    %646 = vmatpush1.xpose.msra.mxu0 0.0
    %647 = vmatprep.subr.mxu0 0.0
    %648 = vmatpush1.xpose.msra.mxu0 0.0
    %649 = vmatprep.subr.mxu0 0.0
    %650 = vmatpush1.xpose.msra.mxu0 0.0
    %651 = vmatprep.subr.mxu0 0.0
    %652 = vmatpush1.xpose.msra.mxu0 0.0
    %653 = vmatprep.subr.mxu0 0.0
    %654 = vmatpush1.xpose.msra.mxu0 0.0
    %655 = vmatprep.subr.mxu0 0.0
    %656 = vmatpush1.xpose.msra.mxu0 0.0
    %657 = vmatprep.subr.mxu0 0.0
    %658 = vmatpush1.xpose.msra.mxu0 0.0
    %659 = vmatprep.subr.mxu0 0.0
    %660 = vmatpush1.xpose.msra.mxu0 0.0
    %661 = vmatprep.subr.mxu0 0.0
    %662 = vmatpush1.xpose.msra.mxu0 0.0
    %663 = vmatprep.subr.mxu0 0.0
    %664 = vmatpush1.xpose.msra.mxu0 0.0
    %665 = vmatprep.subr.mxu0 0.0
    %666 = vmatpush1.xpose.msra.mxu0 0.0
    %667 = vmatprep.subr.mxu0 0.0
    %668 = vmatpush1.xpose.msra.mxu0 0.0
    %669 = vmatprep.subr.mxu0 0.0
    %670 = vmatpush1.xpose.msra.mxu0 0.0
    %671 = vmatprep.subr.mxu0 0.0
    %672 = vmatpush1.xpose.msra.mxu0 0.0
    %673 = vmatprep.subr.mxu0 0.0
    %674 = vmatpush1.xpose.msra.mxu0 0.0
    %675 = vmatprep.subr.mxu0 0.0
    %676 = vmatpush1.xpose.msra.mxu0 0.0
    %677 = vmatprep.subr.mxu0 0.0
    %678 = vmatpush1.xpose.msra.mxu0 0.0
    %679 = vmatprep.subr.mxu0 0.0
    %680 = vmatpush1.xpose.msra.mxu0 0.0
    %681 = vmatprep.subr.mxu0 0.0
    %682 = vmatpush1.xpose.msra.mxu0 0.0
    %683 = vmatprep.subr.mxu0 0.0
    %684 = vmatpush1.xpose.msra.mxu0 0.0
    %685 = vmatprep.subr.mxu0 0.0
    %686 = vmatpush1.xpose.msra.mxu0 0.0
    %687 = vmatprep.subr.mxu0 0.0
    %688 = vmatpush1.xpose.msra.mxu0 0.0
    %689 = vmatprep.subr.mxu0 0.0
    %690 = vmatpush1.xpose.msra.mxu0 0.0
    %691 = vmatprep.mubr.f32.mxu0 0.0
    %692 = vmatmul.mubr.f32.gmra.mrb[0].mxu0 %v623
    %v693 = vpop.f32.mrb[0].mxu0
    %v694 = vadd.f32 %v122, %v693
    %v695 = vpop.f32.mrb[0].mxu0
    %696 = vdwg.mxu0
    %v697 = vsel %vm201, %v694, -inf
    %698 = vmax.xlane.f32.xlu0 %v697
    %v699 = vpop.xlane.xlu0 %698
    %v700 = vsub.f32 %v694, %v699
    %v701 = vmul.f32 %v700, 1.442695
    %v702 = vpow.pop %v701
    %v703 = vsel %vm201, %v702, 0.0
    %704 = vadd.xlane.f32.xlu0 %v703
    %v705 = vpop.xlane.xlu0 %704
    %v706 = vrcp.pop %v705
    %v707 = vmul.f32 %v702, %v706
    %708 = vrot.lane.b32.xlu0 %v114, 90
    %v709 = vpop.permute.xlu0 %708
    %v712 = vsel %vm201, %v707, 0
    %714 = vmatprep.subr.mxu0 0.0
    %715 = vmatpush1.msra.mxu0 %v709
    %716 = vmatprep.subr.mxu0 0.0
    %717 = vmatpush1.msra.mxu0 0.0
    %718 = vmatprep.subr.mxu0 0.0
    %719 = vmatpush1.msra.mxu0 0.0
    %720 = vmatprep.subr.mxu0 0.0
    %721 = vmatpush1.msra.mxu0 0.0
    %722 = vmatprep.subr.mxu0 0.0
    %723 = vmatpush1.msra.mxu0 0.0
    %724 = vmatprep.subr.mxu0 0.0
    %725 = vmatpush1.msra.mxu0 0.0
    %726 = vmatprep.subr.mxu0 0.0
    %727 = vmatpush1.msra.mxu0 0.0
    %728 = vmatprep.subr.mxu0 0.0
    %729 = vmatpush1.msra.mxu0 0.0
    %730 = vmatprep.subr.mxu0 0.0
    %731 = vmatpush1.msra.mxu0 0.0
    %732 = vmatprep.subr.mxu0 0.0
    %733 = vmatpush1.msra.mxu0 0.0
    %734 = vmatprep.subr.mxu0 0.0
    %735 = vmatpush1.msra.mxu0 0.0
    %736 = vmatprep.subr.mxu0 0.0
    %737 = vmatpush1.msra.mxu0 0.0
    %738 = vmatprep.subr.mxu0 0.0
    %739 = vmatpush1.msra.mxu0 0.0
    %740 = vmatprep.subr.mxu0 0.0
    %741 = vmatpush1.msra.mxu0 0.0
    %742 = vmatprep.subr.mxu0 0.0
    %743 = vmatpush1.msra.mxu0 0.0
    %744 = vmatprep.subr.mxu0 0.0
    %745 = vmatpush1.msra.mxu0 0.0
    %746 = vmatprep.subr.mxu0 0.0
    %747 = vmatpush1.msra.mxu0 0.0
    %748 = vmatprep.subr.mxu0 0.0
    %749 = vmatpush1.msra.mxu0 0.0
    %750 = vmatprep.subr.mxu0 0.0
    %751 = vmatpush1.msra.mxu0 0.0
    %752 = vmatprep.subr.mxu0 0.0
    %753 = vmatpush1.msra.mxu0 0.0
    %754 = vmatprep.subr.mxu0 0.0
    %755 = vmatpush1.msra.mxu0 0.0
    %756 = vmatprep.subr.mxu0 0.0
    %757 = vmatpush1.msra.mxu0 0.0
    %758 = vmatprep.subr.mxu0 0.0
    %759 = vmatpush1.msra.mxu0 0.0
    %760 = vmatprep.subr.mxu0 0.0
    %761 = vmatpush1.msra.mxu0 0.0
    %762 = vmatprep.subr.mxu0 0.0
    %763 = vmatpush1.msra.mxu0 0.0
    %764 = vmatprep.subr.mxu0 0.0
    %765 = vmatpush1.msra.mxu0 0.0
    %766 = vmatprep.subr.mxu0 0.0
    %767 = vmatpush1.msra.mxu0 0.0
    %768 = vmatprep.subr.mxu0 0.0
    %769 = vmatpush1.msra.mxu0 0.0
    %770 = vmatprep.subr.mxu0 0.0
    %771 = vmatpush1.msra.mxu0 0.0
    %772 = vmatprep.subr.mxu0 0.0
    %773 = vmatpush1.msra.mxu0 0.0
    %774 = vmatprep.subr.mxu0 0.0
    %775 = vmatpush1.msra.mxu0 0.0
    %776 = vmatprep.subr.mxu0 0.0
    %777 = vmatpush1.msra.mxu0 0.0
    %778 = vmatprep.mubr.f32.mxu0 0.0
    %779 = vmatmul.mubr.f32.gmra.mrb[0].mxu0 %v712
    %v780 = vpop.f32.mrb[0].mxu0
    %v781 = vadd.f32 0.0, %v780
    %v782 = vpop.f32.mrb[0].mxu0
    %783 = vdwg.mxu0
    %784 = vrot.lane.b32.xlu0 %v114, 120
    %v785 = vpop.permute.xlu0 %784
    %786 = vrot.lane.b32.xlu0 %v114, 104
    %v787 = vpop.permute.xlu0 %786
    %v788 = vsel %vm126, %v785, 0
    %v790 = vsel %vm126, %v787, 0
    %792 = vmatprep.subr.mxu0 0.0
    %793 = vmatpush1.xpose.msra.mxu0 %v790
    %794 = vmatprep.subr.mxu0 0.0
    %795 = vmatpush1.xpose.msra.mxu0 0.0
    %796 = vmatprep.subr.mxu0 0.0
    %797 = vmatpush1.xpose.msra.mxu0 0.0
    %798 = vmatprep.subr.mxu0 0.0
    %799 = vmatpush1.xpose.msra.mxu0 0.0
    %800 = vmatprep.subr.mxu0 0.0
    %801 = vmatpush1.xpose.msra.mxu0 0.0
    %802 = vmatprep.subr.mxu0 0.0
    %803 = vmatpush1.xpose.msra.mxu0 0.0
    %804 = vmatprep.subr.mxu0 0.0
    %805 = vmatpush1.xpose.msra.mxu0 0.0
    %806 = vmatprep.subr.mxu0 0.0
    %807 = vmatpush1.xpose.msra.mxu0 0.0
    %808 = vmatprep.subr.mxu0 0.0
    %809 = vmatpush1.xpose.msra.mxu0 0.0
    %810 = vmatprep.subr.mxu0 0.0
    %811 = vmatpush1.xpose.msra.mxu0 0.0
    %812 = vmatprep.subr.mxu0 0.0
    %813 = vmatpush1.xpose.msra.mxu0 0.0
    %814 = vmatprep.subr.mxu0 0.0
    %815 = vmatpush1.xpose.msra.mxu0 0.0
    %816 = vmatprep.subr.mxu0 0.0
    %817 = vmatpush1.xpose.msra.mxu0 0.0
    %818 = vmatprep.subr.mxu0 0.0
    %819 = vmatpush1.xpose.msra.mxu0 0.0
    %820 = vmatprep.subr.mxu0 0.0
    %821 = vmatpush1.xpose.msra.mxu0 0.0
    %822 = vmatprep.subr.mxu0 0.0
    %823 = vmatpush1.xpose.msra.mxu0 0.0
    %824 = vmatprep.subr.mxu0 0.0
    %825 = vmatpush1.xpose.msra.mxu0 0.0
    %826 = vmatprep.subr.mxu0 0.0
    %827 = vmatpush1.xpose.msra.mxu0 0.0
    %828 = vmatprep.subr.mxu0 0.0
    %829 = vmatpush1.xpose.msra.mxu0 0.0
    %830 = vmatprep.subr.mxu0 0.0
    %831 = vmatpush1.xpose.msra.mxu0 0.0
    %832 = vmatprep.subr.mxu0 0.0
    %833 = vmatpush1.xpose.msra.mxu0 0.0
    %834 = vmatprep.subr.mxu0 0.0
    %835 = vmatpush1.xpose.msra.mxu0 0.0
    %836 = vmatprep.subr.mxu0 0.0
    %837 = vmatpush1.xpose.msra.mxu0 0.0
    %838 = vmatprep.subr.mxu0 0.0
    %839 = vmatpush1.xpose.msra.mxu0 0.0
    %840 = vmatprep.subr.mxu0 0.0
    %841 = vmatpush1.xpose.msra.mxu0 0.0
    %842 = vmatprep.subr.mxu0 0.0
    %843 = vmatpush1.xpose.msra.mxu0 0.0
    %844 = vmatprep.subr.mxu0 0.0
    %845 = vmatpush1.xpose.msra.mxu0 0.0
    %846 = vmatprep.subr.mxu0 0.0
    %847 = vmatpush1.xpose.msra.mxu0 0.0
    %848 = vmatprep.subr.mxu0 0.0
    %849 = vmatpush1.xpose.msra.mxu0 0.0
    %850 = vmatprep.subr.mxu0 0.0
    %851 = vmatpush1.xpose.msra.mxu0 0.0
    %852 = vmatprep.subr.mxu0 0.0
    %853 = vmatpush1.xpose.msra.mxu0 0.0
    %854 = vmatprep.subr.mxu0 0.0
    %855 = vmatpush1.xpose.msra.mxu0 0.0
    %856 = vmatprep.mubr.f32.mxu0 0.0
    %857 = vmatmul.mubr.f32.gmra.mrb[0].mxu0 %v788
    %v858 = vpop.f32.mrb[0].mxu0
    %v859 = vadd.f32 %v122, %v858
    %v860 = vpop.f32.mrb[0].mxu0
    %861 = vdwg.mxu0
    %v862 = vsel %vm201, %v859, -inf
    %863 = vmax.xlane.f32.xlu0 %v862
    %v864 = vpop.xlane.xlu0 %863
    %v865 = vsub.f32 %v859, %v864
    %v866 = vmul.f32 %v865, 1.442695
    %v867 = vpow.pop %v866
    %v868 = vsel %vm201, %v867, 0.0
    %869 = vadd.xlane.f32.xlu0 %v868
    %v870 = vpop.xlane.xlu0 %869
    %v871 = vrcp.pop %v870
    %v872 = vmul.f32 %v867, %v871
    %873 = vrot.lane.b32.xlu0 %v114, 88
    %v874 = vpop.permute.xlu0 %873
    %v877 = vsel %vm201, %v872, 0
    %879 = vmatprep.subr.mxu0 0.0
    %880 = vmatpush1.msra.mxu0 %v874
    %881 = vmatprep.subr.mxu0 0.0
    %882 = vmatpush1.msra.mxu0 0.0
    %883 = vmatprep.subr.mxu0 0.0
    %884 = vmatpush1.msra.mxu0 0.0
    %885 = vmatprep.subr.mxu0 0.0
    %886 = vmatpush1.msra.mxu0 0.0
    %887 = vmatprep.subr.mxu0 0.0
    %888 = vmatpush1.msra.mxu0 0.0
    %889 = vmatprep.subr.mxu0 0.0
    %890 = vmatpush1.msra.mxu0 0.0
    %891 = vmatprep.subr.mxu0 0.0
    %892 = vmatpush1.msra.mxu0 0.0
    %893 = vmatprep.subr.mxu0 0.0
    %894 = vmatpush1.msra.mxu0 0.0
    %895 = vmatprep.subr.mxu0 0.0
    %896 = vmatpush1.msra.mxu0 0.0
    %897 = vmatprep.subr.mxu0 0.0
    %898 = vmatpush1.msra.mxu0 0.0
    %899 = vmatprep.subr.mxu0 0.0
    %900 = vmatpush1.msra.mxu0 0.0
    %901 = vmatprep.subr.mxu0 0.0
    %902 = vmatpush1.msra.mxu0 0.0
    %903 = vmatprep.subr.mxu0 0.0
    %904 = vmatpush1.msra.mxu0 0.0
    %905 = vmatprep.subr.mxu0 0.0
    %906 = vmatpush1.msra.mxu0 0.0
    %907 = vmatprep.subr.mxu0 0.0
    %908 = vmatpush1.msra.mxu0 0.0
    %909 = vmatprep.subr.mxu0 0.0
    %910 = vmatpush1.msra.mxu0 0.0
    %911 = vmatprep.subr.mxu0 0.0
    %912 = vmatpush1.msra.mxu0 0.0
    %913 = vmatprep.subr.mxu0 0.0
    %914 = vmatpush1.msra.mxu0 0.0
    %915 = vmatprep.subr.mxu0 0.0
    %916 = vmatpush1.msra.mxu0 0.0
    %917 = vmatprep.subr.mxu0 0.0
    %918 = vmatpush1.msra.mxu0 0.0
    %919 = vmatprep.subr.mxu0 0.0
    %920 = vmatpush1.msra.mxu0 0.0
    %921 = vmatprep.subr.mxu0 0.0
    %922 = vmatpush1.msra.mxu0 0.0
    %923 = vmatprep.subr.mxu0 0.0
    %924 = vmatpush1.msra.mxu0 0.0
    %925 = vmatprep.subr.mxu0 0.0
    %926 = vmatpush1.msra.mxu0 0.0
    %927 = vmatprep.subr.mxu0 0.0
    %928 = vmatpush1.msra.mxu0 0.0
    %929 = vmatprep.subr.mxu0 0.0
    %930 = vmatpush1.msra.mxu0 0.0
    %931 = vmatprep.subr.mxu0 0.0
    %932 = vmatpush1.msra.mxu0 0.0
    %933 = vmatprep.subr.mxu0 0.0
    %934 = vmatpush1.msra.mxu0 0.0
    %935 = vmatprep.subr.mxu0 0.0
    %936 = vmatpush1.msra.mxu0 0.0
    %937 = vmatprep.subr.mxu0 0.0
    %938 = vmatpush1.msra.mxu0 0.0
    %939 = vmatprep.subr.mxu0 0.0
    %940 = vmatpush1.msra.mxu0 0.0
    %941 = vmatprep.subr.mxu0 0.0
    %942 = vmatpush1.msra.mxu0 0.0
    %943 = vmatprep.mubr.f32.mxu0 0.0
    %944 = vmatmul.mubr.f32.gmra.mrb[0].mxu0 %v877
    %v945 = vpop.f32.mrb[0].mxu0
    %v946 = vadd.f32 0.0, %v945
    %v947 = vpop.f32.mrb[0].mxu0
    %948 = vdwg.mxu0
    %949 = vrot.lane.b32.xlu0 %v114, 118
    %v950 = vpop.permute.xlu0 %949
    %951 = vrot.lane.b32.xlu0 %v114, 102
    %v952 = vpop.permute.xlu0 %951
    %v953 = vsel %vm126, %v950, 0
    %v955 = vsel %vm126, %v952, 0
    %957 = vmatprep.subr.mxu0 0.0
    %958 = vmatpush1.xpose.msra.mxu0 %v955
    %959 = vmatprep.subr.mxu0 0.0
    %960 = vmatpush1.xpose.msra.mxu0 0.0
    %961 = vmatprep.subr.mxu0 0.0
    %962 = vmatpush1.xpose.msra.mxu0 0.0
    %963 = vmatprep.subr.mxu0 0.0
    %964 = vmatpush1.xpose.msra.mxu0 0.0
    %965 = vmatprep.subr.mxu0 0.0
    %966 = vmatpush1.xpose.msra.mxu0 0.0
    %967 = vmatprep.subr.mxu0 0.0
    %968 = vmatpush1.xpose.msra.mxu0 0.0
    %969 = vmatprep.subr.mxu0 0.0
    %970 = vmatpush1.xpose.msra.mxu0 0.0
    %971 = vmatprep.subr.mxu0 0.0
    %972 = vmatpush1.xpose.msra.mxu0 0.0
    %973 = vmatprep.subr.mxu0 0.0
    %974 = vmatpush1.xpose.msra.mxu0 0.0
    %975 = vmatprep.subr.mxu0 0.0
    %976 = vmatpush1.xpose.msra.mxu0 0.0
    %977 = vmatprep.subr.mxu0 0.0
    %978 = vmatpush1.xpose.msra.mxu0 0.0
    %979 = vmatprep.subr.mxu0 0.0
    %980 = vmatpush1.xpose.msra.mxu0 0.0
    %981 = vmatprep.subr.mxu0 0.0
    %982 = vmatpush1.xpose.msra.mxu0 0.0
    %983 = vmatprep.subr.mxu0 0.0
    %984 = vmatpush1.xpose.msra.mxu0 0.0
    %985 = vmatprep.subr.mxu0 0.0
    %986 = vmatpush1.xpose.msra.mxu0 0.0
    %987 = vmatprep.subr.mxu0 0.0
    %988 = vmatpush1.xpose.msra.mxu0 0.0
    %989 = vmatprep.subr.mxu0 0.0
    %990 = vmatpush1.xpose.msra.mxu0 0.0
    %991 = vmatprep.subr.mxu0 0.0
    %992 = vmatpush1.xpose.msra.mxu0 0.0
    %993 = vmatprep.subr.mxu0 0.0
    %994 = vmatpush1.xpose.msra.mxu0 0.0
    %995 = vmatprep.subr.mxu0 0.0
    %996 = vmatpush1.xpose.msra.mxu0 0.0
    %997 = vmatprep.subr.mxu0 0.0
    %998 = vmatpush1.xpose.msra.mxu0 0.0
    %999 = vmatprep.subr.mxu0 0.0
    %1000 = vmatpush1.xpose.msra.mxu0 0.0
    %1001 = vmatprep.subr.mxu0 0.0
    %1002 = vmatpush1.xpose.msra.mxu0 0.0
    %1003 = vmatprep.subr.mxu0 0.0
    %1004 = vmatpush1.xpose.msra.mxu0 0.0
    %1005 = vmatprep.subr.mxu0 0.0
    %1006 = vmatpush1.xpose.msra.mxu0 0.0
    %1007 = vmatprep.subr.mxu0 0.0
    %1008 = vmatpush1.xpose.msra.mxu0 0.0
    %1009 = vmatprep.subr.mxu0 0.0
    %1010 = vmatpush1.xpose.msra.mxu0 0.0
    %1011 = vmatprep.subr.mxu0 0.0
    %1012 = vmatpush1.xpose.msra.mxu0 0.0
    %1013 = vmatprep.subr.mxu0 0.0
    %1014 = vmatpush1.xpose.msra.mxu0 0.0
    %1015 = vmatprep.subr.mxu0 0.0
    %1016 = vmatpush1.xpose.msra.mxu0 0.0
    %1017 = vmatprep.subr.mxu0 0.0
    %1018 = vmatpush1.xpose.msra.mxu0 0.0
    %1019 = vmatprep.subr.mxu0 0.0
    %1020 = vmatpush1.xpose.msra.mxu0 0.0
    %1021 = vmatprep.mubr.f32.mxu0 0.0
    %1022 = vmatmul.mubr.f32.gmra.mrb[0].mxu0 %v953
    %v1023 = vpop.f32.mrb[0].mxu0
    %v1024 = vadd.f32 %v122, %v1023
    %v1025 = vpop.f32.mrb[0].mxu0
    %1026 = vdwg.mxu0
    %v1027 = vsel %vm201, %v1024, -inf
    %1028 = vmax.xlane.f32.xlu0 %v1027
    %v1029 = vpop.xlane.xlu0 %1028
    %v1030 = vsub.f32 %v1024, %v1029
    %v1031 = vmul.f32 %v1030, 1.442695
    %v1032 = vpow.pop %v1031
    %v1033 = vsel %vm201, %v1032, 0.0
    %1034 = vadd.xlane.f32.xlu0 %v1033
    %v1035 = vpop.xlane.xlu0 %1034
    %v1036 = vrcp.pop %v1035
    %v1037 = vmul.f32 %v1032, %v1036
    %1038 = vrot.lane.b32.xlu0 %v114, 86
    %v1039 = vpop.permute.xlu0 %1038
    %v1042 = vsel %vm201, %v1037, 0
    %1044 = vmatprep.subr.mxu0 0.0
    %1045 = vmatpush1.msra.mxu0 %v1039
    %1046 = vmatprep.subr.mxu0 0.0
    %1047 = vmatpush1.msra.mxu0 0.0
    %1048 = vmatprep.subr.mxu0 0.0
    %1049 = vmatpush1.msra.mxu0 0.0
    %1050 = vmatprep.subr.mxu0 0.0
    %1051 = vmatpush1.msra.mxu0 0.0
    %1052 = vmatprep.subr.mxu0 0.0
    %1053 = vmatpush1.msra.mxu0 0.0
    %1054 = vmatprep.subr.mxu0 0.0
    %1055 = vmatpush1.msra.mxu0 0.0
    %1056 = vmatprep.subr.mxu0 0.0
    %1057 = vmatpush1.msra.mxu0 0.0
    %1058 = vmatprep.subr.mxu0 0.0
    %1059 = vmatpush1.msra.mxu0 0.0
    %1060 = vmatprep.subr.mxu0 0.0
    %1061 = vmatpush1.msra.mxu0 0.0
    %1062 = vmatprep.subr.mxu0 0.0
    %1063 = vmatpush1.msra.mxu0 0.0
    %1064 = vmatprep.subr.mxu0 0.0
    %1065 = vmatpush1.msra.mxu0 0.0
    %1066 = vmatprep.subr.mxu0 0.0
    %1067 = vmatpush1.msra.mxu0 0.0
    %1068 = vmatprep.subr.mxu0 0.0
    %1069 = vmatpush1.msra.mxu0 0.0
    %1070 = vmatprep.subr.mxu0 0.0
    %1071 = vmatpush1.msra.mxu0 0.0
    %1072 = vmatprep.subr.mxu0 0.0
    %1073 = vmatpush1.msra.mxu0 0.0
    %1074 = vmatprep.subr.mxu0 0.0
    %1075 = vmatpush1.msra.mxu0 0.0
    %1076 = vmatprep.subr.mxu0 0.0
    %1077 = vmatpush1.msra.mxu0 0.0
    %1078 = vmatprep.subr.mxu0 0.0
    %1079 = vmatpush1.msra.mxu0 0.0
    %1080 = vmatprep.subr.mxu0 0.0
    %1081 = vmatpush1.msra.mxu0 0.0
    %1082 = vmatprep.subr.mxu0 0.0
    %1083 = vmatpush1.msra.mxu0 0.0
    %1084 = vmatprep.subr.mxu0 0.0
    %1085 = vmatpush1.msra.mxu0 0.0
    %1086 = vmatprep.subr.mxu0 0.0
    %1087 = vmatpush1.msra.mxu0 0.0
    %1088 = vmatprep.subr.mxu0 0.0
    %1089 = vmatpush1.msra.mxu0 0.0
    %1090 = vmatprep.subr.mxu0 0.0
    %1091 = vmatpush1.msra.mxu0 0.0
    %1092 = vmatprep.subr.mxu0 0.0
    %1093 = vmatpush1.msra.mxu0 0.0
    %1094 = vmatprep.subr.mxu0 0.0
    %1095 = vmatpush1.msra.mxu0 0.0
    %1096 = vmatprep.subr.mxu0 0.0
    %1097 = vmatpush1.msra.mxu0 0.0
    %1098 = vmatprep.subr.mxu0 0.0
    %1099 = vmatpush1.msra.mxu0 0.0
    %1100 = vmatprep.subr.mxu0 0.0
    %1101 = vmatpush1.msra.mxu0 0.0
    %1102 = vmatprep.subr.mxu0 0.0
    %1103 = vmatpush1.msra.mxu0 0.0
    %1104 = vmatprep.subr.mxu0 0.0
    %1105 = vmatpush1.msra.mxu0 0.0
    %1106 = vmatprep.subr.mxu0 0.0
    %1107 = vmatpush1.msra.mxu0 0.0
    %1108 = vmatprep.mubr.f32.mxu0 0.0
    %1109 = vmatmul.mubr.f32.gmra.mrb[0].mxu0 %v1042
    %v1110 = vpop.f32.mrb[0].mxu0
    %v1111 = vadd.f32 0.0, %v1110
    %v1112 = vpop.f32.mrb[0].mxu0
    %1113 = vdwg.mxu0
    %1114 = vrot.lane.b32.xlu0 %v114, 116
    %v1115 = vpop.permute.xlu0 %1114
    %1116 = vrot.lane.b32.xlu0 %v114, 100
    %v1117 = vpop.permute.xlu0 %1116
    %v1118 = vsel %vm126, %v1115, 0
    %v1120 = vsel %vm126, %v1117, 0
    %1122 = vmatprep.subr.mxu0 0.0
    %1123 = vmatpush1.xpose.msra.mxu0 %v1120
    %1124 = vmatprep.subr.mxu0 0.0
    %1125 = vmatpush1.xpose.msra.mxu0 0.0
    %1126 = vmatprep.subr.mxu0 0.0
    %1127 = vmatpush1.xpose.msra.mxu0 0.0
    %1128 = vmatprep.subr.mxu0 0.0
    %1129 = vmatpush1.xpose.msra.mxu0 0.0
    %1130 = vmatprep.subr.mxu0 0.0
    %1131 = vmatpush1.xpose.msra.mxu0 0.0
    %1132 = vmatprep.subr.mxu0 0.0
    %1133 = vmatpush1.xpose.msra.mxu0 0.0
    %1134 = vmatprep.subr.mxu0 0.0
    %1135 = vmatpush1.xpose.msra.mxu0 0.0
    %1136 = vmatprep.subr.mxu0 0.0
    %1137 = vmatpush1.xpose.msra.mxu0 0.0
    %1138 = vmatprep.subr.mxu0 0.0
    %1139 = vmatpush1.xpose.msra.mxu0 0.0
    %1140 = vmatprep.subr.mxu0 0.0
    %1141 = vmatpush1.xpose.msra.mxu0 0.0
    %1142 = vmatprep.subr.mxu0 0.0
    %1143 = vmatpush1.xpose.msra.mxu0 0.0
    %1144 = vmatprep.subr.mxu0 0.0
    %1145 = vmatpush1.xpose.msra.mxu0 0.0
    %1146 = vmatprep.subr.mxu0 0.0
    %1147 = vmatpush1.xpose.msra.mxu0 0.0
    %1148 = vmatprep.subr.mxu0 0.0
    %1149 = vmatpush1.xpose.msra.mxu0 0.0
    %1150 = vmatprep.subr.mxu0 0.0
    %1151 = vmatpush1.xpose.msra.mxu0 0.0
    %1152 = vmatprep.subr.mxu0 0.0
    %1153 = vmatpush1.xpose.msra.mxu0 0.0
    %1154 = vmatprep.subr.mxu0 0.0
    %1155 = vmatpush1.xpose.msra.mxu0 0.0
    %1156 = vmatprep.subr.mxu0 0.0
    %1157 = vmatpush1.xpose.msra.mxu0 0.0
    %1158 = vmatprep.subr.mxu0 0.0
    %1159 = vmatpush1.xpose.msra.mxu0 0.0
    %1160 = vmatprep.subr.mxu0 0.0
    %1161 = vmatpush1.xpose.msra.mxu0 0.0
    %1162 = vmatprep.subr.mxu0 0.0
    %1163 = vmatpush1.xpose.msra.mxu0 0.0
    %1164 = vmatprep.subr.mxu0 0.0
    %1165 = vmatpush1.xpose.msra.mxu0 0.0
    %1166 = vmatprep.subr.mxu0 0.0
    %1167 = vmatpush1.xpose.msra.mxu0 0.0
    %1168 = vmatprep.subr.mxu0 0.0
    %1169 = vmatpush1.xpose.msra.mxu0 0.0
    %1170 = vmatprep.subr.mxu0 0.0
    %1171 = vmatpush1.xpose.msra.mxu0 0.0
    %1172 = vmatprep.subr.mxu0 0.0
    %1173 = vmatpush1.xpose.msra.mxu0 0.0
    %1174 = vmatprep.subr.mxu0 0.0
    %1175 = vmatpush1.xpose.msra.mxu0 0.0
    %1176 = vmatprep.subr.mxu0 0.0
    %1177 = vmatpush1.xpose.msra.mxu0 0.0
    %1178 = vmatprep.subr.mxu0 0.0
    %1179 = vmatpush1.xpose.msra.mxu0 0.0
    %1180 = vmatprep.subr.mxu0 0.0
    %1181 = vmatpush1.xpose.msra.mxu0 0.0
    %1182 = vmatprep.subr.mxu0 0.0
    %1183 = vmatpush1.xpose.msra.mxu0 0.0
    %1184 = vmatprep.subr.mxu0 0.0
    %1185 = vmatpush1.xpose.msra.mxu0 0.0
    %1186 = vmatprep.mubr.f32.mxu0 0.0
    %1187 = vmatmul.mubr.f32.gmra.mrb[0].mxu0 %v1118
    %v1188 = vpop.f32.mrb[0].mxu0
    %v1189 = vadd.f32 %v122, %v1188
    %v1190 = vpop.f32.mrb[0].mxu0
    %1191 = vdwg.mxu0
    %v1192 = vsel %vm201, %v1189, -inf
    %1193 = vmax.xlane.f32.xlu0 %v1192
    %v1194 = vpop.xlane.xlu0 %1193
    %v1195 = vsub.f32 %v1189, %v1194
    %v1196 = vmul.f32 %v1195, 1.442695
    %v1197 = vpow.pop %v1196
    %v1198 = vsel %vm201, %v1197, 0.0
    %1199 = vadd.xlane.f32.xlu0 %v1198
    %v1200 = vpop.xlane.xlu0 %1199
    %v1201 = vrcp.pop %v1200
    %v1202 = vmul.f32 %v1197, %v1201
    %1203 = vrot.lane.b32.xlu0 %v114, 84
    %v1204 = vpop.permute.xlu0 %1203
    %v1207 = vsel %vm201, %v1202, 0
    %1209 = vmatprep.subr.mxu0 0.0
    %1210 = vmatpush1.msra.mxu0 %v1204
    %1211 = vmatprep.subr.mxu0 0.0
    %1212 = vmatpush1.msra.mxu0 0.0
    %1213 = vmatprep.subr.mxu0 0.0
    %1214 = vmatpush1.msra.mxu0 0.0
    %1215 = vmatprep.subr.mxu0 0.0
    %1216 = vmatpush1.msra.mxu0 0.0
    %1217 = vmatprep.subr.mxu0 0.0
    %1218 = vmatpush1.msra.mxu0 0.0
    %1219 = vmatprep.subr.mxu0 0.0
    %1220 = vmatpush1.msra.mxu0 0.0
    %1221 = vmatprep.subr.mxu0 0.0
    %1222 = vmatpush1.msra.mxu0 0.0
    %1223 = vmatprep.subr.mxu0 0.0
    %1224 = vmatpush1.msra.mxu0 0.0
    %1225 = vmatprep.subr.mxu0 0.0
    %1226 = vmatpush1.msra.mxu0 0.0
    %1227 = vmatprep.subr.mxu0 0.0
    %1228 = vmatpush1.msra.mxu0 0.0
    %1229 = vmatprep.subr.mxu0 0.0
    %1230 = vmatpush1.msra.mxu0 0.0
    %1231 = vmatprep.subr.mxu0 0.0
    %1232 = vmatpush1.msra.mxu0 0.0
    %1233 = vmatprep.subr.mxu0 0.0
    %1234 = vmatpush1.msra.mxu0 0.0
    %1235 = vmatprep.subr.mxu0 0.0
    %1236 = vmatpush1.msra.mxu0 0.0
    %1237 = vmatprep.subr.mxu0 0.0
    %1238 = vmatpush1.msra.mxu0 0.0
    %1239 = vmatprep.subr.mxu0 0.0
    %1240 = vmatpush1.msra.mxu0 0.0
    %1241 = vmatprep.subr.mxu0 0.0
    %1242 = vmatpush1.msra.mxu0 0.0
    %1243 = vmatprep.subr.mxu0 0.0
    %1244 = vmatpush1.msra.mxu0 0.0
    %1245 = vmatprep.subr.mxu0 0.0
    %1246 = vmatpush1.msra.mxu0 0.0
    %1247 = vmatprep.subr.mxu0 0.0
    %1248 = vmatpush1.msra.mxu0 0.0
    %1249 = vmatprep.subr.mxu0 0.0
    %1250 = vmatpush1.msra.mxu0 0.0
    %1251 = vmatprep.subr.mxu0 0.0
    %1252 = vmatpush1.msra.mxu0 0.0
    %1253 = vmatprep.subr.mxu0 0.0
    %1254 = vmatpush1.msra.mxu0 0.0
    %1255 = vmatprep.subr.mxu0 0.0
    %1256 = vmatpush1.msra.mxu0 0.0
    %1257 = vmatprep.subr.mxu0 0.0
    %1258 = vmatpush1.msra.mxu0 0.0
    %1259 = vmatprep.subr.mxu0 0.0
    %1260 = vmatpush1.msra.mxu0 0.0
    %1261 = vmatprep.subr.mxu0 0.0
    %1262 = vmatpush1.msra.mxu0 0.0
    %1263 = vmatprep.subr.mxu0 0.0
    %1264 = vmatpush1.msra.mxu0 0.0
    %1265 = vmatprep.subr.mxu0 0.0
    %1266 = vmatpush1.msra.mxu0 0.0
    %1267 = vmatprep.subr.mxu0 0.0
    %1268 = vmatpush1.msra.mxu0 0.0
    %1269 = vmatprep.subr.mxu0 0.0
    %1270 = vmatpush1.msra.mxu0 0.0
    %1271 = vmatprep.subr.mxu0 0.0
    %1272 = vmatpush1.msra.mxu0 0.0
    %1273 = vmatprep.mubr.f32.mxu0 0.0
    %1274 = vmatmul.mubr.f32.gmra.mrb[0].mxu0 %v1207
    %v1275 = vpop.f32.mrb[0].mxu0
    %v1276 = vadd.f32 0.0, %v1275
    %v1277 = vpop.f32.mrb[0].mxu0
    %1278 = vdwg.mxu0
    %1279 = vrot.lane.b32.xlu0 %v114, 114
    %v1280 = vpop.permute.xlu0 %1279
    %1281 = vrot.lane.b32.xlu0 %v114, 98
    %v1282 = vpop.permute.xlu0 %1281
    %v1283 = vsel %vm126, %v1280, 0
    %v1285 = vsel %vm126, %v1282, 0
    %1287 = vmatprep.subr.mxu0 0.0
    %1288 = vmatpush1.xpose.msra.mxu0 %v1285
    %1289 = vmatprep.subr.mxu0 0.0
    %1290 = vmatpush1.xpose.msra.mxu0 0.0
    %1291 = vmatprep.subr.mxu0 0.0
    %1292 = vmatpush1.xpose.msra.mxu0 0.0
    %1293 = vmatprep.subr.mxu0 0.0
    %1294 = vmatpush1.xpose.msra.mxu0 0.0
    %1295 = vmatprep.subr.mxu0 0.0
    %1296 = vmatpush1.xpose.msra.mxu0 0.0
    %1297 = vmatprep.subr.mxu0 0.0
    %1298 = vmatpush1.xpose.msra.mxu0 0.0
    %1299 = vmatprep.subr.mxu0 0.0
    %1300 = vmatpush1.xpose.msra.mxu0 0.0
    %1301 = vmatprep.subr.mxu0 0.0
    %1302 = vmatpush1.xpose.msra.mxu0 0.0
    %1303 = vmatprep.subr.mxu0 0.0
    %1304 = vmatpush1.xpose.msra.mxu0 0.0
    %1305 = vmatprep.subr.mxu0 0.0
    %1306 = vmatpush1.xpose.msra.mxu0 0.0
    %1307 = vmatprep.subr.mxu0 0.0
    %1308 = vmatpush1.xpose.msra.mxu0 0.0
    %1309 = vmatprep.subr.mxu0 0.0
    %1310 = vmatpush1.xpose.msra.mxu0 0.0
    %1311 = vmatprep.subr.mxu0 0.0
    %1312 = vmatpush1.xpose.msra.mxu0 0.0
    %1313 = vmatprep.subr.mxu0 0.0
    %1314 = vmatpush1.xpose.msra.mxu0 0.0
    %1315 = vmatprep.subr.mxu0 0.0
    %1316 = vmatpush1.xpose.msra.mxu0 0.0
    %1317 = vmatprep.subr.mxu0 0.0
    %1318 = vmatpush1.xpose.msra.mxu0 0.0
    %1319 = vmatprep.subr.mxu0 0.0
    %1320 = vmatpush1.xpose.msra.mxu0 0.0
    %1321 = vmatprep.subr.mxu0 0.0
    %1322 = vmatpush1.xpose.msra.mxu0 0.0
    %1323 = vmatprep.subr.mxu0 0.0
    %1324 = vmatpush1.xpose.msra.mxu0 0.0
    %1325 = vmatprep.subr.mxu0 0.0
    %1326 = vmatpush1.xpose.msra.mxu0 0.0
    %1327 = vmatprep.subr.mxu0 0.0
    %1328 = vmatpush1.xpose.msra.mxu0 0.0
    %1329 = vmatprep.subr.mxu0 0.0
    %1330 = vmatpush1.xpose.msra.mxu0 0.0
    %1331 = vmatprep.subr.mxu0 0.0
    %1332 = vmatpush1.xpose.msra.mxu0 0.0
    %1333 = vmatprep.subr.mxu0 0.0
    %1334 = vmatpush1.xpose.msra.mxu0 0.0
    %1335 = vmatprep.subr.mxu0 0.0
    %1336 = vmatpush1.xpose.msra.mxu0 0.0
    %1337 = vmatprep.subr.mxu0 0.0
    %1338 = vmatpush1.xpose.msra.mxu0 0.0
    %1339 = vmatprep.subr.mxu0 0.0
    %1340 = vmatpush1.xpose.msra.mxu0 0.0
    %1341 = vmatprep.subr.mxu0 0.0
    %1342 = vmatpush1.xpose.msra.mxu0 0.0
    %1343 = vmatprep.subr.mxu0 0.0
    %1344 = vmatpush1.xpose.msra.mxu0 0.0
    %1345 = vmatprep.subr.mxu0 0.0
    %1346 = vmatpush1.xpose.msra.mxu0 0.0
    %1347 = vmatprep.subr.mxu0 0.0
    %1348 = vmatpush1.xpose.msra.mxu0 0.0
    %1349 = vmatprep.subr.mxu0 0.0
    %1350 = vmatpush1.xpose.msra.mxu0 0.0
    %1351 = vmatprep.mubr.f32.mxu0 0.0
    %1352 = vmatmul.mubr.f32.gmra.mrb[0].mxu0 %v1283
    %v1353 = vpop.f32.mrb[0].mxu0
    %v1354 = vadd.f32 %v122, %v1353
    %v1355 = vpop.f32.mrb[0].mxu0
    %1356 = vdwg.mxu0
    %v1357 = vsel %vm201, %v1354, -inf
    %1358 = vmax.xlane.f32.xlu0 %v1357
    %v1359 = vpop.xlane.xlu0 %1358
    %v1360 = vsub.f32 %v1354, %v1359
    %v1361 = vmul.f32 %v1360, 1.442695
    %v1362 = vpow.pop %v1361
    %v1363 = vsel %vm201, %v1362, 0.0
    %1364 = vadd.xlane.f32.xlu0 %v1363
    %v1365 = vpop.xlane.xlu0 %1364
    %v1366 = vrcp.pop %v1365
    %v1367 = vmul.f32 %v1362, %v1366
    %1368 = vrot.lane.b32.xlu0 %v114, 82
    %v1369 = vpop.permute.xlu0 %1368
    %v1372 = vsel %vm201, %v1367, 0
    %1374 = vmatprep.subr.mxu0 0.0
    %1375 = vmatpush1.msra.mxu0 %v1369
    %1376 = vmatprep.subr.mxu0 0.0
    %1377 = vmatpush1.msra.mxu0 0.0
    %1378 = vmatprep.subr.mxu0 0.0
    %1379 = vmatpush1.msra.mxu0 0.0
    %1380 = vmatprep.subr.mxu0 0.0
    %1381 = vmatpush1.msra.mxu0 0.0
    %1382 = vmatprep.subr.mxu0 0.0
    %1383 = vmatpush1.msra.mxu0 0.0
    %1384 = vmatprep.subr.mxu0 0.0
    %1385 = vmatpush1.msra.mxu0 0.0
    %1386 = vmatprep.subr.mxu0 0.0
    %1387 = vmatpush1.msra.mxu0 0.0
    %1388 = vmatprep.subr.mxu0 0.0
    %1389 = vmatpush1.msra.mxu0 0.0
    %1390 = vmatprep.subr.mxu0 0.0
    %1391 = vmatpush1.msra.mxu0 0.0
    %1392 = vmatprep.subr.mxu0 0.0
    %1393 = vmatpush1.msra.mxu0 0.0
    %1394 = vmatprep.subr.mxu0 0.0
    %1395 = vmatpush1.msra.mxu0 0.0
    %1396 = vmatprep.subr.mxu0 0.0
    %1397 = vmatpush1.msra.mxu0 0.0
    %1398 = vmatprep.subr.mxu0 0.0
    %1399 = vmatpush1.msra.mxu0 0.0
    %1400 = vmatprep.subr.mxu0 0.0
    %1401 = vmatpush1.msra.mxu0 0.0
    %1402 = vmatprep.subr.mxu0 0.0
    %1403 = vmatpush1.msra.mxu0 0.0
    %1404 = vmatprep.subr.mxu0 0.0
    %1405 = vmatpush1.msra.mxu0 0.0
    %1406 = vmatprep.subr.mxu0 0.0
    %1407 = vmatpush1.msra.mxu0 0.0
    %1408 = vmatprep.subr.mxu0 0.0
    %1409 = vmatpush1.msra.mxu0 0.0
    %1410 = vmatprep.subr.mxu0 0.0
    %1411 = vmatpush1.msra.mxu0 0.0
    %1412 = vmatprep.subr.mxu0 0.0
    %1413 = vmatpush1.msra.mxu0 0.0
    %1414 = vmatprep.subr.mxu0 0.0
    %1415 = vmatpush1.msra.mxu0 0.0
    %1416 = vmatprep.subr.mxu0 0.0
    %1417 = vmatpush1.msra.mxu0 0.0
    %1418 = vmatprep.subr.mxu0 0.0
    %1419 = vmatpush1.msra.mxu0 0.0
    %1420 = vmatprep.subr.mxu0 0.0
    %1421 = vmatpush1.msra.mxu0 0.0
    %1422 = vmatprep.subr.mxu0 0.0
    %1423 = vmatpush1.msra.mxu0 0.0
    %1424 = vmatprep.subr.mxu0 0.0
    %1425 = vmatpush1.msra.mxu0 0.0
    %1426 = vmatprep.subr.mxu0 0.0
    %1427 = vmatpush1.msra.mxu0 0.0
    %1428 = vmatprep.subr.mxu0 0.0
    %1429 = vmatpush1.msra.mxu0 0.0
    %1430 = vmatprep.subr.mxu0 0.0
    %1431 = vmatpush1.msra.mxu0 0.0
    %1432 = vmatprep.subr.mxu0 0.0
    %1433 = vmatpush1.msra.mxu0 0.0
    %1434 = vmatprep.subr.mxu0 0.0
    %1435 = vmatpush1.msra.mxu0 0.0
    %1436 = vmatprep.subr.mxu0 0.0
    %1437 = vmatpush1.msra.mxu0 0.0
    %1438 = vmatprep.mubr.f32.mxu0 0.0
    %1439 = vmatmul.mubr.f32.gmra.mrb[0].mxu0 %v1372
    %v1440 = vpop.f32.mrb[0].mxu0
    %v1441 = vadd.f32 0.0, %v1440
    %v1442 = vpop.f32.mrb[0].mxu0
    %1443 = vdwg.mxu0
    %1445 = vrot.lane.b32.xlu0 %v451, 2
    %v1446 = vpop.permute.xlu0 %1445
    %1449 = vrot.lane.b32.xlu0 %v616, 4
    %v1450 = vpop.permute.xlu0 %1449
    %1453 = vrot.lane.b32.xlu0 %v781, 6
    %v1454 = vpop.permute.xlu0 %1453
    %1457 = vrot.lane.b32.xlu0 %v946, 8
    %v1458 = vpop.permute.xlu0 %1457
    %1461 = vrot.lane.b32.xlu0 %v1111, 10
    %v1462 = vpop.permute.xlu0 %1461
    %1465 = vrot.lane.b32.xlu0 %v1276, 12
    %v1466 = vpop.permute.xlu0 %1465
    %1469 = vrot.lane.b32.xlu0 %v1441, 14
    %v1470 = vpop.permute.xlu0 %1469
    %v1472 = vsel %vm126, %v286, %v1446
    %vm1473 = vcmask 31744
    %v1474 = vsel %vm1473, %v1472, %v1450
    %vm1475 = vcmask 48128
    %v1476 = vsel %vm1475, %v1474, %v1454
    %v1477 = vsel %vm201, %v1476, %v1458
    %vm1478 = vcmask 80896
    %v1479 = vsel %vm1478, %v1477, %v1462
    %vm1480 = vcmask 97280
    %v1481 = vsel %vm1480, %v1479, %v1466
    %vm1482 = vcmask 113664
    %v1483 = vsel %vm1482, %v1481, %v1470
    %v1484 = vpack.c.bf16 %v1483, %v1483
    %v1485 = vld [vmem:[%s3] sm:$0xf]
    %v1486 = vld [vmem:[%s3 + $0x4] sm:$0xf]
    %v1487 = vld [vmem:[%s4] sm:$0x1]
    %v1489 = vlaneseq
    %v1490 = vshrl.u32 %v1489, 7
    %v1491 = vsub.s32 0, %v1490
    %v1492 = vrot.slane %v1487, %v1491
    %v1496 = vunpack.c.l.b16 %v1485
    %v1497 = vunpack.c.l.b16 %v1486
    %v1498 = vpack.c.b16 %v1497, %v1496
    %v1501 = vsel %vm75, %v1484, 0
    %1503 = vmatprep.subr.bf16.mxu0 0
    %1504 = vmatpush1.bf16.msra.mxu0 %v1498
    %1505 = vmatprep.subr.bf16.mxu0 0
    %1506 = vmatpush1.bf16.msra.mxu0 0
    %1507 = vmatprep.subr.bf16.mxu0 0
    %1508 = vmatpush1.bf16.msra.mxu0 0
    %1509 = vmatprep.subr.bf16.mxu0 0
    %1510 = vmatpush1.bf16.msra.mxu0 0
    %1511 = vmatprep.subr.bf16.mxu0 0
    %1512 = vmatpush1.bf16.msra.mxu0 0
    %1513 = vmatprep.subr.bf16.mxu0 0
    %1514 = vmatpush1.bf16.msra.mxu0 0
    %1515 = vmatprep.subr.bf16.mxu0 0
    %1516 = vmatpush1.bf16.msra.mxu0 0
    %1517 = vmatprep.subr.bf16.mxu0 0
    %1518 = vmatpush1.bf16.msra.mxu0 0
    %1519 = vmatprep.subr.bf16.mxu0 0
    %1520 = vmatpush1.bf16.msra.mxu0 0
    %1521 = vmatprep.subr.bf16.mxu0 0
    %1522 = vmatpush1.bf16.msra.mxu0 0
    %1523 = vmatprep.subr.bf16.mxu0 0
    %1524 = vmatpush1.bf16.msra.mxu0 0
    %1525 = vmatprep.subr.bf16.mxu0 0
    %1526 = vmatpush1.bf16.msra.mxu0 0
    %1527 = vmatprep.subr.bf16.mxu0 0
    %1528 = vmatpush1.bf16.msra.mxu0 0
    %1529 = vmatprep.subr.bf16.mxu0 0
    %1530 = vmatpush1.bf16.msra.mxu0 0
    %1531 = vmatprep.subr.bf16.mxu0 0
    %1532 = vmatpush1.bf16.msra.mxu0 0
    %1533 = vmatprep.subr.bf16.mxu0 0
    %1534 = vmatpush1.bf16.msra.mxu0 0
    %1535 = vmatprep.mubr.bf16.mxu0 0
    %1536 = vmatmul.mubr.bf16.gmra.mrb[0].mxu0 %v1501
    %v1537 = vpop.f32.mrb[0].mxu0
    %v1538 = vadd.f32 %v1492, %v1537
    %v1539 = vpop.f32.mrb[0].mxu0
    %v1540 = vpop.f32.mrb[0].mxu0
    %v1541 = vpop.f32.mrb[0].mxu0
    %1542 = vdwg.mxu0
    %v1543 = vadd.f32 %v57, %v1538
    %v1544 = vld [vmem:[%s5] sm:$0x1]
    %v1545 = vld [vmem:[%s6] sm:$0x1]
    %v1546 = vsel %vm75, %v1543, 0.0
    %1547 = vadd.xlane.f32.xlu0 %v1546
    %v1548 = vpop.xlane.xlu0 %1547
    %v1549 = vrcp.pop 16.0
    %v1550 = vmul.f32 %v1548, %v1549
    %v1551 = vsub.f32 %v1543, %v1550
    %v1552 = vmul.f32 %v1551, %v1551
    %v1553 = vsel %vm75, %v1552, 0.0
    %1554 = vadd.xlane.f32.xlu0 %v1553
    %v1555 = vpop.xlane.xlu0 %1554
    %v1556 = vmul.f32 %v1555, %v1549
    %v1557 = vadd.f32 %v1556, 1e-05
    %v1558 = vrsqrt.pop %v1557
    %v1559 = vmul.f32 %v1551, %v1558
    %v1561 = vlaneseq
    %v1562 = vshrl.u32 %v1561, 7
    %v1563 = vsub.s32 0, %v1562
    %v1564 = vrot.slane %v1544, %v1563
    %v1566 = vmul.f32 %v1559, %v1564
    %v1568 = vlaneseq
    %v1569 = vshrl.u32 %v1568, 7
    %v1570 = vsub.s32 0, %v1569
    %v1571 = vrot.slane %v1545, %v1570
    %v1573 = vadd.f32 %v1566, %v1571
    %v1574 = vpack.c.bf16 %v1573, %v1573
    %v1575 = vld [vmem:[%s9] sm:$0xff]
    %v1576 = vld [vmem:[%s9 + $0x8] sm:$0xff]
    %v1577 = vld [vmem:[%s9 + $0x10] sm:$0xff]
    %v1578 = vld [vmem:[%s9 + $0x18] sm:$0xff]
    %v1579 = vld [vmem:[%s9 + $0x20] sm:$0xff]
    %v1580 = vld [vmem:[%s9 + $0x28] sm:$0xff]
    %v1581 = vld [vmem:[%s9 + $0x30] sm:$0xff]
    %v1582 = vld [vmem:[%s9 + $0x38] sm:$0xff]
    %v1583 = vld [vmem:[%s9 + $0x40] sm:$0xff]
    %v1584 = vld [vmem:[%s9 + $0x48] sm:$0xff]
    %v1585 = vld [vmem:[%s9 + $0x50] sm:$0xff]
    %v1586 = vld [vmem:[%s9 + $0x58] sm:$0xff]
    %v1587 = vld [vmem:[%s9 + $0x60] sm:$0xff]
    %v1588 = vld [vmem:[%s9 + $0x68] sm:$0xff]
    %v1589 = vld [vmem:[%s9 + $0x70] sm:$0xff]
    %v1590 = vld [vmem:[%s9 + $0x78] sm:$0xff]
    %v1591 = vld [vmem:[%s10] sm:$0xff]
    %v1592 = vld [vmem:[%s10 + $0x8] sm:$0xff]
    %v1595 = vlaneseq
    %v1596 = vshrl.u32 %v1595, 7
    %v1597 = vsub.s32 0, %v1596
    %v1598 = vrot.slane %v1591, %v1597
    %v1599 = vlaneseq
    %v1600 = vshrl.u32 %v1599, 7
    %v1601 = vsub.s32 1, %v1600
    %v1602 = vrot.slane %v1591, %v1601
    %v1603 = vlaneseq
    %v1604 = vshrl.u32 %v1603, 7
    %v1605 = vsub.s32 2, %v1604
    %v1606 = vrot.slane %v1591, %v1605
    %v1607 = vlaneseq
    %v1608 = vshrl.u32 %v1607, 7
    %v1609 = vsub.s32 3, %v1608
    %v1610 = vrot.slane %v1591, %v1609
    %v1611 = vlaneseq
    %v1612 = vshrl.u32 %v1611, 7
    %v1613 = vsub.s32 4, %v1612
    %v1614 = vrot.slane %v1591, %v1613
    %v1615 = vlaneseq
    %v1616 = vshrl.u32 %v1615, 7
    %v1617 = vsub.s32 5, %v1616
    %v1618 = vrot.slane %v1591, %v1617
    %v1619 = vlaneseq
    %v1620 = vshrl.u32 %v1619, 7
    %v1621 = vsub.s32 6, %v1620
    %v1622 = vrot.slane %v1591, %v1621
    %v1623 = vlaneseq
    %v1624 = vshrl.u32 %v1623, 7
    %v1625 = vsub.s32 7, %v1624
    %v1626 = vrot.slane %v1591, %v1625
    %v1627 = vlaneseq
    %v1628 = vshrl.u32 %v1627, 7
    %v1629 = vsub.s32 0, %v1628
    %v1630 = vrot.slane %v1592, %v1629
    %v1631 = vlaneseq
    %v1632 = vshrl.u32 %v1631, 7
    %v1633 = vsub.s32 1, %v1632
    %v1634 = vrot.slane %v1592, %v1633
    %v1635 = vlaneseq
    %v1636 = vshrl.u32 %v1635, 7
    %v1637 = vsub.s32 2, %v1636
    %v1638 = vrot.slane %v1592, %v1637
    %v1639 = vlaneseq
    %v1640 = vshrl.u32 %v1639, 7
    %v1641 = vsub.s32 3, %v1640
    %v1642 = vrot.slane %v1592, %v1641
    %v1643 = vlaneseq
    %v1644 = vshrl.u32 %v1643, 7
    %v1645 = vsub.s32 4, %v1644
    %v1646 = vrot.slane %v1592, %v1645
    %v1647 = vlaneseq
    %v1648 = vshrl.u32 %v1647, 7
    %v1649 = vsub.s32 5, %v1648
    %v1650 = vrot.slane %v1592, %v1649
    %v1651 = vlaneseq
    %v1652 = vshrl.u32 %v1651, 7
    %v1653 = vsub.s32 6, %v1652
    %v1654 = vrot.slane %v1592, %v1653
    %v1655 = vlaneseq
    %v1656 = vshrl.u32 %v1655, 7
    %v1657 = vsub.s32 7, %v1656
    %v1658 = vrot.slane %v1592, %v1657
    %v1691 = vunpack.c.l.b16 %v1575
    %v1692 = vunpack.c.h.b16 %v1575
    %v1693 = vunpack.c.l.b16 %v1576
    %v1694 = vunpack.c.h.b16 %v1576
    %v1695 = vunpack.c.l.b16 %v1577
    %v1696 = vunpack.c.h.b16 %v1577
    %v1697 = vunpack.c.l.b16 %v1578
    %v1698 = vunpack.c.h.b16 %v1578
    %v1699 = vunpack.c.l.b16 %v1579
    %v1700 = vunpack.c.h.b16 %v1579
    %v1701 = vunpack.c.l.b16 %v1580
    %v1702 = vunpack.c.h.b16 %v1580
    %v1703 = vunpack.c.l.b16 %v1581
    %v1704 = vunpack.c.h.b16 %v1581
    %v1705 = vunpack.c.l.b16 %v1582
    %v1706 = vunpack.c.h.b16 %v1582
    %v1707 = vunpack.c.l.b16 %v1583
    %v1708 = vunpack.c.h.b16 %v1583
    %v1709 = vunpack.c.l.b16 %v1584
    %v1710 = vunpack.c.h.b16 %v1584
    %v1711 = vunpack.c.l.b16 %v1585
    %v1712 = vunpack.c.h.b16 %v1585
    %v1713 = vunpack.c.l.b16 %v1586
    %v1714 = vunpack.c.h.b16 %v1586
    %v1715 = vunpack.c.l.b16 %v1587
    %v1716 = vunpack.c.h.b16 %v1587
    %v1717 = vunpack.c.l.b16 %v1588
    %v1718 = vunpack.c.h.b16 %v1588
    %v1719 = vunpack.c.l.b16 %v1589
    %v1720 = vunpack.c.h.b16 %v1589
    %v1721 = vunpack.c.l.b16 %v1590
    %v1722 = vunpack.c.h.b16 %v1590
    %v1723 = vpack.c.b16 %v1707, %v1691
    %v1724 = vpack.c.b16 %v1708, %v1692
    %v1725 = vpack.c.b16 %v1709, %v1693
    %v1726 = vpack.c.b16 %v1710, %v1694
    %v1727 = vpack.c.b16 %v1711, %v1695
    %v1728 = vpack.c.b16 %v1712, %v1696
    %v1729 = vpack.c.b16 %v1713, %v1697
    %v1730 = vpack.c.b16 %v1714, %v1698
    %v1731 = vpack.c.b16 %v1715, %v1699
    %v1732 = vpack.c.b16 %v1716, %v1700
    %v1733 = vpack.c.b16 %v1717, %v1701
    %v1734 = vpack.c.b16 %v1718, %v1702
    %v1735 = vpack.c.b16 %v1719, %v1703
    %v1736 = vpack.c.b16 %v1720, %v1704
    %v1737 = vpack.c.b16 %v1721, %v1705
    %v1738 = vpack.c.b16 %v1722, %v1706
    %v1756 = vsel %vm75, %v1574, 0
    %1758 = vmatprep.subr.bf16.mxu0 %v1724
    %1759 = vmatpush1.bf16.msra.mxu0 %v1723
    %1760 = vmatprep.subr.bf16.mxu0 0
    %1761 = vmatpush1.bf16.msra.mxu0 0
    %1762 = vmatprep.subr.bf16.mxu0 0
    %1763 = vmatpush1.bf16.msra.mxu0 0
    %1764 = vmatprep.subr.bf16.mxu0 0
    %1765 = vmatpush1.bf16.msra.mxu0 0
    %1766 = vmatprep.subr.bf16.mxu0 0
    %1767 = vmatpush1.bf16.msra.mxu0 0
    %1768 = vmatprep.subr.bf16.mxu0 0
    %1769 = vmatpush1.bf16.msra.mxu0 0
    %1770 = vmatprep.subr.bf16.mxu0 0
    %1771 = vmatpush1.bf16.msra.mxu0 0
    %1772 = vmatprep.subr.bf16.mxu0 0
    %1773 = vmatpush1.bf16.msra.mxu0 0
    %1774 = vmatprep.subr.bf16.mxu0 0
    %1775 = vmatpush1.bf16.msra.mxu0 0
    %1776 = vmatprep.subr.bf16.mxu0 0
    %1777 = vmatpush1.bf16.msra.mxu0 0
    %1778 = vmatprep.subr.bf16.mxu0 0
    %1779 = vmatpush1.bf16.msra.mxu0 0
    %1780 = vmatprep.subr.bf16.mxu0 0
    %1781 = vmatpush1.bf16.msra.mxu0 0
    %1782 = vmatprep.subr.bf16.mxu0 0
    %1783 = vmatpush1.bf16.msra.mxu0 0
    %1784 = vmatprep.subr.bf16.mxu0 0
    %1785 = vmatpush1.bf16.msra.mxu0 0
    %1786 = vmatprep.subr.bf16.mxu0 0
    %1787 = vmatpush1.bf16.msra.mxu0 0
    %1788 = vmatprep.subr.bf16.mxu0 0
    %1789 = vmatpush1.bf16.msra.mxu0 0
    %1790 = vmatprep.mubr.bf16.mxu0 0
    %1791 = vmatmul.mubr.bf16.gmra.mrb[0].mxu0 %v1756
    %v1792 = vpop.f32.mrb[0].mxu0
    %v1793 = vadd.f32 %v1598, %v1792
    %v1794 = vpop.f32.mrb[0].mxu0
    %v1795 = vadd.f32 %v1602, %v1794
    %v1796 = vpop.f32.mrb[0].mxu0
    %v1797 = vpop.f32.mrb[0].mxu0
    %1798 = vdwg.mxu0
    %1799 = vmatprep.subr.bf16.mxu0 %v1726
    %1800 = vmatpush1.bf16.msra.mxu0 %v1725
    %1801 = vmatprep.subr.bf16.mxu0 0
    %1802 = vmatpush1.bf16.msra.mxu0 0
    %1803 = vmatprep.subr.bf16.mxu0 0
    %1804 = vmatpush1.bf16.msra.mxu0 0
    %1805 = vmatprep.subr.bf16.mxu0 0
    %1806 = vmatpush1.bf16.msra.mxu0 0
    %1807 = vmatprep.subr.bf16.mxu0 0
    %1808 = vmatpush1.bf16.msra.mxu0 0
    %1809 = vmatprep.subr.bf16.mxu0 0
    %1810 = vmatpush1.bf16.msra.mxu0 0
    %1811 = vmatprep.subr.bf16.mxu0 0
    %1812 = vmatpush1.bf16.msra.mxu0 0
    %1813 = vmatprep.subr.bf16.mxu0 0
    %1814 = vmatpush1.bf16.msra.mxu0 0
    %1815 = vmatprep.subr.bf16.mxu0 0
    %1816 = vmatpush1.bf16.msra.mxu0 0
    %1817 = vmatprep.subr.bf16.mxu0 0
    %1818 = vmatpush1.bf16.msra.mxu0 0
    %1819 = vmatprep.subr.bf16.mxu0 0
    %1820 = vmatpush1.bf16.msra.mxu0 0
    %1821 = vmatprep.subr.bf16.mxu0 0
    %1822 = vmatpush1.bf16.msra.mxu0 0
    %1823 = vmatprep.subr.bf16.mxu0 0
    %1824 = vmatpush1.bf16.msra.mxu0 0
    %1825 = vmatprep.subr.bf16.mxu0 0
    %1826 = vmatpush1.bf16.msra.mxu0 0
    %1827 = vmatprep.subr.bf16.mxu0 0
    %1828 = vmatpush1.bf16.msra.mxu0 0
    %1829 = vmatprep.subr.bf16.mxu0 0
    %1830 = vmatpush1.bf16.msra.mxu0 0
    %1831 = vmatprep.mubr.bf16.mxu0 0
    %1832 = vmatmul.mubr.bf16.gmra.mrb[0].mxu0 %v1756
    %v1833 = vpop.f32.mrb[0].mxu0
    %v1834 = vadd.f32 %v1606, %v1833
    %v1835 = vpop.f32.mrb[0].mxu0
    %v1836 = vadd.f32 %v1610, %v1835
    %v1837 = vpop.f32.mrb[0].mxu0
    %v1838 = vpop.f32.mrb[0].mxu0
    %1839 = vdwg.mxu0
    %1840 = vmatprep.subr.bf16.mxu0 %v1728
    %1841 = vmatpush1.bf16.msra.mxu0 %v1727
    %1842 = vmatprep.subr.bf16.mxu0 0
    %1843 = vmatpush1.bf16.msra.mxu0 0
    %1844 = vmatprep.subr.bf16.mxu0 0
    %1845 = vmatpush1.bf16.msra.mxu0 0
    %1846 = vmatprep.subr.bf16.mxu0 0
    %1847 = vmatpush1.bf16.msra.mxu0 0
    %1848 = vmatprep.subr.bf16.mxu0 0
    %1849 = vmatpush1.bf16.msra.mxu0 0
    %1850 = vmatprep.subr.bf16.mxu0 0
    %1851 = vmatpush1.bf16.msra.mxu0 0
    %1852 = vmatprep.subr.bf16.mxu0 0
    %1853 = vmatpush1.bf16.msra.mxu0 0
    %1854 = vmatprep.subr.bf16.mxu0 0
    %1855 = vmatpush1.bf16.msra.mxu0 0
    %1856 = vmatprep.subr.bf16.mxu0 0
    %1857 = vmatpush1.bf16.msra.mxu0 0
    %1858 = vmatprep.subr.bf16.mxu0 0
    %1859 = vmatpush1.bf16.msra.mxu0 0
    %1860 = vmatprep.subr.bf16.mxu0 0
    %1861 = vmatpush1.bf16.msra.mxu0 0
    %1862 = vmatprep.subr.bf16.mxu0 0
    %1863 = vmatpush1.bf16.msra.mxu0 0
    %1864 = vmatprep.subr.bf16.mxu0 0
    %1865 = vmatpush1.bf16.msra.mxu0 0
    %1866 = vmatprep.subr.bf16.mxu0 0
    %1867 = vmatpush1.bf16.msra.mxu0 0
    %1868 = vmatprep.subr.bf16.mxu0 0
    %1869 = vmatpush1.bf16.msra.mxu0 0
    %1870 = vmatprep.subr.bf16.mxu0 0
    %1871 = vmatpush1.bf16.msra.mxu0 0
    %1872 = vmatprep.mubr.bf16.mxu0 0
    %1873 = vmatmul.mubr.bf16.gmra.mrb[0].mxu0 %v1756
    %v1874 = vpop.f32.mrb[0].mxu0
    %v1875 = vadd.f32 %v1614, %v1874
    %v1876 = vpop.f32.mrb[0].mxu0
    %v1877 = vadd.f32 %v1618, %v1876
    %v1878 = vpop.f32.mrb[0].mxu0
    %v1879 = vpop.f32.mrb[0].mxu0
    %1880 = vdwg.mxu0
    %1881 = vmatprep.subr.bf16.mxu0 %v1730
    %1882 = vmatpush1.bf16.msra.mxu0 %v1729
    %1883 = vmatprep.subr.bf16.mxu0 0
    %1884 = vmatpush1.bf16.msra.mxu0 0
    %1885 = vmatprep.subr.bf16.mxu0 0
    %1886 = vmatpush1.bf16.msra.mxu0 0
    %1887 = vmatprep.subr.bf16.mxu0 0
    %1888 = vmatpush1.bf16.msra.mxu0 0
    %1889 = vmatprep.subr.bf16.mxu0 0
    %1890 = vmatpush1.bf16.msra.mxu0 0
    %1891 = vmatprep.subr.bf16.mxu0 0
    %1892 = vmatpush1.bf16.msra.mxu0 0
    %1893 = vmatprep.subr.bf16.mxu0 0
    %1894 = vmatpush1.bf16.msra.mxu0 0
    %1895 = vmatprep.subr.bf16.mxu0 0
    %1896 = vmatpush1.bf16.msra.mxu0 0
    %1897 = vmatprep.subr.bf16.mxu0 0
    %1898 = vmatpush1.bf16.msra.mxu0 0
    %1899 = vmatprep.subr.bf16.mxu0 0
    %1900 = vmatpush1.bf16.msra.mxu0 0
    %1901 = vmatprep.subr.bf16.mxu0 0
    %1902 = vmatpush1.bf16.msra.mxu0 0
    %1903 = vmatprep.subr.bf16.mxu0 0
    %1904 = vmatpush1.bf16.msra.mxu0 0
    %1905 = vmatprep.subr.bf16.mxu0 0
    %1906 = vmatpush1.bf16.msra.mxu0 0
    %1907 = vmatprep.subr.bf16.mxu0 0
    %1908 = vmatpush1.bf16.msra.mxu0 0
    %1909 = vmatprep.subr.bf16.mxu0 0
    %1910 = vmatpush1.bf16.msra.mxu0 0
    %1911 = vmatprep.subr.bf16.mxu0 0
    %1912 = vmatpush1.bf16.msra.mxu0 0
    %1913 = vmatprep.mubr.bf16.mxu0 0
    %1914 = vmatmul.mubr.bf16.gmra.mrb[0].mxu0 %v1756
    %v1915 = vpop.f32.mrb[0].mxu0
    %v1916 = vadd.f32 %v1622, %v1915
    %v1917 = vpop.f32.mrb[0].mxu0
    %v1918 = vadd.f32 %v1626, %v1917
    %v1919 = vpop.f32.mrb[0].mxu0
    %v1920 = vpop.f32.mrb[0].mxu0
    %1921 = vdwg.mxu0
    %1922 = vmatprep.subr.bf16.mxu0 %v1732
    %1923 = vmatpush1.bf16.msra.mxu0 %v1731
    %1924 = vmatprep.subr.bf16.mxu0 0
    %1925 = vmatpush1.bf16.msra.mxu0 0
    %1926 = vmatprep.subr.bf16.mxu0 0
    %1927 = vmatpush1.bf16.msra.mxu0 0
    %1928 = vmatprep.subr.bf16.mxu0 0
    %1929 = vmatpush1.bf16.msra.mxu0 0
    %1930 = vmatprep.subr.bf16.mxu0 0
    %1931 = vmatpush1.bf16.msra.mxu0 0
    %1932 = vmatprep.subr.bf16.mxu0 0
    %1933 = vmatpush1.bf16.msra.mxu0 0
    %1934 = vmatprep.subr.bf16.mxu0 0
    %1935 = vmatpush1.bf16.msra.mxu0 0
    %1936 = vmatprep.subr.bf16.mxu0 0
    %1937 = vmatpush1.bf16.msra.mxu0 0
    %1938 = vmatprep.subr.bf16.mxu0 0
    %1939 = vmatpush1.bf16.msra.mxu0 0
    %1940 = vmatprep.subr.bf16.mxu0 0
    %1941 = vmatpush1.bf16.msra.mxu0 0
    %1942 = vmatprep.subr.bf16.mxu0 0
    %1943 = vmatpush1.bf16.msra.mxu0 0
    %1944 = vmatprep.subr.bf16.mxu0 0
    %1945 = vmatpush1.bf16.msra.mxu0 0
    %1946 = vmatprep.subr.bf16.mxu0 0
    %1947 = vmatpush1.bf16.msra.mxu0 0
    %1948 = vmatprep.subr.bf16.mxu0 0
    %1949 = vmatpush1.bf16.msra.mxu0 0
    %1950 = vmatprep.subr.bf16.mxu0 0
    %1951 = vmatpush1.bf16.msra.mxu0 0
    %1952 = vmatprep.subr.bf16.mxu0 0
    %1953 = vmatpush1.bf16.msra.mxu0 0
    %1954 = vmatprep.mubr.bf16.mxu0 0
    %1955 = vmatmul.mubr.bf16.gmra.mrb[0].mxu0 %v1756
    %v1956 = vpop.f32.mrb[0].mxu0
    %v1957 = vadd.f32 %v1630, %v1956
    %v1958 = vpop.f32.mrb[0].mxu0
    %v1959 = vadd.f32 %v1634, %v1958
    %v1960 = vpop.f32.mrb[0].mxu0
    %v1961 = vpop.f32.mrb[0].mxu0
    %1962 = vdwg.mxu0
    %1963 = vmatprep.subr.bf16.mxu0 %v1734
    %1964 = vmatpush1.bf16.msra.mxu0 %v1733
    %1965 = vmatprep.subr.bf16.mxu0 0
    %1966 = vmatpush1.bf16.msra.mxu0 0
    %1967 = vmatprep.subr.bf16.mxu0 0
    %1968 = vmatpush1.bf16.msra.mxu0 0
    %1969 = vmatprep.subr.bf16.mxu0 0
    %1970 = vmatpush1.bf16.msra.mxu0 0
    %1971 = vmatprep.subr.bf16.mxu0 0
    %1972 = vmatpush1.bf16.msra.mxu0 0
    %1973 = vmatprep.subr.bf16.mxu0 0
    %1974 = vmatpush1.bf16.msra.mxu0 0
    %1975 = vmatprep.subr.bf16.mxu0 0
    %1976 = vmatpush1.bf16.msra.mxu0 0
    %1977 = vmatprep.subr.bf16.mxu0 0
    %1978 = vmatpush1.bf16.msra.mxu0 0
    %1979 = vmatprep.subr.bf16.mxu0 0
    %1980 = vmatpush1.bf16.msra.mxu0 0
    %1981 = vmatprep.subr.bf16.mxu0 0
    %1982 = vmatpush1.bf16.msra.mxu0 0
    %1983 = vmatprep.subr.bf16.mxu0 0
    %1984 = vmatpush1.bf16.msra.mxu0 0
    %1985 = vmatprep.subr.bf16.mxu0 0
    %1986 = vmatpush1.bf16.msra.mxu0 0
    %1987 = vmatprep.subr.bf16.mxu0 0
    %1988 = vmatpush1.bf16.msra.mxu0 0
    %1989 = vmatprep.subr.bf16.mxu0 0
    %1990 = vmatpush1.bf16.msra.mxu0 0
    %1991 = vmatprep.subr.bf16.mxu0 0
    %1992 = vmatpush1.bf16.msra.mxu0 0
    %1993 = vmatprep.subr.bf16.mxu0 0
    %1994 = vmatpush1.bf16.msra.mxu0 0
    %1995 = vmatprep.mubr.bf16.mxu0 0
    %1996 = vmatmul.mubr.bf16.gmra.mrb[0].mxu0 %v1756
    %v1997 = vpop.f32.mrb[0].mxu0
    %v1998 = vadd.f32 %v1638, %v1997
    %v1999 = vpop.f32.mrb[0].mxu0
    %v2000 = vadd.f32 %v1642, %v1999
    %v2001 = vpop.f32.mrb[0].mxu0
    %v2002 = vpop.f32.mrb[0].mxu0
    %2003 = vdwg.mxu0
    %2004 = vmatprep.subr.bf16.mxu0 %v1736
    %2005 = vmatpush1.bf16.msra.mxu0 %v1735
    %2006 = vmatprep.subr.bf16.mxu0 0
    %2007 = vmatpush1.bf16.msra.mxu0 0
    %2008 = vmatprep.subr.bf16.mxu0 0
    %2009 = vmatpush1.bf16.msra.mxu0 0
    %2010 = vmatprep.subr.bf16.mxu0 0
    %2011 = vmatpush1.bf16.msra.mxu0 0
    %2012 = vmatprep.subr.bf16.mxu0 0
    %2013 = vmatpush1.bf16.msra.mxu0 0
    %2014 = vmatprep.subr.bf16.mxu0 0
    %2015 = vmatpush1.bf16.msra.mxu0 0
    %2016 = vmatprep.subr.bf16.mxu0 0
    %2017 = vmatpush1.bf16.msra.mxu0 0
    %2018 = vmatprep.subr.bf16.mxu0 0
    %2019 = vmatpush1.bf16.msra.mxu0 0
    %2020 = vmatprep.subr.bf16.mxu0 0
    %2021 = vmatpush1.bf16.msra.mxu0 0
    %2022 = vmatprep.subr.bf16.mxu0 0
    %2023 = vmatpush1.bf16.msra.mxu0 0
    %2024 = vmatprep.subr.bf16.mxu0 0
    %2025 = vmatpush1.bf16.msra.mxu0 0
    %2026 = vmatprep.subr.bf16.mxu0 0
    %2027 = vmatpush1.bf16.msra.mxu0 0
    %2028 = vmatprep.subr.bf16.mxu0 0
    %2029 = vmatpush1.bf16.msra.mxu0 0
    %2030 = vmatprep.subr.bf16.mxu0 0
    %2031 = vmatpush1.bf16.msra.mxu0 0
    %2032 = vmatprep.subr.bf16.mxu0 0
    %2033 = vmatpush1.bf16.msra.mxu0 0
    %2034 = vmatprep.subr.bf16.mxu0 0
    %2035 = vmatpush1.bf16.msra.mxu0 0
    %2036 = vmatprep.mubr.bf16.mxu0 0
    %2037 = vmatmul.mubr.bf16.gmra.mrb[0].mxu0 %v1756
    %v2038 = vpop.f32.mrb[0].mxu0
    %v2039 = vadd.f32 %v1646, %v2038
    %v2040 = vpop.f32.mrb[0].mxu0
    %v2041 = vadd.f32 %v1650, %v2040
    %v2042 = vpop.f32.mrb[0].mxu0
    %v2043 = vpop.f32.mrb[0].mxu0
    %2044 = vdwg.mxu0
    %2045 = vmatprep.subr.bf16.mxu0 %v1738
    %2046 = vmatpush1.bf16.msra.mxu0 %v1737
    %2047 = vmatprep.subr.bf16.mxu0 0
    %2048 = vmatpush1.bf16.msra.mxu0 0
    %2049 = vmatprep.subr.bf16.mxu0 0
    %2050 = vmatpush1.bf16.msra.mxu0 0
    %2051 = vmatprep.subr.bf16.mxu0 0
    %2052 = vmatpush1.bf16.msra.mxu0 0
    %2053 = vmatprep.subr.bf16.mxu0 0
    %2054 = vmatpush1.bf16.msra.mxu0 0
    %2055 = vmatprep.subr.bf16.mxu0 0
    %2056 = vmatpush1.bf16.msra.mxu0 0
    %2057 = vmatprep.subr.bf16.mxu0 0
    %2058 = vmatpush1.bf16.msra.mxu0 0
    %2059 = vmatprep.subr.bf16.mxu0 0
    %2060 = vmatpush1.bf16.msra.mxu0 0
    %2061 = vmatprep.subr.bf16.mxu0 0
    %2062 = vmatpush1.bf16.msra.mxu0 0
    %2063 = vmatprep.subr.bf16.mxu0 0
    %2064 = vmatpush1.bf16.msra.mxu0 0
    %2065 = vmatprep.subr.bf16.mxu0 0
    %2066 = vmatpush1.bf16.msra.mxu0 0
    %2067 = vmatprep.subr.bf16.mxu0 0
    %2068 = vmatpush1.bf16.msra.mxu0 0
    %2069 = vmatprep.subr.bf16.mxu0 0
    %2070 = vmatpush1.bf16.msra.mxu0 0
    %2071 = vmatprep.subr.bf16.mxu0 0
    %2072 = vmatpush1.bf16.msra.mxu0 0
    %2073 = vmatprep.subr.bf16.mxu0 0
    %2074 = vmatpush1.bf16.msra.mxu0 0
    %2075 = vmatprep.subr.bf16.mxu0 0
    %2076 = vmatpush1.bf16.msra.mxu0 0
    %2077 = vmatprep.mubr.bf16.mxu0 0
    %2078 = vmatmul.mubr.bf16.gmra.mrb[0].mxu0 %v1756
    %v2079 = vpop.f32.mrb[0].mxu0
    %v2080 = vadd.f32 %v1654, %v2079
    %v2081 = vpop.f32.mrb[0].mxu0
    %v2082 = vadd.f32 %v1658, %v2081
    %v2083 = vpop.f32.mrb[0].mxu0
    %v2084 = vpop.f32.mrb[0].mxu0
    %2085 = vdwg.mxu0
    %v2086 = vmax.f32 %v1793, 0.0
    %v2087 = vmax.f32 %v1795, 0.0
    %v2088 = vmax.f32 %v1834, 0.0
    %v2089 = vmax.f32 %v1836, 0.0
    %v2090 = vmax.f32 %v1875, 0.0
    %v2091 = vmax.f32 %v1877, 0.0
    %v2092 = vmax.f32 %v1916, 0.0
    %v2093 = vmax.f32 %v1918, 0.0
    %v2094 = vmax.f32 %v1957, 0.0
    %v2095 = vmax.f32 %v1959, 0.0
    %v2096 = vmax.f32 %v1998, 0.0
    %v2097 = vmax.f32 %v2000, 0.0
    %v2098 = vmax.f32 %v2039, 0.0
    %v2099 = vmax.f32 %v2041, 0.0
    %v2100 = vmax.f32 %v2080, 0.0
    %v2101 = vmax.f32 %v2082, 0.0
    %v2102 = vpack.c.bf16 %v2086, %v2086
    %v2103 = vpack.c.bf16 %v2087, %v2087
    %v2104 = vpack.c.bf16 %v2088, %v2088
    %v2105 = vpack.c.bf16 %v2089, %v2089
    %v2106 = vpack.c.bf16 %v2090, %v2090
    %v2107 = vpack.c.bf16 %v2091, %v2091
    %v2108 = vpack.c.bf16 %v2092, %v2092
    %v2109 = vpack.c.bf16 %v2093, %v2093
    %v2110 = vpack.c.bf16 %v2094, %v2094
    %v2111 = vpack.c.bf16 %v2095, %v2095
    %v2112 = vpack.c.bf16 %v2096, %v2096
    %v2113 = vpack.c.bf16 %v2097, %v2097
    %v2114 = vpack.c.bf16 %v2098, %v2098
    %v2115 = vpack.c.bf16 %v2099, %v2099
    %v2116 = vpack.c.bf16 %v2100, %v2100
    %v2117 = vpack.c.bf16 %v2101, %v2101
    %v2118 = vld [vmem:[%s11] sm:$0xf]
    %v2119 = vld [vmem:[%s11 + $0x4] sm:$0xf]
    %v2120 = vld [vmem:[%s11 + $0x8] sm:$0xf]
    %v2121 = vld [vmem:[%s11 + $0xc] sm:$0xf]
    %v2122 = vld [vmem:[%s11 + $0x10] sm:$0xf]
    %v2123 = vld [vmem:[%s11 + $0x14] sm:$0xf]
    %v2124 = vld [vmem:[%s11 + $0x18] sm:$0xf]
    %v2125 = vld [vmem:[%s11 + $0x1c] sm:$0xf]
    %v2126 = vld [vmem:[%s11 + $0x20] sm:$0xf]
    %v2127 = vld [vmem:[%s11 + $0x24] sm:$0xf]
    %v2128 = vld [vmem:[%s11 + $0x28] sm:$0xf]
    %v2129 = vld [vmem:[%s11 + $0x2c] sm:$0xf]
    %v2130 = vld [vmem:[%s11 + $0x30] sm:$0xf]
    %v2131 = vld [vmem:[%s11 + $0x34] sm:$0xf]
    %v2132 = vld [vmem:[%s11 + $0x38] sm:$0xf]
    %v2133 = vld [vmem:[%s11 + $0x3c] sm:$0xf]
    %v2134 = vld [vmem:[%s11 + $0x40] sm:$0xf]
    %v2135 = vld [vmem:[%s11 + $0x44] sm:$0xf]
    %v2136 = vld [vmem:[%s11 + $0x48] sm:$0xf]
    %v2137 = vld [vmem:[%s11 + $0x4c] sm:$0xf]
    %v2138 = vld [vmem:[%s11 + $0x50] sm:$0xf]
    %v2139 = vld [vmem:[%s11 + $0x54] sm:$0xf]
    %v2140 = vld [vmem:[%s11 + $0x58] sm:$0xf]
    %v2141 = vld [vmem:[%s11 + $0x5c] sm:$0xf]
    %v2142 = vld [vmem:[%s11 + $0x60] sm:$0xf]
    %v2143 = vld [vmem:[%s11 + $0x64] sm:$0xf]
    %v2144 = vld [vmem:[%s11 + $0x68] sm:$0xf]
    %v2145 = vld [vmem:[%s11 + $0x6c] sm:$0xf]
    %v2146 = vld [vmem:[%s11 + $0x70] sm:$0xf]
    %v2147 = vld [vmem:[%s11 + $0x74] sm:$0xf]
    %v2148 = vld [vmem:[%s11 + $0x78] sm:$0xf]
    %v2149 = vld [vmem:[%s11 + $0x7c] sm:$0xf]
    %v2150 = vld [vmem:[%s11 + $0x80] sm:$0xf]
    %v2151 = vld [vmem:[%s11 + $0x84] sm:$0xf]
    %v2152 = vld [vmem:[%s11 + $0x88] sm:$0xf]
    %v2153 = vld [vmem:[%s11 + $0x8c] sm:$0xf]
    %v2154 = vld [vmem:[%s11 + $0x90] sm:$0xf]
    %v2155 = vld [vmem:[%s11 + $0x94] sm:$0xf]
    %v2156 = vld [vmem:[%s11 + $0x98] sm:$0xf]
    %v2157 = vld [vmem:[%s11 + $0x9c] sm:$0xf]
    %v2158 = vld [vmem:[%s11 + $0xa0] sm:$0xf]
    %v2159 = vld [vmem:[%s11 + $0xa4] sm:$0xf]
    %v2160 = vld [vmem:[%s11 + $0xa8] sm:$0xf]
    %v2161 = vld [vmem:[%s11 + $0xac] sm:$0xf]
    %v2162 = vld [vmem:[%s11 + $0xb0] sm:$0xf]
    %v2163 = vld [vmem:[%s11 + $0xb4] sm:$0xf]
    %v2164 = vld [vmem:[%s11 + $0xb8] sm:$0xf]
    %v2165 = vld [vmem:[%s11 + $0xbc] sm:$0xf]
    %v2166 = vld [vmem:[%s11 + $0xc0] sm:$0xf]
    %v2167 = vld [vmem:[%s11 + $0xc4] sm:$0xf]
    %v2168 = vld [vmem:[%s11 + $0xc8] sm:$0xf]
    %v2169 = vld [vmem:[%s11 + $0xcc] sm:$0xf]
    %v2170 = vld [vmem:[%s11 + $0xd0] sm:$0xf]
    %v2171 = vld [vmem:[%s11 + $0xd4] sm:$0xf]
    %v2172 = vld [vmem:[%s11 + $0xd8] sm:$0xf]
    %v2173 = vld [vmem:[%s11 + $0xdc] sm:$0xf]
    %v2174 = vld [vmem:[%s11 + $0xe0] sm:$0xf]
    %v2175 = vld [vmem:[%s11 + $0xe4] sm:$0xf]
    %v2176 = vld [vmem:[%s11 + $0xe8] sm:$0xf]
    %v2177 = vld [vmem:[%s11 + $0xec] sm:$0xf]
    %v2178 = vld [vmem:[%s11 + $0xf0] sm:$0xf]
    %v2179 = vld [vmem:[%s11 + $0xf4] sm:$0xf]
    %v2180 = vld [vmem:[%s11 + $0xf8] sm:$0xf]
    %v2181 = vld [vmem:[%s11 + $0xfc] sm:$0xf]
    %v2182 = vld [vmem:[%s11 + $0x100] sm:$0xf]
    %v2183 = vld [vmem:[%s11 + $0x104] sm:$0xf]
    %v2184 = vld [vmem:[%s11 + $0x108] sm:$0xf]
    %v2185 = vld [vmem:[%s11 + $0x10c] sm:$0xf]
    %v2186 = vld [vmem:[%s11 + $0x110] sm:$0xf]
    %v2187 = vld [vmem:[%s11 + $0x114] sm:$0xf]
    %v2188 = vld [vmem:[%s11 + $0x118] sm:$0xf]
    %v2189 = vld [vmem:[%s11 + $0x11c] sm:$0xf]
    %v2190 = vld [vmem:[%s11 + $0x120] sm:$0xf]
    %v2191 = vld [vmem:[%s11 + $0x124] sm:$0xf]
    %v2192 = vld [vmem:[%s11 + $0x128] sm:$0xf]
    %v2193 = vld [vmem:[%s11 + $0x12c] sm:$0xf]
    %v2194 = vld [vmem:[%s11 + $0x130] sm:$0xf]
    %v2195 = vld [vmem:[%s11 + $0x134] sm:$0xf]
    %v2196 = vld [vmem:[%s11 + $0x138] sm:$0xf]
    %v2197 = vld [vmem:[%s11 + $0x13c] sm:$0xf]
    %v2198 = vld [vmem:[%s11 + $0x140] sm:$0xf]
    %v2199 = vld [vmem:[%s11 + $0x144] sm:$0xf]
    %v2200 = vld [vmem:[%s11 + $0x148] sm:$0xf]
    %v2201 = vld [vmem:[%s11 + $0x14c] sm:$0xf]
    %v2202 = vld [vmem:[%s11 + $0x150] sm:$0xf]
    %v2203 = vld [vmem:[%s11 + $0x154] sm:$0xf]
    %v2204 = vld [vmem:[%s11 + $0x158] sm:$0xf]
    %v2205 = vld [vmem:[%s11 + $0x15c] sm:$0xf]
    %v2206 = vld [vmem:[%s11 + $0x160] sm:$0xf]
    %v2207 = vld [vmem:[%s11 + $0x164] sm:$0xf]
    %v2208 = vld [vmem:[%s11 + $0x168] sm:$0xf]
    %v2209 = vld [vmem:[%s11 + $0x16c] sm:$0xf]
    %v2210 = vld [vmem:[%s11 + $0x170] sm:$0xf]
    %v2211 = vld [vmem:[%s11 + $0x174] sm:$0xf]
    %v2212 = vld [vmem:[%s11 + $0x178] sm:$0xf]
    %v2213 = vld [vmem:[%s11 + $0x17c] sm:$0xf]
    %v2214 = vld [vmem:[%s11 + $0x180] sm:$0xf]
    %v2215 = vld [vmem:[%s11 + $0x184] sm:$0xf]
    %v2216 = vld [vmem:[%s11 + $0x188] sm:$0xf]
    %v2217 = vld [vmem:[%s11 + $0x18c] sm:$0xf]
    %v2218 = vld [vmem:[%s11 + $0x190] sm:$0xf]
    %v2219 = vld [vmem:[%s11 + $0x194] sm:$0xf]
    %v2220 = vld [vmem:[%s11 + $0x198] sm:$0xf]
    %v2221 = vld [vmem:[%s11 + $0x19c] sm:$0xf]
    %v2222 = vld [vmem:[%s11 + $0x1a0] sm:$0xf]
    %v2223 = vld [vmem:[%s11 + $0x1a4] sm:$0xf]
    %v2224 = vld [vmem:[%s11 + $0x1a8] sm:$0xf]
    %v2225 = vld [vmem:[%s11 + $0x1ac] sm:$0xf]
    %v2226 = vld [vmem:[%s11 + $0x1b0] sm:$0xf]
    %v2227 = vld [vmem:[%s11 + $0x1b4] sm:$0xf]
    %v2228 = vld [vmem:[%s11 + $0x1b8] sm:$0xf]
    %v2229 = vld [vmem:[%s11 + $0x1bc] sm:$0xf]
    %v2230 = vld [vmem:[%s11 + $0x1c0] sm:$0xf]
    %v2231 = vld [vmem:[%s11 + $0x1c4] sm:$0xf]
    %v2232 = vld [vmem:[%s11 + $0x1c8] sm:$0xf]
    %v2233 = vld [vmem:[%s11 + $0x1cc] sm:$0xf]
    %v2234 = vld [vmem:[%s11 + $0x1d0] sm:$0xf]
    %v2235 = vld [vmem:[%s11 + $0x1d4] sm:$0xf]
    %v2236 = vld [vmem:[%s11 + $0x1d8] sm:$0xf]
    %v2237 = vld [vmem:[%s11 + $0x1dc] sm:$0xf]
    %v2238 = vld [vmem:[%s11 + $0x1e0] sm:$0xf]
    %v2239 = vld [vmem:[%s11 + $0x1e4] sm:$0xf]
    %v2240 = vld [vmem:[%s11 + $0x1e8] sm:$0xf]
    %v2241 = vld [vmem:[%s11 + $0x1ec] sm:$0xf]
    %v2242 = vld [vmem:[%s11 + $0x1f0] sm:$0xf]
    %v2243 = vld [vmem:[%s11 + $0x1f4] sm:$0xf]
    %v2244 = vld [vmem:[%s11 + $0x1f8] sm:$0xf]
    %v2245 = vld [vmem:[%s11 + $0x1fc] sm:$0xf]
    %v2246 = vld [vmem:[%s11 + $0x200] sm:$0xf]
    %v2247 = vld [vmem:[%s11 + $0x204] sm:$0xf]
    %v2248 = vld [vmem:[%s11 + $0x208] sm:$0xf]
    %v2249 = vld [vmem:[%s11 + $0x20c] sm:$0xf]
    %v2250 = vld [vmem:[%s11 + $0x210] sm:$0xf]
    %v2251 = vld [vmem:[%s11 + $0x214] sm:$0xf]
    %v2252 = vld [vmem:[%s11 + $0x218] sm:$0xf]
    %v2253 = vld [vmem:[%s11 + $0x21c] sm:$0xf]
    %v2254 = vld [vmem:[%s11 + $0x220] sm:$0xf]
    %v2255 = vld [vmem:[%s11 + $0x224] sm:$0xf]
    %v2256 = vld [vmem:[%s11 + $0x228] sm:$0xf]
    %v2257 = vld [vmem:[%s11 + $0x22c] sm:$0xf]
    %v2258 = vld [vmem:[%s11 + $0x230] sm:$0xf]
    %v2259 = vld [vmem:[%s11 + $0x234] sm:$0xf]
    %v2260 = vld [vmem:[%s11 + $0x238] sm:$0xf]
    %v2261 = vld [vmem:[%s11 + $0x23c] sm:$0xf]
    %v2262 = vld [vmem:[%s11 + $0x240] sm:$0xf]
    %v2263 = vld [vmem:[%s11 + $0x244] sm:$0xf]
    %v2264 = vld [vmem:[%s11 + $0x248] sm:$0xf]
    %v2265 = vld [vmem:[%s11 + $0x24c] sm:$0xf]
    %v2266 = vld [vmem:[%s11 + $0x250] sm:$0xf]
    %v2267 = vld [vmem:[%s11 + $0x254] sm:$0xf]
    %v2268 = vld [vmem:[%s11 + $0x258] sm:$0xf]
    %v2269 = vld [vmem:[%s11 + $0x25c] sm:$0xf]
    %v2270 = vld [vmem:[%s11 + $0x260] sm:$0xf]
    %v2271 = vld [vmem:[%s11 + $0x264] sm:$0xf]
    %v2272 = vld [vmem:[%s11 + $0x268] sm:$0xf]
    %v2273 = vld [vmem:[%s11 + $0x26c] sm:$0xf]
    %v2274 = vld [vmem:[%s11 + $0x270] sm:$0xf]
    %v2275 = vld [vmem:[%s11 + $0x274] sm:$0xf]
    %v2276 = vld [vmem:[%s11 + $0x278] sm:$0xf]
    %v2277 = vld [vmem:[%s11 + $0x27c] sm:$0xf]
    %v2278 = vld [vmem:[%s11 + $0x280] sm:$0xf]
    %v2279 = vld [vmem:[%s11 + $0x284] sm:$0xf]
    %v2280 = vld [vmem:[%s11 + $0x288] sm:$0xf]
    %v2281 = vld [vmem:[%s11 + $0x28c] sm:$0xf]
    %v2282 = vld [vmem:[%s11 + $0x290] sm:$0xf]
    %v2283 = vld [vmem:[%s11 + $0x294] sm:$0xf]
    %v2284 = vld [vmem:[%s11 + $0x298] sm:$0xf]
    %v2285 = vld [vmem:[%s11 + $0x29c] sm:$0xf]
    %v2286 = vld [vmem:[%s11 + $0x2a0] sm:$0xf]
    %v2287 = vld [vmem:[%s11 + $0x2a4] sm:$0xf]
    %v2288 = vld [vmem:[%s11 + $0x2a8] sm:$0xf]
    %v2289 = vld [vmem:[%s11 + $0x2ac] sm:$0xf]
    %v2290 = vld [vmem:[%s11 + $0x2b0] sm:$0xf]
    %v2291 = vld [vmem:[%s11 + $0x2b4] sm:$0xf]
    %v2292 = vld [vmem:[%s11 + $0x2b8] sm:$0xf]
    %v2293 = vld [vmem:[%s11 + $0x2bc] sm:$0xf]
    %v2294 = vld [vmem:[%s11 + $0x2c0] sm:$0xf]
    %v2295 = vld [vmem:[%s11 + $0x2c4] sm:$0xf]
    %v2296 = vld [vmem:[%s11 + $0x2c8] sm:$0xf]
    %v2297 = vld [vmem:[%s11 + $0x2cc] sm:$0xf]
    %v2298 = vld [vmem:[%s11 + $0x2d0] sm:$0xf]
    %v2299 = vld [vmem:[%s11 + $0x2d4] sm:$0xf]
    %v2300 = vld [vmem:[%s11 + $0x2d8] sm:$0xf]
    %v2301 = vld [vmem:[%s11 + $0x2dc] sm:$0xf]
    %v2302 = vld [vmem:[%s11 + $0x2e0] sm:$0xf]
    %v2303 = vld [vmem:[%s11 + $0x2e4] sm:$0xf]
    %v2304 = vld [vmem:[%s11 + $0x2e8] sm:$0xf]
    %v2305 = vld [vmem:[%s11 + $0x2ec] sm:$0xf]
    %v2306 = vld [vmem:[%s11 + $0x2f0] sm:$0xf]
    %v2307 = vld [vmem:[%s11 + $0x2f4] sm:$0xf]
    %v2308 = vld [vmem:[%s11 + $0x2f8] sm:$0xf]
    %v2309 = vld [vmem:[%s11 + $0x2fc] sm:$0xf]
    %v2310 = vld [vmem:[%s11 + $0x300] sm:$0xf]
    %v2311 = vld [vmem:[%s11 + $0x304] sm:$0xf]
    %v2312 = vld [vmem:[%s11 + $0x308] sm:$0xf]
    %v2313 = vld [vmem:[%s11 + $0x30c] sm:$0xf]
    %v2314 = vld [vmem:[%s11 + $0x310] sm:$0xf]
    %v2315 = vld [vmem:[%s11 + $0x314] sm:$0xf]
    %v2316 = vld [vmem:[%s11 + $0x318] sm:$0xf]
    %v2317 = vld [vmem:[%s11 + $0x31c] sm:$0xf]
    %v2318 = vld [vmem:[%s11 + $0x320] sm:$0xf]
    %v2319 = vld [vmem:[%s11 + $0x324] sm:$0xf]
    %v2320 = vld [vmem:[%s11 + $0x328] sm:$0xf]
    %v2321 = vld [vmem:[%s11 + $0x32c] sm:$0xf]
    %v2322 = vld [vmem:[%s11 + $0x330] sm:$0xf]
    %v2323 = vld [vmem:[%s11 + $0x334] sm:$0xf]
    %v2324 = vld [vmem:[%s11 + $0x338] sm:$0xf]
    %v2325 = vld [vmem:[%s11 + $0x33c] sm:$0xf]
    %v2326 = vld [vmem:[%s11 + $0x340] sm:$0xf]
    %v2327 = vld [vmem:[%s11 + $0x344] sm:$0xf]
    %v2328 = vld [vmem:[%s11 + $0x348] sm:$0xf]
    %v2329 = vld [vmem:[%s11 + $0x34c] sm:$0xf]
    %v2330 = vld [vmem:[%s11 + $0x350] sm:$0xf]
    %v2331 = vld [vmem:[%s11 + $0x354] sm:$0xf]
    %v2332 = vld [vmem:[%s11 + $0x358] sm:$0xf]
    %v2333 = vld [vmem:[%s11 + $0x35c] sm:$0xf]
    %v2334 = vld [vmem:[%s11 + $0x360] sm:$0xf]
    %v2335 = vld [vmem:[%s11 + $0x364] sm:$0xf]
    %v2336 = vld [vmem:[%s11 + $0x368] sm:$0xf]
    %v2337 = vld [vmem:[%s11 + $0x36c] sm:$0xf]
    %v2338 = vld [vmem:[%s11 + $0x370] sm:$0xf]
    %v2339 = vld [vmem:[%s11 + $0x374] sm:$0xf]
    %v2340 = vld [vmem:[%s11 + $0x378] sm:$0xf]
    %v2341 = vld [vmem:[%s11 + $0x37c] sm:$0xf]
    %v2342 = vld [vmem:[%s11 + $0x380] sm:$0xf]
    %v2343 = vld [vmem:[%s11 + $0x384] sm:$0xf]
    %v2344 = vld [vmem:[%s11 + $0x388] sm:$0xf]
    %v2345 = vld [vmem:[%s11 + $0x38c] sm:$0xf]
    %v2346 = vld [vmem:[%s11 + $0x390] sm:$0xf]
    %v2347 = vld [vmem:[%s11 + $0x394] sm:$0xf]
    %v2348 = vld [vmem:[%s11 + $0x398] sm:$0xf]
    %v2349 = vld [vmem:[%s11 + $0x39c] sm:$0xf]
    %v2350 = vld [vmem:[%s11 + $0x3a0] sm:$0xf]
    %v2351 = vld [vmem:[%s11 + $0x3a4] sm:$0xf]
    %v2352 = vld [vmem:[%s11 + $0x3a8] sm:$0xf]
    %v2353 = vld [vmem:[%s11 + $0x3ac] sm:$0xf]
    %v2354 = vld [vmem:[%s11 + $0x3b0] sm:$0xf]
    %v2355 = vld [vmem:[%s11 + $0x3b4] sm:$0xf]
    %v2356 = vld [vmem:[%s11 + $0x3b8] sm:$0xf]
    %v2357 = vld [vmem:[%s11 + $0x3bc] sm:$0xf]
    %v2358 = vld [vmem:[%s11 + $0x3c0] sm:$0xf]
    %v2359 = vld [vmem:[%s11 + $0x3c4] sm:$0xf]
    %v2360 = vld [vmem:[%s11 + $0x3c8] sm:$0xf]
    %v2361 = vld [vmem:[%s11 + $0x3cc] sm:$0xf]
    %v2362 = vld [vmem:[%s11 + $0x3d0] sm:$0xf]
    %v2363 = vld [vmem:[%s11 + $0x3d4] sm:$0xf]
    %v2364 = vld [vmem:[%s11 + $0x3d8] sm:$0xf]
    %v2365 = vld [vmem:[%s11 + $0x3dc] sm:$0xf]
    %v2366 = vld [vmem:[%s11 + $0x3e0] sm:$0xf]
    %v2367 = vld [vmem:[%s11 + $0x3e4] sm:$0xf]
    %v2368 = vld [vmem:[%s11 + $0x3e8] sm:$0xf]
    %v2369 = vld [vmem:[%s11 + $0x3ec] sm:$0xf]
    %v2370 = vld [vmem:[%s11 + $0x3f0] sm:$0xf]
    %v2371 = vld [vmem:[%s11 + $0x3f4] sm:$0xf]
    %v2372 = vld [vmem:[%s11 + $0x3f8] sm:$0xf]
    %v2373 = vld [vmem:[%s11 + $0x3fc] sm:$0xf]
    %v2374 = vld [vmem:[%s12] sm:$0x1]
    %v2376 = vlaneseq
    %v2377 = vshrl.u32 %v2376, 7
    %v2378 = vsub.s32 0, %v2377
    %v2379 = vrot.slane %v2374, %v2378
    %v2637 = vunpack.c.l.b16 %v2118
    %v2638 = vunpack.c.l.b16 %v2119
    %v2639 = vunpack.c.l.b16 %v2120
    %v2640 = vunpack.c.l.b16 %v2121
    %v2641 = vunpack.c.l.b16 %v2122
    %v2642 = vunpack.c.l.b16 %v2123
    %v2643 = vunpack.c.l.b16 %v2124
    %v2644 = vunpack.c.l.b16 %v2125
    %v2645 = vunpack.c.l.b16 %v2126
    %v2646 = vunpack.c.l.b16 %v2127
    %v2647 = vunpack.c.l.b16 %v2128
    %v2648 = vunpack.c.l.b16 %v2129
    %v2649 = vunpack.c.l.b16 %v2130
    %v2650 = vunpack.c.l.b16 %v2131
    %v2651 = vunpack.c.l.b16 %v2132
    %v2652 = vunpack.c.l.b16 %v2133
    %v2653 = vunpack.c.l.b16 %v2134
    %v2654 = vunpack.c.l.b16 %v2135
    %v2655 = vunpack.c.l.b16 %v2136
    %v2656 = vunpack.c.l.b16 %v2137
    %v2657 = vunpack.c.l.b16 %v2138
    %v2658 = vunpack.c.l.b16 %v2139
    %v2659 = vunpack.c.l.b16 %v2140
    %v2660 = vunpack.c.l.b16 %v2141
    %v2661 = vunpack.c.l.b16 %v2142
    %v2662 = vunpack.c.l.b16 %v2143
    %v2663 = vunpack.c.l.b16 %v2144
    %v2664 = vunpack.c.l.b16 %v2145
    %v2665 = vunpack.c.l.b16 %v2146
    %v2666 = vunpack.c.l.b16 %v2147
    %v2667 = vunpack.c.l.b16 %v2148
    %v2668 = vunpack.c.l.b16 %v2149
    %v2669 = vunpack.c.l.b16 %v2150
    %v2670 = vunpack.c.l.b16 %v2151
    %v2671 = vunpack.c.l.b16 %v2152
    %v2672 = vunpack.c.l.b16 %v2153
    %v2673 = vunpack.c.l.b16 %v2154
    %v2674 = vunpack.c.l.b16 %v2155
    %v2675 = vunpack.c.l.b16 %v2156
    %v2676 = vunpack.c.l.b16 %v2157
    %v2677 = vunpack.c.l.b16 %v2158
    %v2678 = vunpack.c.l.b16 %v2159
    %v2679 = vunpack.c.l.b16 %v2160
    %v2680 = vunpack.c.l.b16 %v2161
    %v2681 = vunpack.c.l.b16 %v2162
    %v2682 = vunpack.c.l.b16 %v2163
    %v2683 = vunpack.c.l.b16 %v2164
    %v2684 = vunpack.c.l.b16 %v2165
    %v2685 = vunpack.c.l.b16 %v2166
    %v2686 = vunpack.c.l.b16 %v2167
    %v2687 = vunpack.c.l.b16 %v2168
    %v2688 = vunpack.c.l.b16 %v2169
    %v2689 = vunpack.c.l.b16 %v2170
    %v2690 = vunpack.c.l.b16 %v2171
    %v2691 = vunpack.c.l.b16 %v2172
    %v2692 = vunpack.c.l.b16 %v2173
    %v2693 = vunpack.c.l.b16 %v2174
    %v2694 = vunpack.c.l.b16 %v2175
    %v2695 = vunpack.c.l.b16 %v2176
    %v2696 = vunpack.c.l.b16 %v2177
    %v2697 = vunpack.c.l.b16 %v2178
    %v2698 = vunpack.c.l.b16 %v2179
    %v2699 = vunpack.c.l.b16 %v2180
    %v2700 = vunpack.c.l.b16 %v2181
    %v2701 = vunpack.c.l.b16 %v2182
    %v2702 = vunpack.c.l.b16 %v2183
    %v2703 = vunpack.c.l.b16 %v2184
    %v2704 = vunpack.c.l.b16 %v2185
    %v2705 = vunpack.c.l.b16 %v2186
    %v2706 = vunpack.c.l.b16 %v2187
    %v2707 = vunpack.c.l.b16 %v2188
    %v2708 = vunpack.c.l.b16 %v2189
    %v2709 = vunpack.c.l.b16 %v2190
    %v2710 = vunpack.c.l.b16 %v2191
    %v2711 = vunpack.c.l.b16 %v2192
    %v2712 = vunpack.c.l.b16 %v2193
    %v2713 = vunpack.c.l.b16 %v2194
    %v2714 = vunpack.c.l.b16 %v2195
    %v2715 = vunpack.c.l.b16 %v2196
    %v2716 = vunpack.c.l.b16 %v2197
    %v2717 = vunpack.c.l.b16 %v2198
    %v2718 = vunpack.c.l.b16 %v2199
    %v2719 = vunpack.c.l.b16 %v2200
    %v2720 = vunpack.c.l.b16 %v2201
    %v2721 = vunpack.c.l.b16 %v2202
    %v2722 = vunpack.c.l.b16 %v2203
    %v2723 = vunpack.c.l.b16 %v2204
    %v2724 = vunpack.c.l.b16 %v2205
    %v2725 = vunpack.c.l.b16 %v2206
    %v2726 = vunpack.c.l.b16 %v2207
    %v2727 = vunpack.c.l.b16 %v2208
    %v2728 = vunpack.c.l.b16 %v2209
    %v2729 = vunpack.c.l.b16 %v2210
    %v2730 = vunpack.c.l.b16 %v2211
    %v2731 = vunpack.c.l.b16 %v2212
    %v2732 = vunpack.c.l.b16 %v2213
    %v2733 = vunpack.c.l.b16 %v2214
    %v2734 = vunpack.c.l.b16 %v2215
    %v2735 = vunpack.c.l.b16 %v2216
    %v2736 = vunpack.c.l.b16 %v2217
    %v2737 = vunpack.c.l.b16 %v2218
    %v2738 = vunpack.c.l.b16 %v2219
    %v2739 = vunpack.c.l.b16 %v2220
    %v2740 = vunpack.c.l.b16 %v2221
    %v2741 = vunpack.c.l.b16 %v2222
    %v2742 = vunpack.c.l.b16 %v2223
    %v2743 = vunpack.c.l.b16 %v2224
    %v2744 = vunpack.c.l.b16 %v2225
    %v2745 = vunpack.c.l.b16 %v2226
    %v2746 = vunpack.c.l.b16 %v2227
    %v2747 = vunpack.c.l.b16 %v2228
    %v2748 = vunpack.c.l.b16 %v2229
    %v2749 = vunpack.c.l.b16 %v2230
    %v2750 = vunpack.c.l.b16 %v2231
    %v2751 = vunpack.c.l.b16 %v2232
    %v2752 = vunpack.c.l.b16 %v2233
    %v2753 = vunpack.c.l.b16 %v2234
    %v2754 = vunpack.c.l.b16 %v2235
    %v2755 = vunpack.c.l.b16 %v2236
    %v2756 = vunpack.c.l.b16 %v2237
    %v2757 = vunpack.c.l.b16 %v2238
    %v2758 = vunpack.c.l.b16 %v2239
    %v2759 = vunpack.c.l.b16 %v2240
    %v2760 = vunpack.c.l.b16 %v2241
    %v2761 = vunpack.c.l.b16 %v2242
    %v2762 = vunpack.c.l.b16 %v2243
    %v2763 = vunpack.c.l.b16 %v2244
    %v2764 = vunpack.c.l.b16 %v2245
    %v2765 = vunpack.c.l.b16 %v2246
    %v2766 = vunpack.c.l.b16 %v2247
    %v2767 = vunpack.c.l.b16 %v2248
    %v2768 = vunpack.c.l.b16 %v2249
    %v2769 = vunpack.c.l.b16 %v2250
    %v2770 = vunpack.c.l.b16 %v2251
    %v2771 = vunpack.c.l.b16 %v2252
    %v2772 = vunpack.c.l.b16 %v2253
    %v2773 = vunpack.c.l.b16 %v2254
    %v2774 = vunpack.c.l.b16 %v2255
    %v2775 = vunpack.c.l.b16 %v2256
    %v2776 = vunpack.c.l.b16 %v2257
    %v2777 = vunpack.c.l.b16 %v2258
    %v2778 = vunpack.c.l.b16 %v2259
    %v2779 = vunpack.c.l.b16 %v2260
    %v2780 = vunpack.c.l.b16 %v2261
    %v2781 = vunpack.c.l.b16 %v2262
    %v2782 = vunpack.c.l.b16 %v2263
    %v2783 = vunpack.c.l.b16 %v2264
    %v2784 = vunpack.c.l.b16 %v2265
    %v2785 = vunpack.c.l.b16 %v2266
    %v2786 = vunpack.c.l.b16 %v2267
    %v2787 = vunpack.c.l.b16 %v2268
    %v2788 = vunpack.c.l.b16 %v2269
    %v2789 = vunpack.c.l.b16 %v2270
    %v2790 = vunpack.c.l.b16 %v2271
    %v2791 = vunpack.c.l.b16 %v2272
    %v2792 = vunpack.c.l.b16 %v2273
    %v2793 = vunpack.c.l.b16 %v2274
    %v2794 = vunpack.c.l.b16 %v2275
    %v2795 = vunpack.c.l.b16 %v2276
    %v2796 = vunpack.c.l.b16 %v2277
    %v2797 = vunpack.c.l.b16 %v2278
    %v2798 = vunpack.c.l.b16 %v2279
    %v2799 = vunpack.c.l.b16 %v2280
    %v2800 = vunpack.c.l.b16 %v2281
    %v2801 = vunpack.c.l.b16 %v2282
    %v2802 = vunpack.c.l.b16 %v2283
    %v2803 = vunpack.c.l.b16 %v2284
    %v2804 = vunpack.c.l.b16 %v2285
    %v2805 = vunpack.c.l.b16 %v2286
    %v2806 = vunpack.c.l.b16 %v2287
    %v2807 = vunpack.c.l.b16 %v2288
    %v2808 = vunpack.c.l.b16 %v2289
    %v2809 = vunpack.c.l.b16 %v2290
    %v2810 = vunpack.c.l.b16 %v2291
    %v2811 = vunpack.c.l.b16 %v2292
    %v2812 = vunpack.c.l.b16 %v2293
    %v2813 = vunpack.c.l.b16 %v2294
    %v2814 = vunpack.c.l.b16 %v2295
    %v2815 = vunpack.c.l.b16 %v2296
    %v2816 = vunpack.c.l.b16 %v2297
    %v2817 = vunpack.c.l.b16 %v2298
    %v2818 = vunpack.c.l.b16 %v2299
    %v2819 = vunpack.c.l.b16 %v2300
    %v2820 = vunpack.c.l.b16 %v2301
    %v2821 = vunpack.c.l.b16 %v2302
    %v2822 = vunpack.c.l.b16 %v2303
    %v2823 = vunpack.c.l.b16 %v2304
    %v2824 = vunpack.c.l.b16 %v2305
    %v2825 = vunpack.c.l.b16 %v2306
    %v2826 = vunpack.c.l.b16 %v2307
    %v2827 = vunpack.c.l.b16 %v2308
    %v2828 = vunpack.c.l.b16 %v2309
    %v2829 = vunpack.c.l.b16 %v2310
    %v2830 = vunpack.c.l.b16 %v2311
    %v2831 = vunpack.c.l.b16 %v2312
    %v2832 = vunpack.c.l.b16 %v2313
    %v2833 = vunpack.c.l.b16 %v2314
    %v2834 = vunpack.c.l.b16 %v2315
    %v2835 = vunpack.c.l.b16 %v2316
    %v2836 = vunpack.c.l.b16 %v2317
    %v2837 = vunpack.c.l.b16 %v2318
    %v2838 = vunpack.c.l.b16 %v2319
    %v2839 = vunpack.c.l.b16 %v2320
    %v2840 = vunpack.c.l.b16 %v2321
    %v2841 = vunpack.c.l.b16 %v2322
    %v2842 = vunpack.c.l.b16 %v2323
    %v2843 = vunpack.c.l.b16 %v2324
    %v2844 = vunpack.c.l.b16 %v2325
    %v2845 = vunpack.c.l.b16 %v2326
    %v2846 = vunpack.c.l.b16 %v2327
    %v2847 = vunpack.c.l.b16 %v2328
    %v2848 = vunpack.c.l.b16 %v2329
    %v2849 = vunpack.c.l.b16 %v2330
    %v2850 = vunpack.c.l.b16 %v2331
    %v2851 = vunpack.c.l.b16 %v2332
    %v2852 = vunpack.c.l.b16 %v2333
    %v2853 = vunpack.c.l.b16 %v2334
    %v2854 = vunpack.c.l.b16 %v2335
    %v2855 = vunpack.c.l.b16 %v2336
    %v2856 = vunpack.c.l.b16 %v2337
    %v2857 = vunpack.c.l.b16 %v2338
    %v2858 = vunpack.c.l.b16 %v2339
    %v2859 = vunpack.c.l.b16 %v2340
    %v2860 = vunpack.c.l.b16 %v2341
    %v2861 = vunpack.c.l.b16 %v2342
    %v2862 = vunpack.c.l.b16 %v2343
    %v2863 = vunpack.c.l.b16 %v2344
    %v2864 = vunpack.c.l.b16 %v2345
    %v2865 = vunpack.c.l.b16 %v2346
    %v2866 = vunpack.c.l.b16 %v2347
    %v2867 = vunpack.c.l.b16 %v2348
    %v2868 = vunpack.c.l.b16 %v2349
    %v2869 = vunpack.c.l.b16 %v2350
    %v2870 = vunpack.c.l.b16 %v2351
    %v2871 = vunpack.c.l.b16 %v2352
    %v2872 = vunpack.c.l.b16 %v2353
    %v2873 = vunpack.c.l.b16 %v2354
    %v2874 = vunpack.c.l.b16 %v2355
    %v2875 = vunpack.c.l.b16 %v2356
    %v2876 = vunpack.c.l.b16 %v2357
    %v2877 = vunpack.c.l.b16 %v2358
    %v2878 = vunpack.c.l.b16 %v2359
    %v2879 = vunpack.c.l.b16 %v2360
    %v2880 = vunpack.c.l.b16 %v2361
    %v2881 = vunpack.c.l.b16 %v2362
    %v2882 = vunpack.c.l.b16 %v2363
    %v2883 = vunpack.c.l.b16 %v2364
    %v2884 = vunpack.c.l.b16 %v2365
    %v2885 = vunpack.c.l.b16 %v2366
    %v2886 = vunpack.c.l.b16 %v2367
    %v2887 = vunpack.c.l.b16 %v2368
    %v2888 = vunpack.c.l.b16 %v2369
    %v2889 = vunpack.c.l.b16 %v2370
    %v2890 = vunpack.c.l.b16 %v2371
    %v2891 = vunpack.c.l.b16 %v2372
    %v2892 = vunpack.c.l.b16 %v2373
    %v2893 = vpack.c.b16 %v2638, %v2637
    %v2894 = vpack.c.b16 %v2640, %v2639
    %v2895 = vpack.c.b16 %v2642, %v2641
    %v2896 = vpack.c.b16 %v2644, %v2643
    %v2897 = vpack.c.b16 %v2646, %v2645
    %v2898 = vpack.c.b16 %v2648, %v2647
    %v2899 = vpack.c.b16 %v2650, %v2649
    %v2900 = vpack.c.b16 %v2652, %v2651
    %v2901 = vpack.c.b16 %v2654, %v2653
    %v2902 = vpack.c.b16 %v2656, %v2655
    %v2903 = vpack.c.b16 %v2658, %v2657
    %v2904 = vpack.c.b16 %v2660, %v2659
    %v2905 = vpack.c.b16 %v2662, %v2661
    %v2906 = vpack.c.b16 %v2664, %v2663
    %v2907 = vpack.c.b16 %v2666, %v2665
    %v2908 = vpack.c.b16 %v2668, %v2667
    %v2909 = vpack.c.b16 %v2670, %v2669
    %v2910 = vpack.c.b16 %v2672, %v2671
    %v2911 = vpack.c.b16 %v2674, %v2673
    %v2912 = vpack.c.b16 %v2676, %v2675
    %v2913 = vpack.c.b16 %v2678, %v2677
    %v2914 = vpack.c.b16 %v2680, %v2679
    %v2915 = vpack.c.b16 %v2682, %v2681
    %v2916 = vpack.c.b16 %v2684, %v2683
    %v2917 = vpack.c.b16 %v2686, %v2685
    %v2918 = vpack.c.b16 %v2688, %v2687
    %v2919 = vpack.c.b16 %v2690, %v2689
    %v2920 = vpack.c.b16 %v2692, %v2691
    %v2921 = vpack.c.b16 %v2694, %v2693
    %v2922 = vpack.c.b16 %v2696, %v2695
    %v2923 = vpack.c.b16 %v2698, %v2697
    %v2924 = vpack.c.b16 %v2700, %v2699
    %v2925 = vpack.c.b16 %v2702, %v2701
    %v2926 = vpack.c.b16 %v2704, %v2703
    %v2927 = vpack.c.b16 %v2706, %v2705
    %v2928 = vpack.c.b16 %v2708, %v2707
    %v2929 = vpack.c.b16 %v2710, %v2709
    %v2930 = vpack.c.b16 %v2712, %v2711
    %v2931 = vpack.c.b16 %v2714, %v2713
    %v2932 = vpack.c.b16 %v2716, %v2715
    %v2933 = vpack.c.b16 %v2718, %v2717
    %v2934 = vpack.c.b16 %v2720, %v2719
    %v2935 = vpack.c.b16 %v2722, %v2721
    %v2936 = vpack.c.b16 %v2724, %v2723
    %v2937 = vpack.c.b16 %v2726, %v2725
    %v2938 = vpack.c.b16 %v2728, %v2727
    %v2939 = vpack.c.b16 %v2730, %v2729
    %v2940 = vpack.c.b16 %v2732, %v2731
    %v2941 = vpack.c.b16 %v2734, %v2733
    %v2942 = vpack.c.b16 %v2736, %v2735
    %v2943 = vpack.c.b16 %v2738, %v2737
    %v2944 = vpack.c.b16 %v2740, %v2739
    %v2945 = vpack.c.b16 %v2742, %v2741
    %v2946 = vpack.c.b16 %v2744, %v2743
    %v2947 = vpack.c.b16 %v2746, %v2745
    %v2948 = vpack.c.b16 %v2748, %v2747
    %v2949 = vpack.c.b16 %v2750, %v2749
    %v2950 = vpack.c.b16 %v2752, %v2751
    %v2951 = vpack.c.b16 %v2754, %v2753
    %v2952 = vpack.c.b16 %v2756, %v2755
    %v2953 = vpack.c.b16 %v2758, %v2757
    %v2954 = vpack.c.b16 %v2760, %v2759
    %v2955 = vpack.c.b16 %v2762, %v2761
    %v2956 = vpack.c.b16 %v2764, %v2763
    %v2957 = vpack.c.b16 %v2766, %v2765
    %v2958 = vpack.c.b16 %v2768, %v2767
    %v2959 = vpack.c.b16 %v2770, %v2769
    %v2960 = vpack.c.b16 %v2772, %v2771
    %v2961 = vpack.c.b16 %v2774, %v2773
    %v2962 = vpack.c.b16 %v2776, %v2775
    %v2963 = vpack.c.b16 %v2778, %v2777
    %v2964 = vpack.c.b16 %v2780, %v2779
    %v2965 = vpack.c.b16 %v2782, %v2781
    %v2966 = vpack.c.b16 %v2784, %v2783
    %v2967 = vpack.c.b16 %v2786, %v2785
    %v2968 = vpack.c.b16 %v2788, %v2787
    %v2969 = vpack.c.b16 %v2790, %v2789
    %v2970 = vpack.c.b16 %v2792, %v2791
    %v2971 = vpack.c.b16 %v2794, %v2793
    %v2972 = vpack.c.b16 %v2796, %v2795
    %v2973 = vpack.c.b16 %v2798, %v2797
    %v2974 = vpack.c.b16 %v2800, %v2799
    %v2975 = vpack.c.b16 %v2802, %v2801
    %v2976 = vpack.c.b16 %v2804, %v2803
    %v2977 = vpack.c.b16 %v2806, %v2805
    %v2978 = vpack.c.b16 %v2808, %v2807
    %v2979 = vpack.c.b16 %v2810, %v2809
    %v2980 = vpack.c.b16 %v2812, %v2811
    %v2981 = vpack.c.b16 %v2814, %v2813
    %v2982 = vpack.c.b16 %v2816, %v2815
    %v2983 = vpack.c.b16 %v2818, %v2817
    %v2984 = vpack.c.b16 %v2820, %v2819
    %v2985 = vpack.c.b16 %v2822, %v2821
    %v2986 = vpack.c.b16 %v2824, %v2823
    %v2987 = vpack.c.b16 %v2826, %v2825
    %v2988 = vpack.c.b16 %v2828, %v2827
    %v2989 = vpack.c.b16 %v2830, %v2829
    %v2990 = vpack.c.b16 %v2832, %v2831
    %v2991 = vpack.c.b16 %v2834, %v2833
    %v2992 = vpack.c.b16 %v2836, %v2835
    %v2993 = vpack.c.b16 %v2838, %v2837
    %v2994 = vpack.c.b16 %v2840, %v2839
    %v2995 = vpack.c.b16 %v2842, %v2841
    %v2996 = vpack.c.b16 %v2844, %v2843
    %v2997 = vpack.c.b16 %v2846, %v2845
    %v2998 = vpack.c.b16 %v2848, %v2847
    %v2999 = vpack.c.b16 %v2850, %v2849
    %v3000 = vpack.c.b16 %v2852, %v2851
    %v3001 = vpack.c.b16 %v2854, %v2853
    %v3002 = vpack.c.b16 %v2856, %v2855
    %v3003 = vpack.c.b16 %v2858, %v2857
    %v3004 = vpack.c.b16 %v2860, %v2859
    %v3005 = vpack.c.b16 %v2862, %v2861
    %v3006 = vpack.c.b16 %v2864, %v2863
    %v3007 = vpack.c.b16 %v2866, %v2865
    %v3008 = vpack.c.b16 %v2868, %v2867
    %v3009 = vpack.c.b16 %v2870, %v2869
    %v3010 = vpack.c.b16 %v2872, %v2871
    %v3011 = vpack.c.b16 %v2874, %v2873
    %v3012 = vpack.c.b16 %v2876, %v2875
    %v3013 = vpack.c.b16 %v2878, %v2877
    %v3014 = vpack.c.b16 %v2880, %v2879
    %v3015 = vpack.c.b16 %v2882, %v2881
    %v3016 = vpack.c.b16 %v2884, %v2883
    %v3017 = vpack.c.b16 %v2886, %v2885
    %v3018 = vpack.c.b16 %v2888, %v2887
    %v3019 = vpack.c.b16 %v2890, %v2889
    %v3020 = vpack.c.b16 %v2892, %v2891
    %3149 = vmatprep.subr.bf16.mxu0 0
    %3150 = vmatpush1.bf16.msra.mxu0 %v2893
    %3151 = vmatprep.subr.bf16.mxu0 0
    %3152 = vmatpush1.bf16.msra.mxu0 %v2894
    %3153 = vmatprep.subr.bf16.mxu0 0
    %3154 = vmatpush1.bf16.msra.mxu0 %v2895
    %3155 = vmatprep.subr.bf16.mxu0 0
    %3156 = vmatpush1.bf16.msra.mxu0 %v2896
    %3157 = vmatprep.subr.bf16.mxu0 0
    %3158 = vmatpush1.bf16.msra.mxu0 %v2897
    %3159 = vmatprep.subr.bf16.mxu0 0
    %3160 = vmatpush1.bf16.msra.mxu0 %v2898
    %3161 = vmatprep.subr.bf16.mxu0 0
    %3162 = vmatpush1.bf16.msra.mxu0 %v2899
    %3163 = vmatprep.subr.bf16.mxu0 0
    %3164 = vmatpush1.bf16.msra.mxu0 %v2900
    %3165 = vmatprep.subr.bf16.mxu0 0
    %3166 = vmatpush1.bf16.msra.mxu0 %v2901
    %3167 = vmatprep.subr.bf16.mxu0 0
    %3168 = vmatpush1.bf16.msra.mxu0 %v2902
    %3169 = vmatprep.subr.bf16.mxu0 0
    %3170 = vmatpush1.bf16.msra.mxu0 %v2903
    %3171 = vmatprep.subr.bf16.mxu0 0
    %3172 = vmatpush1.bf16.msra.mxu0 %v2904
    %3173 = vmatprep.subr.bf16.mxu0 0
    %3174 = vmatpush1.bf16.msra.mxu0 %v2905
    %3175 = vmatprep.subr.bf16.mxu0 0
    %3176 = vmatpush1.bf16.msra.mxu0 %v2906
    %3177 = vmatprep.subr.bf16.mxu0 0
    %3178 = vmatpush1.bf16.msra.mxu0 %v2907
    %3179 = vmatprep.subr.bf16.mxu0 0
    %3180 = vmatpush1.bf16.msra.mxu0 %v2908
    %3181 = vmatprep.mubr.bf16.mxu0 %v2103
    %3182 = vmatmul.mubr.bf16.gmra.mrb[0].mxu0 %v2102
    %v3183 = vpop.f32.mrb[0].mxu0
    %v3184 = vadd.f32 %v2379, %v3183
    %v3185 = vpop.f32.mrb[0].mxu0
    %v3186 = vpop.f32.mrb[0].mxu0
    %v3187 = vpop.f32.mrb[0].mxu0
    %3188 = vdwg.mxu0
    %3189 = vmatprep.subr.bf16.mxu0 0
    %3190 = vmatpush1.bf16.msra.mxu0 %v2909
    %3191 = vmatprep.subr.bf16.mxu0 0
    %3192 = vmatpush1.bf16.msra.mxu0 %v2910
    %3193 = vmatprep.subr.bf16.mxu0 0
    %3194 = vmatpush1.bf16.msra.mxu0 %v2911
    %3195 = vmatprep.subr.bf16.mxu0 0
    %3196 = vmatpush1.bf16.msra.mxu0 %v2912
    %3197 = vmatprep.subr.bf16.mxu0 0
    %3198 = vmatpush1.bf16.msra.mxu0 %v2913
    %3199 = vmatprep.subr.bf16.mxu0 0
    %3200 = vmatpush1.bf16.msra.mxu0 %v2914
    %3201 = vmatprep.subr.bf16.mxu0 0
    %3202 = vmatpush1.bf16.msra.mxu0 %v2915
    %3203 = vmatprep.subr.bf16.mxu0 0
    %3204 = vmatpush1.bf16.msra.mxu0 %v2916
    %3205 = vmatprep.subr.bf16.mxu0 0
    %3206 = vmatpush1.bf16.msra.mxu0 %v2917
    %3207 = vmatprep.subr.bf16.mxu0 0
    %3208 = vmatpush1.bf16.msra.mxu0 %v2918
    %3209 = vmatprep.subr.bf16.mxu0 0
    %3210 = vmatpush1.bf16.msra.mxu0 %v2919
    %3211 = vmatprep.subr.bf16.mxu0 0
    %3212 = vmatpush1.bf16.msra.mxu0 %v2920
    %3213 = vmatprep.subr.bf16.mxu0 0
    %3214 = vmatpush1.bf16.msra.mxu0 %v2921
    %3215 = vmatprep.subr.bf16.mxu0 0
    %3216 = vmatpush1.bf16.msra.mxu0 %v2922
    %3217 = vmatprep.subr.bf16.mxu0 0
    %3218 = vmatpush1.bf16.msra.mxu0 %v2923
    %3219 = vmatprep.subr.bf16.mxu0 0
    %3220 = vmatpush1.bf16.msra.mxu0 %v2924
    %3221 = vmatprep.mubr.bf16.mxu0 %v2105
    %3222 = vmatmul.mubr.bf16.gmra.mrb[0].mxu0 %v2104
    %v3223 = vpop.f32.mrb[0].mxu0
    %v3224 = vadd.f32 %v3184, %v3223
    %v3225 = vpop.f32.mrb[0].mxu0
    %v3226 = vpop.f32.mrb[0].mxu0
    %v3227 = vpop.f32.mrb[0].mxu0
    %3228 = vdwg.mxu0
    %3229 = vmatprep.subr.bf16.mxu0 0
    %3230 = vmatpush1.bf16.msra.mxu0 %v2925
    %3231 = vmatprep.subr.bf16.mxu0 0
    %3232 = vmatpush1.bf16.msra.mxu0 %v2926
    %3233 = vmatprep.subr.bf16.mxu0 0
    %3234 = vmatpush1.bf16.msra.mxu0 %v2927
    %3235 = vmatprep.subr.bf16.mxu0 0
    %3236 = vmatpush1.bf16.msra.mxu0 %v2928
    %3237 = vmatprep.subr.bf16.mxu0 0
    %3238 = vmatpush1.bf16.msra.mxu0 %v2929
    %3239 = vmatprep.subr.bf16.mxu0 0
    %3240 = vmatpush1.bf16.msra.mxu0 %v2930
    %3241 = vmatprep.subr.bf16.mxu0 0
    %3242 = vmatpush1.bf16.msra.mxu0 %v2931
    %3243 = vmatprep.subr.bf16.mxu0 0
    %3244 = vmatpush1.bf16.msra.mxu0 %v2932
    %3245 = vmatprep.subr.bf16.mxu0 0
    %3246 = vmatpush1.bf16.msra.mxu0 %v2933
    %3247 = vmatprep.subr.bf16.mxu0 0
    %3248 = vmatpush1.bf16.msra.mxu0 %v2934
    %3249 = vmatprep.subr.bf16.mxu0 0
    %3250 = vmatpush1.bf16.msra.mxu0 %v2935
    %3251 = vmatprep.subr.bf16.mxu0 0
    %3252 = vmatpush1.bf16.msra.mxu0 %v2936
    %3253 = vmatprep.subr.bf16.mxu0 0
    %3254 = vmatpush1.bf16.msra.mxu0 %v2937
    %3255 = vmatprep.subr.bf16.mxu0 0
    %3256 = vmatpush1.bf16.msra.mxu0 %v2938
    %3257 = vmatprep.subr.bf16.mxu0 0
    %3258 = vmatpush1.bf16.msra.mxu0 %v2939
    %3259 = vmatprep.subr.bf16.mxu0 0
    %3260 = vmatpush1.bf16.msra.mxu0 %v2940
    %3261 = vmatprep.mubr.bf16.mxu0 %v2107
    %3262 = vmatmul.mubr.bf16.gmra.mrb[0].mxu0 %v2106
    %v3263 = vpop.f32.mrb[0].mxu0
    %v3264 = vadd.f32 %v3224, %v3263
    %v3265 = vpop.f32.mrb[0].mxu0
    %v3266 = vpop.f32.mrb[0].mxu0
    %v3267 = vpop.f32.mrb[0].mxu0
    %3268 = vdwg.mxu0
    %3269 = vmatprep.subr.bf16.mxu0 0
    %3270 = vmatpush1.bf16.msra.mxu0 %v2941
    %3271 = vmatprep.subr.bf16.mxu0 0
    %3272 = vmatpush1.bf16.msra.mxu0 %v2942
    %3273 = vmatprep.subr.bf16.mxu0 0
    %3274 = vmatpush1.bf16.msra.mxu0 %v2943
    %3275 = vmatprep.subr.bf16.mxu0 0
    %3276 = vmatpush1.bf16.msra.mxu0 %v2944
    %3277 = vmatprep.subr.bf16.mxu0 0
    %3278 = vmatpush1.bf16.msra.mxu0 %v2945
    %3279 = vmatprep.subr.bf16.mxu0 0
    %3280 = vmatpush1.bf16.msra.mxu0 %v2946
    %3281 = vmatprep.subr.bf16.mxu0 0
    %3282 = vmatpush1.bf16.msra.mxu0 %v2947
    %3283 = vmatprep.subr.bf16.mxu0 0
    %3284 = vmatpush1.bf16.msra.mxu0 %v2948
    %3285 = vmatprep.subr.bf16.mxu0 0
    %3286 = vmatpush1.bf16.msra.mxu0 %v2949
    %3287 = vmatprep.subr.bf16.mxu0 0
    %3288 = vmatpush1.bf16.msra.mxu0 %v2950
    %3289 = vmatprep.subr.bf16.mxu0 0
    %3290 = vmatpush1.bf16.msra.mxu0 %v2951
    %3291 = vmatprep.subr.bf16.mxu0 0
    %3292 = vmatpush1.bf16.msra.mxu0 %v2952
    %3293 = vmatprep.subr.bf16.mxu0 0
    %3294 = vmatpush1.bf16.msra.mxu0 %v2953
    %3295 = vmatprep.subr.bf16.mxu0 0
    %3296 = vmatpush1.bf16.msra.mxu0 %v2954
    %3297 = vmatprep.subr.bf16.mxu0 0
    %3298 = vmatpush1.bf16.msra.mxu0 %v2955
    %3299 = vmatprep.subr.bf16.mxu0 0
    %3300 = vmatpush1.bf16.msra.mxu0 %v2956
    %3301 = vmatprep.mubr.bf16.mxu0 %v2109
    %3302 = vmatmul.mubr.bf16.gmra.mrb[0].mxu0 %v2108
    %v3303 = vpop.f32.mrb[0].mxu0
    %v3304 = vadd.f32 %v3264, %v3303
    %v3305 = vpop.f32.mrb[0].mxu0
    %v3306 = vpop.f32.mrb[0].mxu0
    %v3307 = vpop.f32.mrb[0].mxu0
    %3308 = vdwg.mxu0
    %3309 = vmatprep.subr.bf16.mxu0 0
    %3310 = vmatpush1.bf16.msra.mxu0 %v2957
    %3311 = vmatprep.subr.bf16.mxu0 0
    %3312 = vmatpush1.bf16.msra.mxu0 %v2958
    %3313 = vmatprep.subr.bf16.mxu0 0
    %3314 = vmatpush1.bf16.msra.mxu0 %v2959
    %3315 = vmatprep.subr.bf16.mxu0 0
    %3316 = vmatpush1.bf16.msra.mxu0 %v2960
    %3317 = vmatprep.subr.bf16.mxu0 0
    %3318 = vmatpush1.bf16.msra.mxu0 %v2961
    %3319 = vmatprep.subr.bf16.mxu0 0
    %3320 = vmatpush1.bf16.msra.mxu0 %v2962
    %3321 = vmatprep.subr.bf16.mxu0 0
    %3322 = vmatpush1.bf16.msra.mxu0 %v2963
    %3323 = vmatprep.subr.bf16.mxu0 0
    %3324 = vmatpush1.bf16.msra.mxu0 %v2964
    %3325 = vmatprep.subr.bf16.mxu0 0
    %3326 = vmatpush1.bf16.msra.mxu0 %v2965
    %3327 = vmatprep.subr.bf16.mxu0 0
    %3328 = vmatpush1.bf16.msra.mxu0 %v2966
    %3329 = vmatprep.subr.bf16.mxu0 0
    %3330 = vmatpush1.bf16.msra.mxu0 %v2967
    %3331 = vmatprep.subr.bf16.mxu0 0
    %3332 = vmatpush1.bf16.msra.mxu0 %v2968
    %3333 = vmatprep.subr.bf16.mxu0 0
    %3334 = vmatpush1.bf16.msra.mxu0 %v2969
    %3335 = vmatprep.subr.bf16.mxu0 0
    %3336 = vmatpush1.bf16.msra.mxu0 %v2970
    %3337 = vmatprep.subr.bf16.mxu0 0
    %3338 = vmatpush1.bf16.msra.mxu0 %v2971
    %3339 = vmatprep.subr.bf16.mxu0 0
    %3340 = vmatpush1.bf16.msra.mxu0 %v2972
    %3341 = vmatprep.mubr.bf16.mxu0 %v2111
    %3342 = vmatmul.mubr.bf16.gmra.mrb[0].mxu0 %v2110
    %v3343 = vpop.f32.mrb[0].mxu0
    %v3344 = vadd.f32 %v3304, %v3343
    %v3345 = vpop.f32.mrb[0].mxu0
    %v3346 = vpop.f32.mrb[0].mxu0
    %v3347 = vpop.f32.mrb[0].mxu0
    %3348 = vdwg.mxu0
    %3349 = vmatprep.subr.bf16.mxu0 0
    %3350 = vmatpush1.bf16.msra.mxu0 %v2973
    %3351 = vmatprep.subr.bf16.mxu0 0
    %3352 = vmatpush1.bf16.msra.mxu0 %v2974
    %3353 = vmatprep.subr.bf16.mxu0 0
    %3354 = vmatpush1.bf16.msra.mxu0 %v2975
    %3355 = vmatprep.subr.bf16.mxu0 0
    %3356 = vmatpush1.bf16.msra.mxu0 %v2976
    %3357 = vmatprep.subr.bf16.mxu0 0
    %3358 = vmatpush1.bf16.msra.mxu0 %v2977
    %3359 = vmatprep.subr.bf16.mxu0 0
    %3360 = vmatpush1.bf16.msra.mxu0 %v2978
    %3361 = vmatprep.subr.bf16.mxu0 0
    %3362 = vmatpush1.bf16.msra.mxu0 %v2979
    %3363 = vmatprep.subr.bf16.mxu0 0
    %3364 = vmatpush1.bf16.msra.mxu0 %v2980
    %3365 = vmatprep.subr.bf16.mxu0 0
    %3366 = vmatpush1.bf16.msra.mxu0 %v2981
    %3367 = vmatprep.subr.bf16.mxu0 0
    %3368 = vmatpush1.bf16.msra.mxu0 %v2982
    %3369 = vmatprep.subr.bf16.mxu0 0
    %3370 = vmatpush1.bf16.msra.mxu0 %v2983
    %3371 = vmatprep.subr.bf16.mxu0 0
    %3372 = vmatpush1.bf16.msra.mxu0 %v2984
    %3373 = vmatprep.subr.bf16.mxu0 0
    %3374 = vmatpush1.bf16.msra.mxu0 %v2985
    %3375 = vmatprep.subr.bf16.mxu0 0
    %3376 = vmatpush1.bf16.msra.mxu0 %v2986
    %3377 = vmatprep.subr.bf16.mxu0 0
    %3378 = vmatpush1.bf16.msra.mxu0 %v2987
    %3379 = vmatprep.subr.bf16.mxu0 0
    %3380 = vmatpush1.bf16.msra.mxu0 %v2988
    %3381 = vmatprep.mubr.bf16.mxu0 %v2113
    %3382 = vmatmul.mubr.bf16.gmra.mrb[0].mxu0 %v2112
    %v3383 = vpop.f32.mrb[0].mxu0
    %v3384 = vadd.f32 %v3344, %v3383
    %v3385 = vpop.f32.mrb[0].mxu0
    %v3386 = vpop.f32.mrb[0].mxu0
    %v3387 = vpop.f32.mrb[0].mxu0
    %3388 = vdwg.mxu0
    %3389 = vmatprep.subr.bf16.mxu0 0
    %3390 = vmatpush1.bf16.msra.mxu0 %v2989
    %3391 = vmatprep.subr.bf16.mxu0 0
    %3392 = vmatpush1.bf16.msra.mxu0 %v2990
    %3393 = vmatprep.subr.bf16.mxu0 0
    %3394 = vmatpush1.bf16.msra.mxu0 %v2991
    %3395 = vmatprep.subr.bf16.mxu0 0
    %3396 = vmatpush1.bf16.msra.mxu0 %v2992
    %3397 = vmatprep.subr.bf16.mxu0 0
    %3398 = vmatpush1.bf16.msra.mxu0 %v2993
    %3399 = vmatprep.subr.bf16.mxu0 0
    %3400 = vmatpush1.bf16.msra.mxu0 %v2994
    %3401 = vmatprep.subr.bf16.mxu0 0
    %3402 = vmatpush1.bf16.msra.mxu0 %v2995
    %3403 = vmatprep.subr.bf16.mxu0 0
    %3404 = vmatpush1.bf16.msra.mxu0 %v2996
    %3405 = vmatprep.subr.bf16.mxu0 0
    %3406 = vmatpush1.bf16.msra.mxu0 %v2997
    %3407 = vmatprep.subr.bf16.mxu0 0
    %3408 = vmatpush1.bf16.msra.mxu0 %v2998
    %3409 = vmatprep.subr.bf16.mxu0 0
    %3410 = vmatpush1.bf16.msra.mxu0 %v2999
    %3411 = vmatprep.subr.bf16.mxu0 0
    %3412 = vmatpush1.bf16.msra.mxu0 %v3000
    %3413 = vmatprep.subr.bf16.mxu0 0
    %3414 = vmatpush1.bf16.msra.mxu0 %v3001
    %3415 = vmatprep.subr.bf16.mxu0 0
    %3416 = vmatpush1.bf16.msra.mxu0 %v3002
    %3417 = vmatprep.subr.bf16.mxu0 0
    %3418 = vmatpush1.bf16.msra.mxu0 %v3003
    %3419 = vmatprep.subr.bf16.mxu0 0
    %3420 = vmatpush1.bf16.msra.mxu0 %v3004
    %3421 = vmatprep.mubr.bf16.mxu0 %v2115
    %3422 = vmatmul.mubr.bf16.gmra.mrb[0].mxu0 %v2114
    %v3423 = vpop.f32.mrb[0].mxu0
    %v3424 = vadd.f32 %v3384, %v3423
    %v3425 = vpop.f32.mrb[0].mxu0
    %v3426 = vpop.f32.mrb[0].mxu0
    %v3427 = vpop.f32.mrb[0].mxu0
    %3428 = vdwg.mxu0
    %3429 = vmatprep.subr.bf16.mxu0 0
    %3430 = vmatpush1.bf16.msra.mxu0 %v3005
    %3431 = vmatprep.subr.bf16.mxu0 0
    %3432 = vmatpush1.bf16.msra.mxu0 %v3006
    %3433 = vmatprep.subr.bf16.mxu0 0
    %3434 = vmatpush1.bf16.msra.mxu0 %v3007
    %3435 = vmatprep.subr.bf16.mxu0 0
    %3436 = vmatpush1.bf16.msra.mxu0 %v3008
    %3437 = vmatprep.subr.bf16.mxu0 0
    %3438 = vmatpush1.bf16.msra.mxu0 %v3009
    %3439 = vmatprep.subr.bf16.mxu0 0
    %3440 = vmatpush1.bf16.msra.mxu0 %v3010
    %3441 = vmatprep.subr.bf16.mxu0 0
    %3442 = vmatpush1.bf16.msra.mxu0 %v3011
    %3443 = vmatprep.subr.bf16.mxu0 0
    %3444 = vmatpush1.bf16.msra.mxu0 %v3012
    %3445 = vmatprep.subr.bf16.mxu0 0
    %3446 = vmatpush1.bf16.msra.mxu0 %v3013
    %3447 = vmatprep.subr.bf16.mxu0 0
    %3448 = vmatpush1.bf16.msra.mxu0 %v3014
    %3449 = vmatprep.subr.bf16.mxu0 0
    %3450 = vmatpush1.bf16.msra.mxu0 %v3015
    %3451 = vmatprep.subr.bf16.mxu0 0
    %3452 = vmatpush1.bf16.msra.mxu0 %v3016
    %3453 = vmatprep.subr.bf16.mxu0 0
    %3454 = vmatpush1.bf16.msra.mxu0 %v3017
    %3455 = vmatprep.subr.bf16.mxu0 0
    %3456 = vmatpush1.bf16.msra.mxu0 %v3018
    %3457 = vmatprep.subr.bf16.mxu0 0
    %3458 = vmatpush1.bf16.msra.mxu0 %v3019
    %3459 = vmatprep.subr.bf16.mxu0 0
    %3460 = vmatpush1.bf16.msra.mxu0 %v3020
    %3461 = vmatprep.mubr.bf16.mxu0 %v2117
    %3462 = vmatmul.mubr.bf16.gmra.mrb[0].mxu0 %v2116
    %v3463 = vpop.f32.mrb[0].mxu0
    %v3464 = vadd.f32 %v3424, %v3463
    %v3465 = vpop.f32.mrb[0].mxu0
    %v3466 = vpop.f32.mrb[0].mxu0
    %v3467 = vpop.f32.mrb[0].mxu0
    %3468 = vdwg.mxu0
    %v3469 = vadd.f32 %v1573, %v3464
    %v3470 = vld [vmem:[%s7] sm:$0x1]
    %v3471 = vld [vmem:[%s8] sm:$0x1]
    %v3472 = vsel %vm75, %v3469, 0.0
    %3473 = vadd.xlane.f32.xlu0 %v3472
    %v3474 = vpop.xlane.xlu0 %3473
    %v3475 = vmul.f32 %v3474, %v1549
    %v3476 = vsub.f32 %v3469, %v3475
    %v3477 = vmul.f32 %v3476, %v3476
    %v3478 = vsel %vm75, %v3477, 0.0
    %3479 = vadd.xlane.f32.xlu0 %v3478
    %v3480 = vpop.xlane.xlu0 %3479
    %v3481 = vmul.f32 %v3480, %v1549
    %v3482 = vadd.f32 %v3481, 1e-05
    %v3483 = vrsqrt.pop %v3482
    %v3484 = vmul.f32 %v3476, %v3483
    %v3486 = vlaneseq
    %v3487 = vshrl.u32 %v3486, 7
    %v3488 = vsub.s32 0, %v3487
    %v3489 = vrot.slane %v3470, %v3488
    %v3491 = vmul.f32 %v3484, %v3489
    %v3493 = vlaneseq
    %v3494 = vshrl.u32 %v3493, 7
    %v3495 = vsub.s32 0, %v3494
    %v3496 = vrot.slane %v3471, %v3495
    %v3498 = vadd.f32 %v3491, %v3496
    %v3499 = vpack.c.bf16 %v3498, %v3498
    %v3500 = vld [vmem:[%s13] sm:$0xf]
    %v3501 = vld [vmem:[%s13 + $0x4] sm:$0xf]
    %v3502 = vld [vmem:[%s14] sm:$0x1]
    %v3504 = vlaneseq
    %v3505 = vshrl.u32 %v3504, 7
    %v3506 = vsub.s32 0, %v3505
    %v3507 = vrot.slane %v3502, %v3506
    %v3511 = vunpack.c.l.b16 %v3500
    %v3512 = vunpack.c.l.b16 %v3501
    %v3513 = vpack.c.b16 %v3512, %v3511
    %v3516 = vsel %vm75, %v3499, 0
    %3518 = vmatprep.subr.bf16.mxu0 0
    %3519 = vmatpush1.bf16.msra.mxu0 %v3513
    %3520 = vmatprep.subr.bf16.mxu0 0
    %3521 = vmatpush1.bf16.msra.mxu0 0
    %3522 = vmatprep.subr.bf16.mxu0 0
    %3523 = vmatpush1.bf16.msra.mxu0 0
    %3524 = vmatprep.subr.bf16.mxu0 0
    %3525 = vmatpush1.bf16.msra.mxu0 0
    %3526 = vmatprep.subr.bf16.mxu0 0
    %3527 = vmatpush1.bf16.msra.mxu0 0
    %3528 = vmatprep.subr.bf16.mxu0 0
    %3529 = vmatpush1.bf16.msra.mxu0 0
    %3530 = vmatprep.subr.bf16.mxu0 0
    %3531 = vmatpush1.bf16.msra.mxu0 0
    %3532 = vmatprep.subr.bf16.mxu0 0
    %3533 = vmatpush1.bf16.msra.mxu0 0
    %3534 = vmatprep.subr.bf16.mxu0 0
    %3535 = vmatpush1.bf16.msra.mxu0 0
    %3536 = vmatprep.subr.bf16.mxu0 0
    %3537 = vmatpush1.bf16.msra.mxu0 0
    %3538 = vmatprep.subr.bf16.mxu0 0
    %3539 = vmatpush1.bf16.msra.mxu0 0
    %3540 = vmatprep.subr.bf16.mxu0 0
    %3541 = vmatpush1.bf16.msra.mxu0 0
    %3542 = vmatprep.subr.bf16.mxu0 0
    %3543 = vmatpush1.bf16.msra.mxu0 0
    %3544 = vmatprep.subr.bf16.mxu0 0
    %3545 = vmatpush1.bf16.msra.mxu0 0
    %3546 = vmatprep.subr.bf16.mxu0 0
    %3547 = vmatpush1.bf16.msra.mxu0 0
    %3548 = vmatprep.subr.bf16.mxu0 0
    %3549 = vmatpush1.bf16.msra.mxu0 0
    %3550 = vmatprep.mubr.bf16.mxu0 0
    %3551 = vmatmul.mubr.bf16.gmra.mrb[0].mxu0 %v3516
    %v3552 = vpop.f32.mrb[0].mxu0
    %v3553 = vadd.f32 %v3507, %v3552
    %v3554 = vpop.f32.mrb[0].mxu0
    %v3555 = vpop.f32.mrb[0].mxu0
    %v3556 = vpop.f32.mrb[0].mxu0
    %3557 = vdwg.mxu0
    %vm3558 = vcmask 25600
    %3559 = vst.msk [vmem:[#allocation2] sm:$0x3] %vm3558, %v3553
    // Predicated region
    $region62: #{tpu_custom_call.1} parent=1 // pred_check
      _
    $region63: #{tpu_custom_call.1} parent=1 // pred_check_branch
      %3561 = sbr.rel (0) target = $region65
    $region64: #{tpu_custom_call.1} parent=1 // pred_region
      %s3563 = ssub.s32 32, 32
      %3564 = vsyncadd [#allocation3], %s3563
      %s3566 = sshll.u32 [#allocation2], 4
      %s3567 = int_to_ptr.vmem [resolvable:$true] %s3566
      %3569 = dma.vmem_to_hbm [thread:$0]  %s3567, 32, %s15, [#allocation3]
    $region65: #{tpu_custom_call.1} parent=1 // pred_fallthru
      _
    // Predicated region
    $region66: #{tpu_custom_call.1} parent=1 // pred_check
      _
    $region67: #{tpu_custom_call.1} parent=1 // pred_check_branch
      %3571 = sbr.rel (0) target = $region69
    $region68: #{tpu_custom_call.1} parent=1 // pred_region
      %3572 = dma.done [#allocation3], 32
    $region69: #{tpu_custom_call.1} parent=1 // pred_fallthru
      _
    %3573 = vsyncpa [#allocation3], 1

</llo_original>
